<compile_context>
chip_gen: v5e
topology: v5e:2x2
jax: 0.10.0
libtpu: 0.0.40
codegen_flags: <defaults>
</compile_context>

<pallas_src>
import functools

import jax
import jax.numpy as jnp
from jax.experimental import pallas as pl
from jax.experimental.pallas import tpu as pltpu

C_IMG = 3                  # image channels
C_WM = 4                   # watermark channels
C_IN = C_IMG + C_WM        # 7
C_IN_PAD = 8               # + 1 zero channel row for sublane alignment
C_MID = 64
C_OUT = 3
C_OUT_PAD = 8              # conv2 output channels padded for an aligned MXU tile
K = 3                      # 3x3 conv, padding 1
LANE = 128


def _round_up(x, m):
    return (x + m - 1) // m * m


def _pick_bt(batch, s):
    """Largest divisor of `batch` whose lane-stacked width stays <= ~2048."""
    target = max(1, 2048 // s)
    bt = 1
    for d in range(1, batch + 1):
        if batch % d == 0 and d <= target:
            bt = d
    return bt


def _watermark_kernel(wm_ref, img_ref, mask_ref, w1_ref, b1_ref, w2_ref,
                      b2_ref, o_ref, xs_ref, hs_ref, *, H, W, S, Bt, GUARD):
    """Processes Bt images per grid step.

    wm_ref  : (B, 4)                 f32  SMEM scalar-prefetch (whole batch)
    img_ref : (Bt, 3, S)             f32  padded-plane layout per image
    mask_ref: (1, Bt*S)              f32  1 at interior cells, 0 at pad/tail
    w1_ref  : (64, 72)               bf16 [cout, tap*8 + cin]  (cin 7 is zero)
    b1_ref  : (64, 1)                f32
    w2_ref  : (8, 576)               bf16 [cout, tap*64 + cin] (cout 3..7 zero)
    b2_ref  : (8, 1)                 f32
    o_ref   : (Bt, 3, S)             f32  image + 0.1*delta, same layout as input
    xs_ref  : (8,  GUARD+Bt*S+GUARD) bf16 8-channel padded input plane (scratch)
    hs_ref  : (64, GUARD+Bt*S+GUARD) bf16 padded ReLU activation plane (scratch)
    """
    wp = W + 2
    N = Bt * S
    f32 = jnp.float32
    bf16 = jnp.bfloat16
    mask = mask_ref[...]                                          # (1, N) f32

    # Guard columns are only read by discarded (pad/tail) output lanes, but keep
    # them zero so every lane stays finite.  Interior is fully rewritten below,
    # so every grid step is independent -> the batch axis is safely "parallel".
    xs_ref[:, 0:GUARD] = jnp.zeros((C_IN_PAD, GUARD), bf16)
    xs_ref[:, GUARD + N:GUARD + N + GUARD] = jnp.zeros((C_IN_PAD, GUARD), bf16)
    hs_ref[:, 0:GUARD] = jnp.zeros((C_MID, GUARD), bf16)
    hs_ref[:, GUARD + N:GUARD + N + GUARD] = jnp.zeros((C_MID, GUARD), bf16)

    # Build the 8-channel bf16 input plane: [image(3), watermark(4), zero(1)].
    # The watermark is splatted through the border mask so the padding columns
    # stay exactly zero (PyTorch zero-pads all 7 input channels).
    xs_ref[C_IN:C_IN_PAD, GUARD:GUARD + N] = jnp.zeros((1, N), bf16)
    for j in range(Bt):                                           # static unroll
        lo, hi = GUARD + j * S, GUARD + (j + 1) * S
        xs_ref[0:C_IMG, lo:hi] = img_ref[j].astype(bf16)
        b_idx = pl.program_id(0) * Bt + j
        m_j = mask[:, j * S:(j + 1) * S]                          # (1, S)
        for c in range(C_WM):
            xs_ref[C_IMG + c:C_IMG + c + 1, lo:hi] = (
                wm_ref[b_idx, c] * m_j).astype(bf16)

    # Tap offsets of a 3x3 / pad-1 conv relative to an output column in the
    # padded-plane layout (same offsets for conv1 and conv2).
    taps = [(dy - 1) * wp + (dx - 1) for dy in range(K) for dx in range(K)]

    # ---- conv1: ONE MXU dot, contraction = 9 taps x 8 channels = 72 --------
    patches1 = jnp.concatenate(
        [xs_ref[:, GUARD + t:GUARD + t + N] for t in taps], axis=0)  # (72, N)
    h = jnp.dot(w1_ref[...], patches1, preferred_element_type=f32)   # (64, N)
    # ReLU + zero the padding/tail columns (they must act as conv2 zero-pad).
    h = jnp.maximum(h + b1_ref[...], 0.0) * mask
    hs_ref[:, GUARD:GUARD + N] = h.astype(bf16)

    # ---- conv2: ONE MXU dot, contraction = 9 taps x 64 channels = 576 ------
    patches2 = jnp.concatenate(
        [hs_ref[:, GUARD + t:GUARD + t + N] for t in taps], axis=0)  # (576, N)
    delta = jnp.dot(w2_ref[...], patches2,
                    preferred_element_type=f32) + b2_ref[...]        # (8, N)

    # ---- residual add; output shares the input layout, lane-dense stores ---
    for j in range(Bt):
        o_ref[j] = (img_ref[j]
                    + 0.1 * delta[0:C_OUT, j * S:(j + 1) * S]).astype(o_ref.dtype)


@jax.jit
def watermark_encoder(image, watermark, w1, b1, w2, b2):
    """image: (B,3,H,W) f32 NCHW; watermark: (B,4); conv weights in OIHW."""
    B, c_img, H, W = image.shape
    assert c_img == C_IMG
    wp = W + 2
    ppix = (H + 2) * wp
    S = _round_up(ppix, LANE)            # per-image lane stride (128-aligned)
    Bt = _pick_bt(B, S)                  # images per grid step
    N = Bt * S
    GUARD = _round_up(wp + 1, LANE)      # halo for the +/-(wp+1) tap shifts

    # Zero-pad spatially (all channels) and flatten to the padded-plane layout,
    # then pad each image's lane axis to a multiple of 128.
    # TODO(synk): this pad/reshape (and the final un-pad) costs one extra HBM
    # pass each way; could be fused via CompilerParams(allow_input_fusion) or
    # by letting the consumer read the padded flat layout directly.
    img_flat = jnp.pad(image, ((0, 0), (0, 0), (1, 1), (1, 1)))
    img_flat = img_flat.reshape(B, C_IMG, ppix)
    img_flat = jnp.pad(img_flat, ((0, 0), (0, 0), (0, S - ppix)))

    # Border mask: 1 at interior padded-plane cells, 0 at pad rows/cols and the
    # 128-alignment tail; tiled across the Bt lane-stacked images.
    r = jnp.arange(S) // wp
    c = jnp.arange(S) % wp
    m = ((r >= 1) & (r <= H) & (c >= 1) & (c <= W)).astype(jnp.float32)
    mask = jnp.tile(m, Bt)[None, :]                          # (1, N)

    # OIHW conv weights -> im2col layout, pre-cast to bf16 (MXU operands);
    # biases as f32 columns.  (Steady state: hoisted / done once.)
    w1r = jnp.transpose(w1, (0, 2, 3, 1))                    # (64, 3, 3, 7)
    w1r = jnp.pad(w1r, ((0, 0), (0, 0), (0, 0), (0, C_IN_PAD - C_IN)))
    w1r = w1r.reshape(C_MID, K * K * C_IN_PAD).astype(jnp.bfloat16)
    w2r = jnp.transpose(w2, (0, 2, 3, 1)).reshape(C_OUT, K * K * C_MID)
    w2r = jnp.pad(w2r, ((0, C_OUT_PAD - C_OUT), (0, 0))).astype(jnp.bfloat16)
    b1c = b1.astype(jnp.float32).reshape(C_MID, 1)
    b2c = jnp.pad(b2.astype(jnp.float32).reshape(C_OUT, 1),
                  ((0, C_OUT_PAD - C_OUT), (0, 0)))
    wm = watermark.astype(jnp.float32)                       # (B, 4) -> SMEM

    kernel = functools.partial(_watermark_kernel, H=H, W=W, S=S, Bt=Bt,
                               GUARD=GUARD)
    out_flat = pl.pallas_call(
        kernel,
        out_shape=jax.ShapeDtypeStruct((B, C_IMG, S), jnp.float32),
        grid_spec=pltpu.PrefetchScalarGridSpec(
            num_scalar_prefetch=1,                           # watermark in SMEM
            grid=(B // Bt,),
            in_specs=[
                pl.BlockSpec((Bt, C_IMG, S), lambda b, wm_ref: (b, 0, 0)),
                pl.BlockSpec((1, N), lambda b, wm_ref: (0, 0)),
                pl.BlockSpec((C_MID, K * K * C_IN_PAD), lambda b, wm_ref: (0, 0)),
                pl.BlockSpec((C_MID, 1), lambda b, wm_ref: (0, 0)),
                pl.BlockSpec((C_OUT_PAD, K * K * C_MID), lambda b, wm_ref: (0, 0)),
                pl.BlockSpec((C_OUT_PAD, 1), lambda b, wm_ref: (0, 0)),
            ],
            out_specs=pl.BlockSpec((Bt, C_IMG, S), lambda b, wm_ref: (b, 0, 0)),
            scratch_shapes=[
                pltpu.VMEM((C_IN_PAD, N + 2 * GUARD), jnp.bfloat16),
                pltpu.VMEM((C_MID, N + 2 * GUARD), jnp.bfloat16),
            ],
        ),
        compiler_params=pltpu.CompilerParams(
            dimension_semantics=("parallel",),
            # Tiny working set at these sizes.  For large images: raise this on
            # v5e/v6e (128 MiB physical VMEM) to keep whole-image steps, or
            # row-tile with a 1-row halo on v7x (64 MiB).
            vmem_limit_bytes=32 * 1024 * 1024,
        ),
    )(wm, img_flat, mask, w1r, b1c, w2r, b2c)

    # Drop the lane-axis tail and the 1-pixel spatial padding.
    out = out_flat[:, :, :ppix].reshape(B, C_IMG, H + 2, wp)
    return out[:, :, 1:H + 1, 1:W + 1]


def _reference(image, watermark, w1, b1, w2, b2):
    """Pure-JAX reference of the PyTorch forward pass."""
    B, _, H, W = image.shape
    wm = jnp.broadcast_to(watermark[:, :, None, None], (B, C_WM, H, W))
    x = jnp.concatenate([image, wm], axis=1)
    dn = ("NCHW", "OIHW", "NCHW")
    h = jax.lax.conv_general_dilated(x, w1, (1, 1), "SAME",
                                     dimension_numbers=dn)
    h = jnp.maximum(h + b1[None, :, None, None], 0.0)
    delta = jax.lax.conv_general_dilated(h, w2, (1, 1), "SAME",
                                         dimension_numbers=dn)
    delta = delta + b2[None, :, None, None]
    return image + 0.1 * delta


if __name__ == "__main__":
    key = jax.random.PRNGKey(0)
    k_img, k_wm, k_w1, k_b1, k_w2, k_b2 = jax.random.split(key, 6)

    B, H, W = 2, 16, 16
    image = jax.random.normal(k_img, (B, C_IMG, H, W), jnp.float32)   # NCHW
    watermark = jax.random.normal(k_wm, (B, C_WM), jnp.float32)

    # Parameters in PyTorch Conv2d (OIHW) layout.
    w1 = 0.05 * jax.random.normal(k_w1, (C_MID, C_IN, K, K), jnp.float32)
    b1 = 0.05 * jax.random.normal(k_b1, (C_MID,), jnp.float32)
    w2 = 0.05 * jax.random.normal(k_w2, (C_OUT, C_MID, K, K), jnp.float32)
    b2 = 0.05 * jax.random.normal(k_b2, (C_OUT,), jnp.float32)

    out = jax.block_until_ready(
        watermark_encoder(image, watermark, w1, b1, w2, b2))
    ref = _reference(image, watermark, w1, b1, w2, b2)

    assert out.shape == (B, C_OUT, H, W)
    # bf16 MXU operands with f32 accumulation; border bug fixed, so the
    # tolerance is tightened from the previous 5e-3.
    assert jnp.allclose(out, ref, atol=2e-3, rtol=2e-3), float(
        jnp.max(jnp.abs(out - ref)))
    print("KERNEL_OK")
</pallas_src>

<mosaic_0001>
module attributes {stable_mosaic.version = 11 : i64} {
  func.func @_watermark_kernel(%arg0: i32, %arg1: memref<2x4xf32, #tpu.memory_space<smem>>, %arg2: memref<2x3x384xf32, #tpu.memory_space<vmem>>, %arg3: memref<1x768xf32, #tpu.memory_space<vmem>>, %arg4: memref<64x72xbf16, #tpu.memory_space<vmem>>, %arg5: memref<64x1xf32, #tpu.memory_space<vmem>>, %arg6: memref<8x576xbf16, #tpu.memory_space<vmem>>, %arg7: memref<8x1xf32, #tpu.memory_space<vmem>>, %arg8: memref<2x3x384xf32, #tpu.memory_space<vmem>>, %arg9: memref<8x1024xbf16, #tpu.memory_space<vmem>>, %arg10: memref<64x1024xbf16, #tpu.memory_space<vmem>>) attributes {dimension_semantics = [#tpu.dimension_semantics<parallel>], iteration_bounds = array<i64: 1>, scalar_prefetch = 1 : i64, scratch_operands = 2 : i64, tpu.core_type = #tpu.core_type<tc>, window_params = [{transform_indices = @transform_0, window_bounds = array<i64: 2, 3, 384>}, {pipeline_mode = #tpu.pipeline_mode<synchronous>, transform_indices = @transform_1, window_bounds = array<i64: 1, 768>}, {pipeline_mode = #tpu.pipeline_mode<synchronous>, transform_indices = @transform_2, window_bounds = array<i64: 64, 72>}, {pipeline_mode = #tpu.pipeline_mode<synchronous>, transform_indices = @transform_3, window_bounds = array<i64: 64, 1>}, {pipeline_mode = #tpu.pipeline_mode<synchronous>, transform_indices = @transform_4, window_bounds = array<i64: 8, 576>}, {pipeline_mode = #tpu.pipeline_mode<synchronous>, transform_indices = @transform_5, window_bounds = array<i64: 8, 1>}, {transform_indices = @transform_6, window_bounds = array<i64: 2, 3, 384>}]} {
    %c0 = arith.constant 0 : index
    %c0_0 = arith.constant 0 : index
    %0 = vector.load %arg3[%c0, %c0_0] : memref<1x768xf32, #tpu.memory_space<vmem>>, vector<1x768xf32>
    %cst = arith.constant 0.000000e+00 : bf16
    %1 = vector.broadcast %cst : bf16 to vector<8x128xbf16>
    %c0_1 = arith.constant 0 : index
    %c0_2 = arith.constant 0 : index
    %2 = vector.load %arg9[%c0_1, %c0_2] : memref<8x1024xbf16, #tpu.memory_space<vmem>>, vector<8x128xbf16>
    tpu.vector_store %arg9[%c0_1, %c0_2], %1 {strides = array<i32>} : memref<8x1024xbf16, #tpu.memory_space<vmem>>, vector<8x128xbf16>,
    %cst_3 = arith.constant 0.000000e+00 : bf16
    %3 = vector.broadcast %cst_3 : bf16 to vector<8x128xbf16>
    %c0_4 = arith.constant 0 : index
    %c896 = arith.constant 896 : index
    %4 = vector.load %arg9[%c0_4, %c896] : memref<8x1024xbf16, #tpu.memory_space<vmem>>, vector<8x128xbf16>
    tpu.vector_store %arg9[%c0_4, %c896], %3 {strides = array<i32>} : memref<8x1024xbf16, #tpu.memory_space<vmem>>, vector<8x128xbf16>,
    %cst_5 = arith.constant 0.000000e+00 : bf16
    %5 = vector.broadcast %cst_5 : bf16 to vector<64x128xbf16>
    %c0_6 = arith.constant 0 : index
    %c0_7 = arith.constant 0 : index
    %6 = vector.load %arg10[%c0_6, %c0_7] : memref<64x1024xbf16, #tpu.memory_space<vmem>>, vector<64x128xbf16>
    tpu.vector_store %arg10[%c0_6, %c0_7], %5 {strides = array<i32>} : memref<64x1024xbf16, #tpu.memory_space<vmem>>, vector<64x128xbf16>,
    %cst_8 = arith.constant 0.000000e+00 : bf16
    %7 = vector.broadcast %cst_8 : bf16 to vector<64x128xbf16>
    %c0_9 = arith.constant 0 : index
    %c896_10 = arith.constant 896 : index
    %8 = vector.load %arg10[%c0_9, %c896_10] : memref<64x1024xbf16, #tpu.memory_space<vmem>>, vector<64x128xbf16>
    tpu.vector_store %arg10[%c0_9, %c896_10], %7 {strides = array<i32>} : memref<64x1024xbf16, #tpu.memory_space<vmem>>, vector<64x128xbf16>,
    %cst_11 = arith.constant 0.000000e+00 : bf16
    %9 = vector.broadcast %cst_11 : bf16 to vector<1x768xbf16>
    %c7 = arith.constant 7 : index
    %c128 = arith.constant 128 : index
    %10 = vector.load %arg9[%c7, %c128] : memref<8x1024xbf16, #tpu.memory_space<vmem>>, vector<1x768xbf16>
    tpu.vector_store %arg9[%c7, %c128], %9 {strides = array<i32>} : memref<8x1024xbf16, #tpu.memory_space<vmem>>, vector<1x768xbf16>,
    %c0_12 = arith.constant 0 : index
    %c0_13 = arith.constant 0 : index
    %c0_14 = arith.constant 0 : index
    %11 = vector.load %arg2[%c0_12, %c0_13, %c0_14] : memref<2x3x384xf32, #tpu.memory_space<vmem>>, vector<1x3x384xf32>
    %12 = vector.shape_cast %11 : vector<1x3x384xf32> to vector<3x384xf32>
    %13 = arith.truncf %12 : vector<3x384xf32> to vector<3x384xbf16>
    %c0_15 = arith.constant 0 : index
    %c128_16 = arith.constant 128 : index
    %14 = vector.load %arg9[%c0_15, %c128_16] : memref<8x1024xbf16, #tpu.memory_space<vmem>>, vector<3x384xbf16>
    tpu.vector_store %arg9[%c0_15, %c128_16], %13 {strides = array<i32>} : memref<8x1024xbf16, #tpu.memory_space<vmem>>, vector<3x384xbf16>,
    %c2_i32 = arith.constant 2 : i32
    %15 = arith.muli %arg0, %c2_i32 : i32
    %c0_i32 = arith.constant 0 : i32
    %16 = arith.addi %15, %c0_i32 : i32
    %17 = vector.extract_strided_slice %0 {offsets = [0, 0], sizes = [1, 384], strides = [1, 1]} : vector<1x768xf32> to vector<1x384xf32>
    %18 = arith.index_cast %16 : i32 to index
    %c0_17 = arith.constant 0 : index
    %19 = memref.load %arg1[%18, %c0_17] : memref<2x4xf32, #tpu.memory_space<smem>>
    %20 = vector.broadcast %19 : f32 to vector<1x384xf32>
    %21 = arith.mulf %20, %17 : vector<1x384xf32>
    %22 = arith.truncf %21 : vector<1x384xf32> to vector<1x384xbf16>
    %c3 = arith.constant 3 : index
    %c128_18 = arith.constant 128 : index
    %23 = vector.load %arg9[%c3, %c128_18] : memref<8x1024xbf16, #tpu.memory_space<vmem>>, vector<1x384xbf16>
    tpu.vector_store %arg9[%c3, %c128_18], %22 {strides = array<i32>} : memref<8x1024xbf16, #tpu.memory_space<vmem>>, vector<1x384xbf16>,
    %24 = arith.index_cast %16 : i32 to index
    %c1 = arith.constant 1 : index
    %25 = memref.load %arg1[%24, %c1] : memref<2x4xf32, #tpu.memory_space<smem>>
    %26 = vector.broadcast %25 : f32 to vector<1x384xf32>
    %27 = arith.mulf %26, %17 : vector<1x384xf32>
    %28 = arith.truncf %27 : vector<1x384xf32> to vector<1x384xbf16>
    %c4 = arith.constant 4 : index
    %c128_19 = arith.constant 128 : index
    %29 = vector.load %arg9[%c4, %c128_19] : memref<8x1024xbf16, #tpu.memory_space<vmem>>, vector<1x384xbf16>
    tpu.vector_store %arg9[%c4, %c128_19], %28 {strides = array<i32>} : memref<8x1024xbf16, #tpu.memory_space<vmem>>, vector<1x384xbf16>,
    %30 = arith.index_cast %16 : i32 to index
    %c2 = arith.constant 2 : index
    %31 = memref.load %arg1[%30, %c2] : memref<2x4xf32, #tpu.memory_space<smem>>
    %32 = vector.broadcast %31 : f32 to vector<1x384xf32>
    %33 = arith.mulf %32, %17 : vector<1x384xf32>
    %34 = arith.truncf %33 : vector<1x384xf32> to vector<1x384xbf16>
    %c5 = arith.constant 5 : index
    %c128_20 = arith.constant 128 : index
    %35 = vector.load %arg9[%c5, %c128_20] : memref<8x1024xbf16, #tpu.memory_space<vmem>>, vector<1x384xbf16>
    tpu.vector_store %arg9[%c5, %c128_20], %34 {strides = array<i32>} : memref<8x1024xbf16, #tpu.memory_space<vmem>>, vector<1x384xbf16>,
    %36 = arith.index_cast %16 : i32 to index
    %c3_21 = arith.constant 3 : index
    %37 = memref.load %arg1[%36, %c3_21] : memref<2x4xf32, #tpu.memory_space<smem>>
    %38 = vector.broadcast %37 : f32 to vector<1x384xf32>
    %39 = arith.mulf %38, %17 : vector<1x384xf32>
    %40 = arith.truncf %39 : vector<1x384xf32> to vector<1x384xbf16>
    %c6 = arith.constant 6 : index
    %c128_22 = arith.constant 128 : index
    %41 = vector.load %arg9[%c6, %c128_22] : memref<8x1024xbf16, #tpu.memory_space<vmem>>, vector<1x384xbf16>
    tpu.vector_store %arg9[%c6, %c128_22], %40 {strides = array<i32>} : memref<8x1024xbf16, #tpu.memory_space<vmem>>, vector<1x384xbf16>,
    %c1_23 = arith.constant 1 : index
    %c0_24 = arith.constant 0 : index
    %c0_25 = arith.constant 0 : index
    %42 = vector.load %arg2[%c1_23, %c0_24, %c0_25] : memref<2x3x384xf32, #tpu.memory_space<vmem>>, vector<1x3x384xf32>
    %43 = vector.shape_cast %42 : vector<1x3x384xf32> to vector<3x384xf32>
    %44 = arith.truncf %43 : vector<3x384xf32> to vector<3x384xbf16>
    %c0_26 = arith.constant 0 : index
    %c512 = arith.constant 512 : index
    %45 = vector.load %arg9[%c0_26, %c512] : memref<8x1024xbf16, #tpu.memory_space<vmem>>, vector<3x384xbf16>
    tpu.vector_store %arg9[%c0_26, %c512], %44 {strides = array<i32>} : memref<8x1024xbf16, #tpu.memory_space<vmem>>, vector<3x384xbf16>,
    %c2_i32_27 = arith.constant 2 : i32
    %46 = arith.muli %arg0, %c2_i32_27 : i32
    %c1_i32 = arith.constant 1 : i32
    %47 = arith.addi %46, %c1_i32 : i32
    %48 = vector.extract_strided_slice %0 {offsets = [0, 384], sizes = [1, 384], strides = [1, 1]} : vector<1x768xf32> to vector<1x384xf32>
    %49 = arith.index_cast %47 : i32 to index
    %c0_28 = arith.constant 0 : index
    %50 = memref.load %arg1[%49, %c0_28] : memref<2x4xf32, #tpu.memory_space<smem>>
    %51 = vector.broadcast %50 : f32 to vector<1x384xf32>
    %52 = arith.mulf %51, %48 : vector<1x384xf32>
    %53 = arith.truncf %52 : vector<1x384xf32> to vector<1x384xbf16>
    %c3_29 = arith.constant 3 : index
    %c512_30 = arith.constant 512 : index
    %54 = vector.load %arg9[%c3_29, %c512_30] : memref<8x1024xbf16, #tpu.memory_space<vmem>>, vector<1x384xbf16>
    tpu.vector_store %arg9[%c3_29, %c512_30], %53 {strides = array<i32>} : memref<8x1024xbf16, #tpu.memory_space<vmem>>, vector<1x384xbf16>,
    %55 = arith.index_cast %47 : i32 to index
    %c1_31 = arith.constant 1 : index
    %56 = memref.load %arg1[%55, %c1_31] : memref<2x4xf32, #tpu.memory_space<smem>>
    %57 = vector.broadcast %56 : f32 to vector<1x384xf32>
    %58 = arith.mulf %57, %48 : vector<1x384xf32>
    %59 = arith.truncf %58 : vector<1x384xf32> to vector<1x384xbf16>
    %c4_32 = arith.constant 4 : index
    %c512_33 = arith.constant 512 : index
    %60 = vector.load %arg9[%c4_32, %c512_33] : memref<8x1024xbf16, #tpu.memory_space<vmem>>, vector<1x384xbf16>
    tpu.vector_store %arg9[%c4_32, %c512_33], %59 {strides = array<i32>} : memref<8x1024xbf16, #tpu.memory_space<vmem>>, vector<1x384xbf16>,
    %61 = arith.index_cast %47 : i32 to index
    %c2_34 = arith.constant 2 : index
    %62 = memref.load %arg1[%61, %c2_34] : memref<2x4xf32, #tpu.memory_space<smem>>
    %63 = vector.broadcast %62 : f32 to vector<1x384xf32>
    %64 = arith.mulf %63, %48 : vector<1x384xf32>
    %65 = arith.truncf %64 : vector<1x384xf32> to vector<1x384xbf16>
    %c5_35 = arith.constant 5 : index
    %c512_36 = arith.constant 512 : index
    %66 = vector.load %arg9[%c5_35, %c512_36] : memref<8x1024xbf16, #tpu.memory_space<vmem>>, vector<1x384xbf16>
    tpu.vector_store %arg9[%c5_35, %c512_36], %65 {strides = array<i32>} : memref<8x1024xbf16, #tpu.memory_space<vmem>>, vector<1x384xbf16>,
    %67 = arith.index_cast %47 : i32 to index
    %c3_37 = arith.constant 3 : index
    %68 = memref.load %arg1[%67, %c3_37] : memref<2x4xf32, #tpu.memory_space<smem>>
    %69 = vector.broadcast %68 : f32 to vector<1x384xf32>
    %70 = arith.mulf %69, %48 : vector<1x384xf32>
    %71 = arith.truncf %70 : vector<1x384xf32> to vector<1x384xbf16>
    %c6_38 = arith.constant 6 : index
    %c512_39 = arith.constant 512 : index
    %72 = vector.load %arg9[%c6_38, %c512_39] : memref<8x1024xbf16, #tpu.memory_space<vmem>>, vector<1x384xbf16>
    tpu.vector_store %arg9[%c6_38, %c512_39], %71 {strides = array<i32>} : memref<8x1024xbf16, #tpu.memory_space<vmem>>, vector<1x384xbf16>,
    %c0_40 = arith.constant 0 : index
    %c109 = arith.constant 109 : index
    %73 = vector.load %arg9[%c0_40, %c109] : memref<8x1024xbf16, #tpu.memory_space<vmem>>, vector<8x768xbf16>
    %c0_41 = arith.constant 0 : index
    %c110 = arith.constant 110 : index
    %74 = vector.load %arg9[%c0_41, %c110] : memref<8x1024xbf16, #tpu.memory_space<vmem>>, vector<8x768xbf16>
    %c0_42 = arith.constant 0 : index
    %c111 = arith.constant 111 : index
    %75 = vector.load %arg9[%c0_42, %c111] : memref<8x1024xbf16, #tpu.memory_space<vmem>>, vector<8x768xbf16>
    %c0_43 = arith.constant 0 : index
    %c127 = arith.constant 127 : index
    %76 = vector.load %arg9[%c0_43, %c127] : memref<8x1024xbf16, #tpu.memory_space<vmem>>, vector<8x768xbf16>
    %c0_44 = arith.constant 0 : index
    %c128_45 = arith.constant 128 : index
    %77 = vector.load %arg9[%c0_44, %c128_45] : memref<8x1024xbf16, #tpu.memory_space<vmem>>, vector<8x768xbf16>
    %c0_46 = arith.constant 0 : index
    %c129 = arith.constant 129 : index
    %78 = vector.load %arg9[%c0_46, %c129] : memref<8x1024xbf16, #tpu.memory_space<vmem>>, vector<8x768xbf16>
    %c0_47 = arith.constant 0 : index
    %c145 = arith.constant 145 : index
    %79 = vector.load %arg9[%c0_47, %c145] : memref<8x1024xbf16, #tpu.memory_space<vmem>>, vector<8x768xbf16>
    %c0_48 = arith.constant 0 : index
    %c146 = arith.constant 146 : index
    %80 = vector.load %arg9[%c0_48, %c146] : memref<8x1024xbf16, #tpu.memory_space<vmem>>, vector<8x768xbf16>
    %c0_49 = arith.constant 0 : index
    %c147 = arith.constant 147 : index
    %81 = vector.load %arg9[%c0_49, %c147] : memref<8x1024xbf16, #tpu.memory_space<vmem>>, vector<8x768xbf16>
    %82 = tpu.concatenate %73, %74, %75, %76, %77, %78, %79, %80, %81 in 0 : vector<8x768xbf16>, vector<8x768xbf16>, vector<8x768xbf16>, vector<8x768xbf16>, vector<8x768xbf16>, vector<8x768xbf16>, vector<8x768xbf16>, vector<8x768xbf16>, vector<8x768xbf16> -> vector<72x768xbf16>
    %c0_50 = arith.constant 0 : index
    %c0_51 = arith.constant 0 : index
    %83 = vector.load %arg4[%c0_50, %c0_51] : memref<64x72xbf16, #tpu.memory_space<vmem>>, vector<64x72xbf16>
    %cst_52 = arith.constant dense<0.000000e+00> : vector<64x768xf32>
    %84 = tpu.matmul %83, %82, %cst_52 {dimension_numbers = #tpu.dot_dimension_numbers<[1], [0], [0], [1], [0, 0, 1, 1], [], []>} : vector<64x72xbf16>, vector<72x768xbf16>, vector<64x768xf32> -> vector<64x768xf32>
    %c0_53 = arith.constant 0 : index
    %c0_54 = arith.constant 0 : index
    %85 = vector.load %arg5[%c0_53, %c0_54] : memref<64x1xf32, #tpu.memory_space<vmem>>, vector<64x1xf32>
    %86 = vector.broadcast %85 : vector<64x1xf32> to vector<64x768xf32>
    %87 = arith.addf %84, %86 : vector<64x768xf32>
    %cst_55 = arith.constant 0.000000e+00 : f32
    %88 = vector.broadcast %cst_55 : f32 to vector<64x768xf32>
    %89 = arith.maximumf %87, %88 : vector<64x768xf32>
    %90 = vector.broadcast %0 : vector<1x768xf32> to vector<64x768xf32>
    %91 = arith.mulf %89, %90 : vector<64x768xf32>
    %92 = arith.truncf %91 : vector<64x768xf32> to vector<64x768xbf16>
    %c0_56 = arith.constant 0 : index
    %c128_57 = arith.constant 128 : index
    %93 = vector.load %arg10[%c0_56, %c128_57] : memref<64x1024xbf16, #tpu.memory_space<vmem>>, vector<64x768xbf16>
    tpu.vector_store %arg10[%c0_56, %c128_57], %92 {strides = array<i32>} : memref<64x1024xbf16, #tpu.memory_space<vmem>>, vector<64x768xbf16>,
    %c0_58 = arith.constant 0 : index
    %c109_59 = arith.constant 109 : index
    %94 = vector.load %arg10[%c0_58, %c109_59] : memref<64x1024xbf16, #tpu.memory_space<vmem>>, vector<64x768xbf16>
    %c0_60 = arith.constant 0 : index
    %c110_61 = arith.constant 110 : index
    %95 = vector.load %arg10[%c0_60, %c110_61] : memref<64x1024xbf16, #tpu.memory_space<vmem>>, vector<64x768xbf16>
    %c0_62 = arith.constant 0 : index
    %c111_63 = arith.constant 111 : index
    %96 = vector.load %arg10[%c0_62, %c111_63] : memref<64x1024xbf16, #tpu.memory_space<vmem>>, vector<64x768xbf16>
    %c0_64 = arith.constant 0 : index
    %c127_65 = arith.constant 127 : index
    %97 = vector.load %arg10[%c0_64, %c127_65] : memref<64x1024xbf16, #tpu.memory_space<vmem>>, vector<64x768xbf16>
    %c0_66 = arith.constant 0 : index
    %c128_67 = arith.constant 128 : index
    %98 = vector.load %arg10[%c0_66, %c128_67] : memref<64x1024xbf16, #tpu.memory_space<vmem>>, vector<64x768xbf16>
    %c0_68 = arith.constant 0 : index
    %c129_69 = arith.constant 129 : index
    %99 = vector.load %arg10[%c0_68, %c129_69] : memref<64x1024xbf16, #tpu.memory_space<vmem>>, vector<64x768xbf16>
    %c0_70 = arith.constant 0 : index
    %c145_71 = arith.constant 145 : index
    %100 = vector.load %arg10[%c0_70, %c145_71] : memref<64x1024xbf16, #tpu.memory_space<vmem>>, vector<64x768xbf16>
    %c0_72 = arith.constant 0 : index
    %c146_73 = arith.constant 146 : index
    %101 = vector.load %arg10[%c0_72, %c146_73] : memref<64x1024xbf16, #tpu.memory_space<vmem>>, vector<64x768xbf16>
    %c0_74 = arith.constant 0 : index
    %c147_75 = arith.constant 147 : index
    %102 = vector.load %arg10[%c0_74, %c147_75] : memref<64x1024xbf16, #tpu.memory_space<vmem>>, vector<64x768xbf16>
    %103 = tpu.concatenate %94, %95, %96, %97, %98, %99, %100, %101, %102 in 0 : vector<64x768xbf16>, vector<64x768xbf16>, vector<64x768xbf16>, vector<64x768xbf16>, vector<64x768xbf16>, vector<64x768xbf16>, vector<64x768xbf16>, vector<64x768xbf16>, vector<64x768xbf16> -> vector<576x768xbf16>
    %c0_76 = arith.constant 0 : index
    %c0_77 = arith.constant 0 : index
    %104 = vector.load %arg6[%c0_76, %c0_77] : memref<8x576xbf16, #tpu.memory_space<vmem>>, vector<8x576xbf16>
    %cst_78 = arith.constant dense<0.000000e+00> : vector<8x768xf32>
    %105 = tpu.matmul %104, %103, %cst_78 {dimension_numbers = #tpu.dot_dimension_numbers<[1], [0], [0], [1], [0, 0, 1, 1], [], []>} : vector<8x576xbf16>, vector<576x768xbf16>, vector<8x768xf32> -> vector<8x768xf32>
    %c0_79 = arith.constant 0 : index
    %c0_80 = arith.constant 0 : index
    %106 = vector.load %arg7[%c0_79, %c0_80] : memref<8x1xf32, #tpu.memory_space<vmem>>, vector<8x1xf32>
    %107 = vector.broadcast %106 : vector<8x1xf32> to vector<8x768xf32>
    %108 = arith.addf %105, %107 : vector<8x768xf32>
    %c0_81 = arith.constant 0 : index
    %c0_82 = arith.constant 0 : index
    %c0_83 = arith.constant 0 : index
    %109 = vector.load %arg2[%c0_81, %c0_82, %c0_83] : memref<2x3x384xf32, #tpu.memory_space<vmem>>, vector<1x3x384xf32>
    %110 = vector.shape_cast %109 : vector<1x3x384xf32> to vector<3x384xf32>
    %111 = vector.extract_strided_slice %108 {offsets = [0, 0], sizes = [3, 384], strides = [1, 1]} : vector<8x768xf32> to vector<3x384xf32>
    %cst_84 = arith.constant 1.000000e-01 : f32
    %112 = vector.broadcast %cst_84 : f32 to vector<3x384xf32>
    %113 = arith.mulf %112, %111 : vector<3x384xf32>
    %114 = arith.addf %110, %113 : vector<3x384xf32>
    %c0_85 = arith.constant 0 : index
    %c0_86 = arith.constant 0 : index
    %c0_87 = arith.constant 0 : index
    %115 = vector.load %arg8[%c0_85, %c0_86, %c0_87] : memref<2x3x384xf32, #tpu.memory_space<vmem>>, vector<1x3x384xf32>
    %116 = vector.shape_cast %115 : vector<1x3x384xf32> to vector<3x384xf32>
    %117 = vector.shape_cast %114 : vector<3x384xf32> to vector<1x3x384xf32>
    tpu.vector_store %arg8[%c0_85, %c0_86, %c0_87], %117 {strides = array<i32>} : memref<2x3x384xf32, #tpu.memory_space<vmem>>, vector<1x3x384xf32>,
    %c1_88 = arith.constant 1 : index
    %c0_89 = arith.constant 0 : index
    %c0_90 = arith.constant 0 : index
    %118 = vector.load %arg2[%c1_88, %c0_89, %c0_90] : memref<2x3x384xf32, #tpu.memory_space<vmem>>, vector<1x3x384xf32>
    %119 = vector.shape_cast %118 : vector<1x3x384xf32> to vector<3x384xf32>
    %120 = vector.extract_strided_slice %108 {offsets = [0, 384], sizes = [3, 384], strides = [1, 1]} : vector<8x768xf32> to vector<3x384xf32>
    %cst_91 = arith.constant 1.000000e-01 : f32
    %121 = vector.broadcast %cst_91 : f32 to vector<3x384xf32>
    %122 = arith.mulf %121, %120 : vector<3x384xf32>
    %123 = arith.addf %119, %122 : vector<3x384xf32>
    %c1_92 = arith.constant 1 : index
    %c0_93 = arith.constant 0 : index
    %c0_94 = arith.constant 0 : index
    %124 = vector.load %arg8[%c1_92, %c0_93, %c0_94] : memref<2x3x384xf32, #tpu.memory_space<vmem>>, vector<1x3x384xf32>
    %125 = vector.shape_cast %124 : vector<1x3x384xf32> to vector<3x384xf32>
    %126 = vector.shape_cast %123 : vector<3x384xf32> to vector<1x3x384xf32>
    tpu.vector_store %arg8[%c1_92, %c0_93, %c0_94], %126 {strides = array<i32>} : memref<2x3x384xf32, #tpu.memory_space<vmem>>, vector<1x3x384xf32>,
    return
  }
  func.func @transform_0(%arg0: i32, %arg1: memref<2x4xf32, #tpu.memory_space<smem>>) -> (i32, i32, i32) {
    %c0_i32 = arith.constant 0 : i32
    %c0_i32_0 = arith.constant 0 : i32
    %c0_i32_1 = arith.constant 0 : i32
    return %arg0, %c0_i32, %c0_i32_0 : i32, i32, i32
  }
  func.func @transform_1(%arg0: i32, %arg1: memref<2x4xf32, #tpu.memory_space<smem>>) -> (i32, i32) {
    %c0_i32 = arith.constant 0 : i32
    %c0_i32_0 = arith.constant 0 : i32
    %c0_i32_1 = arith.constant 0 : i32
    return %c0_i32, %c0_i32_0 : i32, i32
  }
  func.func @transform_2(%arg0: i32, %arg1: memref<2x4xf32, #tpu.memory_space<smem>>) -> (i32, i32) {
    %c0_i32 = arith.constant 0 : i32
    %c0_i32_0 = arith.constant 0 : i32
    %c0_i32_1 = arith.constant 0 : i32
    return %c0_i32, %c0_i32_0 : i32, i32
  }
  func.func @transform_3(%arg0: i32, %arg1: memref<2x4xf32, #tpu.memory_space<smem>>) -> (i32, i32) {
    %c0_i32 = arith.constant 0 : i32
    %c0_i32_0 = arith.constant 0 : i32
    %c0_i32_1 = arith.constant 0 : i32
    return %c0_i32, %c0_i32_0 : i32, i32
  }
  func.func @transform_4(%arg0: i32, %arg1: memref<2x4xf32, #tpu.memory_space<smem>>) -> (i32, i32) {
    %c0_i32 = arith.constant 0 : i32
    %c0_i32_0 = arith.constant 0 : i32
    %c0_i32_1 = arith.constant 0 : i32
    return %c0_i32, %c0_i32_0 : i32, i32
  }
  func.func @transform_5(%arg0: i32, %arg1: memref<2x4xf32, #tpu.memory_space<smem>>) -> (i32, i32) {
    %c0_i32 = arith.constant 0 : i32
    %c0_i32_0 = arith.constant 0 : i32
    %c0_i32_1 = arith.constant 0 : i32
    return %c0_i32, %c0_i32_0 : i32, i32
  }
  func.func @transform_6(%arg0: i32, %arg1: memref<2x4xf32, #tpu.memory_space<smem>>) -> (i32, i32, i32) {
    %c0_i32 = arith.constant 0 : i32
    %c0_i32_0 = arith.constant 0 : i32
    %c0_i32_1 = arith.constant 0 : i32
    return %arg0, %c0_i32, %c0_i32_0 : i32, i32, i32
  }
}

</mosaic_0001>

<llo_original>
// kernel: watermark_encoder.1
$region0: #{watermark_encoder.1}
  #allocation0 [shape = 'u32[]', space=smem, size = 0x4, offset = 0x4, fixed_abs, tag = 'smem constant byte address 0x4 - core index']
  #allocation1 [shape = 'u32[72,128]{1,0:T(1,128)}', space=vmem, size = 0x9000, scoped, tag = 'internal scratch']
  #allocation2 [shape = 'bf16[8,1024]{1,0:T(8,128)(2,1)}', space=vmem, size = 0x4000, scoped, tag = 'scratch operand']
  #allocation3 [shape = 'bf16[64,1024]{1,0:T(8,128)(2,1)}', space=vmem, size = 0x20000, scoped, tag = 'scratch operand']
  #allocation4 [shape = 's32[1]{0}', space=sflag, size = 0x4, scoped, tag = 'scoped memory for watermark_encoder.1']
  #allocation5 [shape = 'u8[1024]{0}', space=smem, size = 0x400, scoped, tag = 'prefetched SMEM operand 0']
  %s0 = inlined_call_operand.vmem [shape: f32[2,4], index: 0, kind: input, shape index: {}]
  %s1 = inlined_call_operand.vmem [shape: f32[2,3,384], index: 1, kind: input, shape index: {}]
  %s2 = inlined_call_operand.vmem [shape: f32[1,768], index: 2, kind: input, shape index: {}]
  %s3 = inlined_call_operand.vmem [shape: bf16[64,72], index: 3, kind: input, shape index: {}]
  %s4 = inlined_call_operand.vmem [shape: f32[64,1], index: 4, kind: input, shape index: {}]
  %s5 = inlined_call_operand.vmem [shape: bf16[8,576], index: 5, kind: input, shape index: {}]
  %s6 = inlined_call_operand.vmem [shape: f32[8,1], index: 6, kind: input, shape index: {}]
  %s7 = inlined_call_operand.vmem [shape: f32[2,3,384], index: 7, kind: output, shape index: {}]
  %s8 = sld [smem:[#allocation0]]
  $region34: #{watermark_encoder.1} parent=0
    _
  %s10 = ssub.s32 1, %s8
  %s11 = scalar_select 0, %s10, %s8
  %s13 = sshll.u32 %s0, 4
  %s14 = int_to_ptr.vmem [resolvable:$true] %s13
  %16 = dma.vmem_to_smem %s14, 32, [#allocation5], [#allocation4]
  %18 = dma.done [#allocation4], 32
  %19 = sfence
  // Predicated region
  $region2: #{watermark_encoder.1} parent=0 // pred_check
    _
  $region3: #{watermark_encoder.1} parent=0 // pred_check_branch
    %21 = sbr.rel (0) target = $region5
  $region4: #{watermark_encoder.1} parent=0 // pred_region
    _
  $region5: #{watermark_encoder.1} parent=0 // pred_fallthru
    _
  // Predicated region
  $region6: #{watermark_encoder.1} parent=0 // pred_check
    _
  $region7: #{watermark_encoder.1} parent=0 // pred_check_branch
    %23 = sbr.rel (0) target = $region9
  $region8: #{watermark_encoder.1} parent=0 // pred_region
    _
  $region9: #{watermark_encoder.1} parent=0 // pred_fallthru
    _
  // Predicated region
  $region10: #{watermark_encoder.1} parent=0 // pred_check
    _
  $region11: #{watermark_encoder.1} parent=0 // pred_check_branch
    %25 = sbr.rel (0) target = $region13
  $region12: #{watermark_encoder.1} parent=0 // pred_region
    _
  $region13: #{watermark_encoder.1} parent=0 // pred_fallthru
    _
  // Predicated region
  $region14: #{watermark_encoder.1} parent=0 // pred_check
    _
  $region15: #{watermark_encoder.1} parent=0 // pred_check_branch
    %27 = sbr.rel (0) target = $region17
  $region16: #{watermark_encoder.1} parent=0 // pred_region
    _
  $region17: #{watermark_encoder.1} parent=0 // pred_fallthru
    _
  // Predicated region
  $region18: #{watermark_encoder.1} parent=0 // pred_check
    _
  $region19: #{watermark_encoder.1} parent=0 // pred_check_branch
    %29 = sbr.rel (0) target = $region21
  $region20: #{watermark_encoder.1} parent=0 // pred_region
    _
  $region21: #{watermark_encoder.1} parent=0 // pred_fallthru
    _
  // Predicated region
  $region22: #{watermark_encoder.1} parent=0 // pred_check
    _
  $region23: #{watermark_encoder.1} parent=0 // pred_check_branch
    %31 = sbr.rel (0) target = $region25
  $region24: #{watermark_encoder.1} parent=0 // pred_region
    _
  $region25: #{watermark_encoder.1} parent=0 // pred_fallthru
    _
  %v33 = vld [vmem:[%s2] sm:$0x3f]
  %34 = vst [vmem:[#allocation2] sm:$0xf] 0
  %35 = vst [vmem:[#allocation2 + $0x1c] sm:$0xf] 0
  %36 = vst [vmem:[#allocation3] sm:$0xf] 0
  %37 = vst [vmem:[#allocation3 + $0x20] sm:$0xf] 0
  %38 = vst [vmem:[#allocation3 + $0x40] sm:$0xf] 0
  %39 = vst [vmem:[#allocation3 + $0x60] sm:$0xf] 0
  %40 = vst [vmem:[#allocation3 + $0x80] sm:$0xf] 0
  %41 = vst [vmem:[#allocation3 + $0xa0] sm:$0xf] 0
  %42 = vst [vmem:[#allocation3 + $0xc0] sm:$0xf] 0
  %43 = vst [vmem:[#allocation3 + $0xe0] sm:$0xf] 0
  %44 = vst [vmem:[#allocation3 + $0x1c] sm:$0xf] 0
  %45 = vst [vmem:[#allocation3 + $0x3c] sm:$0xf] 0
  %46 = vst [vmem:[#allocation3 + $0x5c] sm:$0xf] 0
  %47 = vst [vmem:[#allocation3 + $0x7c] sm:$0xf] 0
  %48 = vst [vmem:[#allocation3 + $0x9c] sm:$0xf] 0
  %49 = vst [vmem:[#allocation3 + $0xbc] sm:$0xf] 0
  %50 = vst [vmem:[#allocation3 + $0xdc] sm:$0xf] 0
  %51 = vst [vmem:[#allocation3 + $0xfc] sm:$0xf] 0
  %vm52 = vcmask 1043459
  %vm53 = vsmask.f32 7950
  %vm54 = vmand %vm52, %vm53
  %vm55 = vcmask 1047559
  %vm56 = vsmask.f32 7966
  %vm57 = vmand %vm55, %vm56
  %vm58 = vmor %vm57, %vm54
  %v59 = vld [vmem:[#allocation2 + $0x4] sm:$0x88]
  %v60 = vsel %vm58, 0, %v59
  %61 = vst [vmem:[#allocation2 + $0x4] sm:$0x88] %v60
  %v62 = vld [vmem:[#allocation2 + $0xc] sm:$0x88]
  %v63 = vsel %vm58, 0, %v62
  %64 = vst [vmem:[#allocation2 + $0xc] sm:$0x88] %v63
  %v65 = vld [vmem:[#allocation2 + $0x14] sm:$0x88]
  %v66 = vsel %vm58, 0, %v65
  %67 = vst [vmem:[#allocation2 + $0x14] sm:$0x88] %v66
  %v68 = vld [vmem:[%s1] sm:$0x77]
  %v69 = vld [vmem:[%s1 + $0x8] sm:$0x7]
  %72 = vst [vmem:[#allocation1] ss:$2 sm:$0xff] %v68
  %s73 = scalar_lea.vmem [#allocation1], 16
  %74 = vst [vmem:[%s73] ss:$2 sm:$0xff] %v69
  %v75 = vld.sshfl [vmem:[#allocation1] sm:$0xff pattern:$0x75316420]
  %v76 = vld.sshfl [vmem:[#allocation1 + $0x8] sm:$0xff pattern:$0x75316420]
  %v77 = vld.sshfl [vmem:[#allocation1 + $0x10] sm:$0xff pattern:$0x75316420]
  %v81 = vpack.c.bf16 %v76, %v75
  %v82 = vpack.c.bf16 %v77, %v77
  %vm83 = vcmask 1041408
  %vm84 = vsmask.f32 1280
  %vm85 = vmand %vm83, %vm84
  %vm86 = vcmask 1045508
  %vm87 = vsmask.f32 5376
  %vm88 = vmand %vm86, %vm87
  %vm89 = vmor %vm88, %vm85
  %v90 = vld [vmem:[#allocation2 + $0x4] sm:$0x33]
  %v91 = vsel %vm89, %v81, %v90
  %92 = vst [vmem:[#allocation2 + $0x4] sm:$0x33] %v91
  %v93 = vld [vmem:[#allocation2 + $0xc] sm:$0x3]
  %v94 = vsel %vm85, %v82, %v93
  %95 = vst [vmem:[#allocation2 + $0xc] sm:$0x3] %v94
  %s96 = smul.u32 0, 2
  %s97 = smul.u32 %s96, 128
  %s98 = sld [smem:[#allocation5 + %s97]]
  %v99 = vstv %s98
  %v100 = vmul.f32 %v99, %v33
  %v102 = vperm.slane %v100, 0
  %v103 = vperm.slane %v100, 1
  %v104 = vperm.slane %v100, 2
  %v108 = vpack.c.bf16 %v103, %v102
  %v109 = vpack.c.bf16 %v104, %v104
  %v111 = vshll.u32 %v108, 16
  %v113 = vrot.slane %v111, 7
  %v115 = vshll.u32 %v109, 16
  %v117 = vrot.slane %v115, 7
  %vm120 = vcmask 1041409
  %vm121 = vsmask.f32 7942
  %vm122 = vmand %vm120, %vm121
  %vm123 = vcmask 1045509
  %vm124 = vsmask.f32 7958
  %vm125 = vmand %vm123, %vm124
  %vm126 = vmor %vm125, %vm122
  %v127 = vld [vmem:[#allocation2 + $0x4] sm:$0x22]
  %v128 = vsel %vm126, %v113, %v127
  %129 = vst [vmem:[#allocation2 + $0x4] sm:$0x22] %v128
  %v130 = vld [vmem:[#allocation2 + $0xc] sm:$0x2]
  %v131 = vsel %vm122, %v117, %v130
  %132 = vst [vmem:[#allocation2 + $0xc] sm:$0x2] %v131
  %s133 = sadd.s32 %s97, 1
  %s134 = sld [smem:[#allocation5 + %s133]]
  %v135 = vstv %s134
  %v136 = vmul.f32 %v135, %v33
  %v138 = vperm.slane %v136, 0
  %v139 = vperm.slane %v136, 1
  %v140 = vperm.slane %v136, 2
  %v144 = vpack.c.bf16 %v139, %v138
  %v145 = vpack.c.bf16 %v140, %v140
  %v148 = vrot.slane %v144, 6
  %v149 = vrot.slane %v145, 6
  %vm152 = vcmask 1042434
  %vm153 = vsmask.f32 2304
  %vm154 = vmand %vm152, %vm153
  %vm155 = vcmask 1046534
  %vm156 = vsmask.f32 6400
  %vm157 = vmand %vm155, %vm156
  %vm158 = vmor %vm157, %vm154
  %v159 = vld [vmem:[#allocation2 + $0x4] sm:$0x44]
  %v160 = vsel %vm158, %v148, %v159
  %161 = vst [vmem:[#allocation2 + $0x4] sm:$0x44] %v160
  %v162 = vld [vmem:[#allocation2 + $0xc] sm:$0x4]
  %v163 = vsel %vm154, %v149, %v162
  %164 = vst [vmem:[#allocation2 + $0xc] sm:$0x4] %v163
  %s165 = sadd.s32 %s97, 2
  %s166 = sld [smem:[#allocation5 + %s165]]
  %v167 = vstv %s166
  %v168 = vmul.f32 %v167, %v33
  %v170 = vperm.slane %v168, 0
  %v171 = vperm.slane %v168, 1
  %v172 = vperm.slane %v168, 2
  %v176 = vpack.c.bf16 %v171, %v170
  %v177 = vpack.c.bf16 %v172, %v172
  %v179 = vshll.u32 %v176, 16
  %v181 = vrot.slane %v179, 6
  %v183 = vshll.u32 %v177, 16
  %v185 = vrot.slane %v183, 6
  %vm188 = vsmask.f32 7946
  %vm189 = vmand %vm152, %vm188
  %vm190 = vsmask.f32 7962
  %vm191 = vmand %vm155, %vm190
  %vm192 = vmor %vm191, %vm189
  %v193 = vld [vmem:[#allocation2 + $0x4] sm:$0x44]
  %v194 = vsel %vm192, %v181, %v193
  %195 = vst [vmem:[#allocation2 + $0x4] sm:$0x44] %v194
  %v196 = vld [vmem:[#allocation2 + $0xc] sm:$0x4]
  %v197 = vsel %vm189, %v185, %v196
  %198 = vst [vmem:[#allocation2 + $0xc] sm:$0x4] %v197
  %s199 = sadd.s32 %s97, 3
  %s200 = sld [smem:[#allocation5 + %s199]]
  %v201 = vstv %s200
  %v202 = vmul.f32 %v201, %v33
  %v204 = vperm.slane %v202, 0
  %v205 = vperm.slane %v202, 1
  %v206 = vperm.slane %v202, 2
  %v210 = vpack.c.bf16 %v205, %v204
  %v211 = vpack.c.bf16 %v206, %v206
  %v214 = vrot.slane %v210, 5
  %v215 = vrot.slane %v211, 5
  %vm218 = vsmask.f32 3328
  %vm219 = vmand %vm52, %vm218
  %vm220 = vsmask.f32 7424
  %vm221 = vmand %vm55, %vm220
  %vm222 = vmor %vm221, %vm219
  %v223 = vld [vmem:[#allocation2 + $0x4] sm:$0x88]
  %v224 = vsel %vm222, %v214, %v223
  %225 = vst [vmem:[#allocation2 + $0x4] sm:$0x88] %v224
  %v226 = vld [vmem:[#allocation2 + $0xc] sm:$0x8]
  %v227 = vsel %vm219, %v215, %v226
  %228 = vst [vmem:[#allocation2 + $0xc] sm:$0x8] %v227
  %s229 = scalar_lea.vmem %s1, 12
  %v230 = vld [vmem:[%s229] sm:$0x77]
  %v231 = vld [vmem:[%s229 + $0x8] sm:$0x7]
  %234 = vst [vmem:[#allocation1] ss:$2 sm:$0xff] %v230
  %s235 = scalar_lea.vmem [#allocation1], 16
  %236 = vst [vmem:[%s235] ss:$2 sm:$0xff] %v231
  %v237 = vld.sshfl [vmem:[#allocation1] sm:$0xff pattern:$0x75316420]
  %v238 = vld.sshfl [vmem:[#allocation1 + $0x8] sm:$0xff pattern:$0x75316420]
  %v239 = vld.sshfl [vmem:[#allocation1 + $0x10] sm:$0xff pattern:$0x75316420]
  %v243 = vpack.c.bf16 %v238, %v237
  %v244 = vpack.c.bf16 %v239, %v239
  %v245 = vld [vmem:[#allocation2 + $0x10] sm:$0x33]
  %v246 = vsel %vm89, %v243, %v245
  %247 = vst [vmem:[#allocation2 + $0x10] sm:$0x33] %v246
  %v248 = vld [vmem:[#allocation2 + $0x18] sm:$0x3]
  %v249 = vsel %vm85, %v244, %v248
  %250 = vst [vmem:[#allocation2 + $0x18] sm:$0x3] %v249
  %s251 = sadd.s32 %s96, 1
  %s252 = smul.u32 %s251, 128
  %s253 = sld [smem:[#allocation5 + %s252]]
  %v254 = vstv %s253
  %v256 = vrot.slane %v33, 3
  %v258 = vmul.f32 %v254, %v256
  %v260 = vperm.slane %v258, 0
  %v261 = vperm.slane %v258, 1
  %v262 = vperm.slane %v258, 2
  %v266 = vpack.c.bf16 %v261, %v260
  %v267 = vpack.c.bf16 %v262, %v262
  %v269 = vshll.u32 %v266, 16
  %v271 = vrot.slane %v269, 7
  %v273 = vshll.u32 %v267, 16
  %v275 = vrot.slane %v273, 7
  %v278 = vld [vmem:[#allocation2 + $0x10] sm:$0x22]
  %v279 = vsel %vm126, %v271, %v278
  %280 = vst [vmem:[#allocation2 + $0x10] sm:$0x22] %v279
  %v281 = vld [vmem:[#allocation2 + $0x18] sm:$0x2]
  %v282 = vsel %vm122, %v275, %v281
  %283 = vst [vmem:[#allocation2 + $0x18] sm:$0x2] %v282
  %s284 = sadd.s32 %s252, 1
  %s285 = sld [smem:[#allocation5 + %s284]]
  %v286 = vstv %s285
  %v287 = vmul.f32 %v286, %v256
  %v289 = vperm.slane %v287, 0
  %v290 = vperm.slane %v287, 1
  %v291 = vperm.slane %v287, 2
  %v295 = vpack.c.bf16 %v290, %v289
  %v296 = vpack.c.bf16 %v291, %v291
  %v299 = vrot.slane %v295, 6
  %v300 = vrot.slane %v296, 6
  %v303 = vld [vmem:[#allocation2 + $0x10] sm:$0x44]
  %v304 = vsel %vm158, %v299, %v303
  %305 = vst [vmem:[#allocation2 + $0x10] sm:$0x44] %v304
  %v306 = vld [vmem:[#allocation2 + $0x18] sm:$0x4]
  %v307 = vsel %vm154, %v300, %v306
  %308 = vst [vmem:[#allocation2 + $0x18] sm:$0x4] %v307
  %s309 = sadd.s32 %s252, 2
  %s310 = sld [smem:[#allocation5 + %s309]]
  %v311 = vstv %s310
  %v312 = vmul.f32 %v311, %v256
  %v314 = vperm.slane %v312, 0
  %v315 = vperm.slane %v312, 1
  %v316 = vperm.slane %v312, 2
  %v320 = vpack.c.bf16 %v315, %v314
  %v321 = vpack.c.bf16 %v316, %v316
  %v323 = vshll.u32 %v320, 16
  %v325 = vrot.slane %v323, 6
  %v327 = vshll.u32 %v321, 16
  %v329 = vrot.slane %v327, 6
  %v332 = vld [vmem:[#allocation2 + $0x10] sm:$0x44]
  %v333 = vsel %vm192, %v325, %v332
  %334 = vst [vmem:[#allocation2 + $0x10] sm:$0x44] %v333
  %v335 = vld [vmem:[#allocation2 + $0x18] sm:$0x4]
  %v336 = vsel %vm189, %v329, %v335
  %337 = vst [vmem:[#allocation2 + $0x18] sm:$0x4] %v336
  %s338 = sadd.s32 %s252, 3
  %s339 = sld [smem:[#allocation5 + %s338]]
  %v340 = vstv %s339
  %v341 = vmul.f32 %v340, %v256
  %v343 = vperm.slane %v341, 0
  %v344 = vperm.slane %v341, 1
  %v345 = vperm.slane %v341, 2
  %v349 = vpack.c.bf16 %v344, %v343
  %v350 = vpack.c.bf16 %v345, %v345
  %v353 = vrot.slane %v349, 5
  %v354 = vrot.slane %v350, 5
  %v357 = vld [vmem:[#allocation2 + $0x10] sm:$0x88]
  %v358 = vsel %vm222, %v353, %v357
  %359 = vst [vmem:[#allocation2 + $0x10] sm:$0x88] %v358
  %v360 = vld [vmem:[#allocation2 + $0x18] sm:$0x8]
  %v361 = vsel %vm219, %v354, %v360
  %362 = vst [vmem:[#allocation2 + $0x18] sm:$0x8] %v361
  %v363 = vld [vmem:[#allocation2] sm:$0xff]
  %v364 = vld [vmem:[#allocation2 + $0x8] sm:$0xff]
  %v365 = vld [vmem:[#allocation2 + $0x10] sm:$0xff]
  %v366 = vld [vmem:[#allocation2 + $0x18] sm:$0xf]
  %v367 = vld [vmem:[#allocation2 + $0x4] sm:$0xff]
  %v368 = vld [vmem:[#allocation2 + $0xc] sm:$0xff]
  %v369 = vld [vmem:[#allocation2 + $0x14] sm:$0xff]
  %v370 = vld [vmem:[#allocation2 + $0x4] sm:$0xff]
  %v371 = vld [vmem:[#allocation2 + $0xc] sm:$0xff]
  %v372 = vld [vmem:[#allocation2 + $0x14] sm:$0xff]
  %v373 = vld [vmem:[#allocation2 + $0x1c] sm:$0xf]
  %v378 = vunpack.c.l.b16 %v363
  %v379 = vunpack.c.h.b16 %v363
  %v380 = vunpack.c.l.b16 %v364
  %v381 = vunpack.c.h.b16 %v364
  %v382 = vunpack.c.l.b16 %v365
  %v383 = vunpack.c.h.b16 %v365
  %v384 = vunpack.c.l.b16 %v366
  %v385 = vpack.c.b16 %v378, %v378
  %v386 = vpack.c.b16 %v379, %v379
  %v387 = vpack.c.b16 %v380, %v380
  %v388 = vpack.c.b16 %v381, %v381
  %v389 = vpack.c.b16 %v382, %v382
  %v390 = vpack.c.b16 %v383, %v383
  %v391 = vpack.c.b16 %v384, %v384
  %392 = vrot.lane.b32.xlu0 %v385, 127
  %v393 = vpop.permute.xlu0 %392
  %394 = vrot.lane.b32.xlu0 %v386, 127
  %v395 = vpop.permute.xlu0 %394
  %396 = vrot.lane.b32.xlu0 %v387, 127
  %v397 = vpop.permute.xlu0 %396
  %398 = vrot.lane.b32.xlu0 %v388, 127
  %v399 = vpop.permute.xlu0 %398
  %400 = vrot.lane.b32.xlu0 %v389, 127
  %v401 = vpop.permute.xlu0 %400
  %402 = vrot.lane.b32.xlu0 %v390, 127
  %v403 = vpop.permute.xlu0 %402
  %404 = vrot.lane.b32.xlu0 %v391, 127
  %v405 = vpop.permute.xlu0 %404
  %vm406 = vcmask 1039360
  %v407 = vsel %vm406, %v393, %v395
  %v408 = vsel %vm406, %v395, %v397
  %v409 = vsel %vm406, %v397, %v399
  %v410 = vsel %vm406, %v399, %v401
  %v411 = vsel %vm406, %v401, %v403
  %v412 = vsel %vm406, %v403, %v405
  %413 = vrot.lane.b32.xlu0 %v385, 126
  %v414 = vpop.permute.xlu0 %413
  %415 = vrot.lane.b32.xlu0 %v386, 126
  %v416 = vpop.permute.xlu0 %415
  %417 = vrot.lane.b32.xlu0 %v387, 126
  %v418 = vpop.permute.xlu0 %417
  %419 = vrot.lane.b32.xlu0 %v388, 126
  %v420 = vpop.permute.xlu0 %419
  %421 = vrot.lane.b32.xlu0 %v389, 126
  %v422 = vpop.permute.xlu0 %421
  %423 = vrot.lane.b32.xlu0 %v390, 126
  %v424 = vpop.permute.xlu0 %423
  %425 = vrot.lane.b32.xlu0 %v391, 126
  %v426 = vpop.permute.xlu0 %425
  %vm427 = vcmask 1031168
  %v428 = vsel %vm427, %v414, %v416
  %v429 = vsel %vm427, %v416, %v418
  %v430 = vsel %vm427, %v418, %v420
  %v431 = vsel %vm427, %v420, %v422
  %v432 = vsel %vm427, %v422, %v424
  %v433 = vsel %vm427, %v424, %v426
  %434 = vrot.lane.b32.xlu0 %v385, 110
  %v435 = vpop.permute.xlu0 %434
  %436 = vrot.lane.b32.xlu0 %v386, 110
  %v437 = vpop.permute.xlu0 %436
  %438 = vrot.lane.b32.xlu0 %v387, 110
  %v439 = vpop.permute.xlu0 %438
  %440 = vrot.lane.b32.xlu0 %v388, 110
  %v441 = vpop.permute.xlu0 %440
  %442 = vrot.lane.b32.xlu0 %v389, 110
  %v443 = vpop.permute.xlu0 %442
  %444 = vrot.lane.b32.xlu0 %v390, 110
  %v445 = vpop.permute.xlu0 %444
  %446 = vrot.lane.b32.xlu0 %v391, 110
  %v447 = vpop.permute.xlu0 %446
  %vm448 = vcmask 900096
  %v449 = vsel %vm448, %v435, %v437
  %v450 = vsel %vm448, %v437, %v439
  %v451 = vsel %vm448, %v439, %v441
  %v452 = vsel %vm448, %v441, %v443
  %v453 = vsel %vm448, %v443, %v445
  %v454 = vsel %vm448, %v445, %v447
  %v458 = vunpack.c.l.b16 %v367
  %v459 = vunpack.c.h.b16 %v367
  %v460 = vunpack.c.l.b16 %v368
  %v461 = vunpack.c.h.b16 %v368
  %v462 = vunpack.c.l.b16 %v369
  %v463 = vunpack.c.h.b16 %v369
  %v464 = vpack.c.b16 %v458, %v458
  %v465 = vpack.c.b16 %v459, %v459
  %v466 = vpack.c.b16 %v460, %v460
  %v467 = vpack.c.b16 %v461, %v461
  %v468 = vpack.c.b16 %v462, %v462
  %v469 = vpack.c.b16 %v463, %v463
  %470 = vrot.lane.b32.xlu0 %v464, 109
  %v471 = vpop.permute.xlu0 %470
  %472 = vrot.lane.b32.xlu0 %v465, 109
  %v473 = vpop.permute.xlu0 %472
  %474 = vrot.lane.b32.xlu0 %v466, 109
  %v475 = vpop.permute.xlu0 %474
  %476 = vrot.lane.b32.xlu0 %v467, 109
  %v477 = vpop.permute.xlu0 %476
  %478 = vrot.lane.b32.xlu0 %v468, 109
  %v479 = vpop.permute.xlu0 %478
  %480 = vrot.lane.b32.xlu0 %v469, 109
  %v481 = vpop.permute.xlu0 %480
  %vm482 = vcmask 891904
  %v483 = vsel %vm482, %v471, %v473
  %v484 = vsel %vm482, %v473, %v475
  %v485 = vsel %vm482, %v475, %v477
  %v486 = vsel %vm482, %v477, %v479
  %v487 = vsel %vm482, %v479, %v481
  %v492 = vunpack.c.l.b16 %v370
  %v493 = vunpack.c.h.b16 %v370
  %v494 = vunpack.c.l.b16 %v371
  %v495 = vunpack.c.h.b16 %v371
  %v496 = vunpack.c.l.b16 %v372
  %v497 = vunpack.c.h.b16 %v372
  %v498 = vunpack.c.l.b16 %v373
  %v499 = vpack.c.b16 %v492, %v492
  %v500 = vpack.c.b16 %v493, %v493
  %v501 = vpack.c.b16 %v494, %v494
  %v502 = vpack.c.b16 %v495, %v495
  %v503 = vpack.c.b16 %v496, %v496
  %v504 = vpack.c.b16 %v497, %v497
  %v505 = vpack.c.b16 %v498, %v498
  %506 = vrot.lane.b32.xlu0 %v499, 108
  %v507 = vpop.permute.xlu0 %506
  %508 = vrot.lane.b32.xlu0 %v500, 108
  %v509 = vpop.permute.xlu0 %508
  %510 = vrot.lane.b32.xlu0 %v501, 108
  %v511 = vpop.permute.xlu0 %510
  %512 = vrot.lane.b32.xlu0 %v502, 108
  %v513 = vpop.permute.xlu0 %512
  %514 = vrot.lane.b32.xlu0 %v503, 108
  %v515 = vpop.permute.xlu0 %514
  %516 = vrot.lane.b32.xlu0 %v504, 108
  %v517 = vpop.permute.xlu0 %516
  %518 = vrot.lane.b32.xlu0 %v505, 108
  %v519 = vpop.permute.xlu0 %518
  %vm520 = vcmask 883712
  %v521 = vsel %vm520, %v507, %v509
  %v522 = vsel %vm520, %v509, %v511
  %v523 = vsel %vm520, %v511, %v513
  %v524 = vsel %vm520, %v513, %v515
  %v525 = vsel %vm520, %v515, %v517
  %v526 = vsel %vm520, %v517, %v519
  %527 = vrot.lane.b32.xlu0 %v499, 92
  %v528 = vpop.permute.xlu0 %527
  %529 = vrot.lane.b32.xlu0 %v500, 92
  %v530 = vpop.permute.xlu0 %529
  %531 = vrot.lane.b32.xlu0 %v501, 92
  %v532 = vpop.permute.xlu0 %531
  %533 = vrot.lane.b32.xlu0 %v502, 92
  %v534 = vpop.permute.xlu0 %533
  %535 = vrot.lane.b32.xlu0 %v503, 92
  %v536 = vpop.permute.xlu0 %535
  %537 = vrot.lane.b32.xlu0 %v504, 92
  %v538 = vpop.permute.xlu0 %537
  %539 = vrot.lane.b32.xlu0 %v505, 92
  %v540 = vpop.permute.xlu0 %539
  %vm541 = vcmask 752640
  %v542 = vsel %vm541, %v528, %v530
  %v543 = vsel %vm541, %v530, %v532
  %v544 = vsel %vm541, %v532, %v534
  %v545 = vsel %vm541, %v534, %v536
  %v546 = vsel %vm541, %v536, %v538
  %v547 = vsel %vm541, %v538, %v540
  %548 = vrot.lane.b32.xlu0 %v499, 91
  %v549 = vpop.permute.xlu0 %548
  %550 = vrot.lane.b32.xlu0 %v500, 91
  %v551 = vpop.permute.xlu0 %550
  %552 = vrot.lane.b32.xlu0 %v501, 91
  %v553 = vpop.permute.xlu0 %552
  %554 = vrot.lane.b32.xlu0 %v502, 91
  %v555 = vpop.permute.xlu0 %554
  %556 = vrot.lane.b32.xlu0 %v503, 91
  %v557 = vpop.permute.xlu0 %556
  %558 = vrot.lane.b32.xlu0 %v504, 91
  %v559 = vpop.permute.xlu0 %558
  %560 = vrot.lane.b32.xlu0 %v505, 91
  %v561 = vpop.permute.xlu0 %560
  %vm562 = vcmask 744448
  %v563 = vsel %vm562, %v549, %v551
  %v564 = vsel %vm562, %v551, %v553
  %v565 = vsel %vm562, %v553, %v555
  %v566 = vsel %vm562, %v555, %v557
  %v567 = vsel %vm562, %v557, %v559
  %v568 = vsel %vm562, %v559, %v561
  %569 = vrot.lane.b32.xlu0 %v499, 90
  %v570 = vpop.permute.xlu0 %569
  %571 = vrot.lane.b32.xlu0 %v500, 90
  %v572 = vpop.permute.xlu0 %571
  %573 = vrot.lane.b32.xlu0 %v501, 90
  %v574 = vpop.permute.xlu0 %573
  %575 = vrot.lane.b32.xlu0 %v502, 90
  %v576 = vpop.permute.xlu0 %575
  %577 = vrot.lane.b32.xlu0 %v503, 90
  %v578 = vpop.permute.xlu0 %577
  %579 = vrot.lane.b32.xlu0 %v504, 90
  %v580 = vpop.permute.xlu0 %579
  %581 = vrot.lane.b32.xlu0 %v505, 90
  %v582 = vpop.permute.xlu0 %581
  %vm583 = vcmask 736256
  %v584 = vsel %vm583, %v570, %v572
  %v585 = vsel %vm583, %v572, %v574
  %v586 = vsel %vm583, %v574, %v576
  %v587 = vsel %vm583, %v576, %v578
  %v588 = vsel %vm583, %v578, %v580
  %v589 = vsel %vm583, %v580, %v582
  %vm590 = vcmask 1043456
  %v593 = vsel %vm590, %v385, %v407
  %v596 = vsel %vm590, %v386, %v408
  %v599 = vsel %vm590, %v387, %v409
  %v602 = vsel %vm590, %v388, %v410
  %v605 = vsel %vm590, %v389, %v411
  %v608 = vsel %vm590, %v390, %v412
  %v611 = vsel %vm590, %v391, %v405
  %v614 = vsel %vm590, %v428, %v449
  %v617 = vsel %vm590, %v429, %v450
  %v620 = vsel %vm590, %v430, %v451
  %v623 = vsel %vm590, %v431, %v452
  %v626 = vsel %vm590, %v432, %v453
  %v629 = vsel %vm590, %v433, %v454
  %v632 = vsel %vm590, %v426, %v447
  %v635 = vsel %vm590, %v471, %v507
  %v638 = vsel %vm590, %v483, %v521
  %v641 = vsel %vm590, %v484, %v522
  %v644 = vsel %vm590, %v485, %v523
  %v647 = vsel %vm590, %v486, %v524
  %v650 = vsel %vm590, %v487, %v525
  %v653 = vsel %vm590, %v481, %v526
  %v656 = vsel %vm590, %v528, %v549
  %v659 = vsel %vm590, %v542, %v563
  %v662 = vsel %vm590, %v543, %v564
  %v665 = vsel %vm590, %v544, %v565
  %v668 = vsel %vm590, %v545, %v566
  %v671 = vsel %vm590, %v546, %v567
  %v674 = vsel %vm590, %v547, %v568
  %v675 = vld [vmem:[%s3] sm:$0xf]
  %v676 = vld [vmem:[%s3 + $0x4] sm:$0xf]
  %v677 = vld [vmem:[%s3 + $0x8] sm:$0xf]
  %v678 = vld [vmem:[%s3 + $0xc] sm:$0xf]
  %v679 = vld [vmem:[%s3 + $0x10] sm:$0xf]
  %v680 = vld [vmem:[%s3 + $0x14] sm:$0xf]
  %v681 = vld [vmem:[%s3 + $0x18] sm:$0xf]
  %v682 = vld [vmem:[%s3 + $0x1c] sm:$0xf]
  %v683 = vld [vmem:[%s4] sm:$0xff]
  %v684 = vld [vmem:[%s4 + $0x8] sm:$0xff]
  %v685 = vld [vmem:[%s4 + $0x10] sm:$0xff]
  %v686 = vld [vmem:[%s4 + $0x18] sm:$0xff]
  %v687 = vld [vmem:[%s4 + $0x20] sm:$0xff]
  %v688 = vld [vmem:[%s4 + $0x28] sm:$0xff]
  %v689 = vld [vmem:[%s4 + $0x30] sm:$0xff]
  %v690 = vld [vmem:[%s4 + $0x38] sm:$0xff]
  %692 = vset.pattern.permute.xlu0 0
  %693 = vperm.xlu0 %692, %v683
  %v694 = vpop.permute.xlu0 %693
  %697 = vset.pattern.permute.xlu0 0
  %698 = vperm.xlu0 %697, %v684
  %v699 = vpop.permute.xlu0 %698
  %702 = vset.pattern.permute.xlu0 0
  %703 = vperm.xlu0 %702, %v685
  %v704 = vpop.permute.xlu0 %703
  %707 = vset.pattern.permute.xlu0 0
  %708 = vperm.xlu0 %707, %v686
  %v709 = vpop.permute.xlu0 %708
  %712 = vset.pattern.permute.xlu0 0
  %713 = vperm.xlu0 %712, %v687
  %v714 = vpop.permute.xlu0 %713
  %717 = vset.pattern.permute.xlu0 0
  %718 = vperm.xlu0 %717, %v688
  %v719 = vpop.permute.xlu0 %718
  %722 = vset.pattern.permute.xlu0 0
  %723 = vperm.xlu0 %722, %v689
  %v724 = vpop.permute.xlu0 %723
  %727 = vset.pattern.permute.xlu0 0
  %728 = vperm.xlu0 %727, %v690
  %v729 = vpop.permute.xlu0 %728
  %v739 = vunpack.c.l.b16 %v675
  %v740 = vunpack.c.l.b16 %v676
  %v741 = vunpack.c.l.b16 %v677
  %v742 = vunpack.c.l.b16 %v678
  %v743 = vunpack.c.l.b16 %v679
  %v744 = vunpack.c.l.b16 %v680
  %v745 = vunpack.c.l.b16 %v681
  %v746 = vunpack.c.l.b16 %v682
  %v747 = vpack.c.b16 %v740, %v739
  %v748 = vpack.c.b16 %v742, %v741
  %v749 = vpack.c.b16 %v744, %v743
  %v750 = vpack.c.b16 %v746, %v745
  %779 = vrot.lane.b32.xlu0 %v593, 19
  %v780 = vpop.permute.xlu0 %779
  %781 = vrot.lane.b32.xlu0 %v596, 19
  %v782 = vpop.permute.xlu0 %781
  %783 = vrot.lane.b32.xlu0 %v599, 19
  %v784 = vpop.permute.xlu0 %783
  %785 = vrot.lane.b32.xlu0 %v602, 19
  %v786 = vpop.permute.xlu0 %785
  %787 = vrot.lane.b32.xlu0 %v605, 19
  %v788 = vpop.permute.xlu0 %787
  %789 = vrot.lane.b32.xlu0 %v608, 19
  %v790 = vpop.permute.xlu0 %789
  %791 = vrot.lane.b32.xlu0 %v611, 19
  %v792 = vpop.permute.xlu0 %791
  %793 = vrot.lane.b32.xlu0 %v614, 19
  %v794 = vpop.permute.xlu0 %793
  %795 = vrot.lane.b32.xlu0 %v617, 19
  %v796 = vpop.permute.xlu0 %795
  %797 = vrot.lane.b32.xlu0 %v620, 19
  %v798 = vpop.permute.xlu0 %797
  %799 = vrot.lane.b32.xlu0 %v623, 19
  %v800 = vpop.permute.xlu0 %799
  %801 = vrot.lane.b32.xlu0 %v626, 19
  %v802 = vpop.permute.xlu0 %801
  %803 = vrot.lane.b32.xlu0 %v629, 19
  %v804 = vpop.permute.xlu0 %803
  %805 = vrot.lane.b32.xlu0 %v632, 19
  %v806 = vpop.permute.xlu0 %805
  %807 = vrot.lane.b32.xlu0 %v635, 19
  %v808 = vpop.permute.xlu0 %807
  %809 = vrot.lane.b32.xlu0 %v638, 19
  %v810 = vpop.permute.xlu0 %809
  %811 = vrot.lane.b32.xlu0 %v641, 19
  %v812 = vpop.permute.xlu0 %811
  %813 = vrot.lane.b32.xlu0 %v644, 19
  %v814 = vpop.permute.xlu0 %813
  %815 = vrot.lane.b32.xlu0 %v647, 19
  %v816 = vpop.permute.xlu0 %815
  %817 = vrot.lane.b32.xlu0 %v650, 19
  %v818 = vpop.permute.xlu0 %817
  %819 = vrot.lane.b32.xlu0 %v653, 19
  %v820 = vpop.permute.xlu0 %819
  %821 = vrot.lane.b32.xlu0 %v656, 19
  %v822 = vpop.permute.xlu0 %821
  %823 = vrot.lane.b32.xlu0 %v659, 19
  %v824 = vpop.permute.xlu0 %823
  %825 = vrot.lane.b32.xlu0 %v662, 19
  %v826 = vpop.permute.xlu0 %825
  %827 = vrot.lane.b32.xlu0 %v665, 19
  %v828 = vpop.permute.xlu0 %827
  %829 = vrot.lane.b32.xlu0 %v668, 19
  %v830 = vpop.permute.xlu0 %829
  %831 = vrot.lane.b32.xlu0 %v671, 19
  %v832 = vpop.permute.xlu0 %831
  %833 = vrot.lane.b32.xlu0 %v674, 19
  %v834 = vpop.permute.xlu0 %833
  %835 = vrot.lane.b32.xlu0 %v570, 19
  %v836 = vpop.permute.xlu0 %835
  %837 = vrot.lane.b32.xlu0 %v584, 19
  %v838 = vpop.permute.xlu0 %837
  %839 = vrot.lane.b32.xlu0 %v585, 19
  %v840 = vpop.permute.xlu0 %839
  %841 = vrot.lane.b32.xlu0 %v586, 19
  %v842 = vpop.permute.xlu0 %841
  %843 = vrot.lane.b32.xlu0 %v587, 19
  %v844 = vpop.permute.xlu0 %843
  %845 = vrot.lane.b32.xlu0 %v588, 19
  %v846 = vpop.permute.xlu0 %845
  %847 = vrot.lane.b32.xlu0 %v589, 19
  %v848 = vpop.permute.xlu0 %847
  %vm849 = vcmask 154624
  %v850 = vsel %vm849, %v780, %v782
  %v851 = vsel %vm849, %v782, %v784
  %v852 = vsel %vm849, %v784, %v786
  %v853 = vsel %vm849, %v786, %v788
  %v854 = vsel %vm849, %v788, %v790
  %v855 = vsel %vm849, %v790, %v792
  %v856 = vsel %vm849, %v794, %v796
  %v857 = vsel %vm849, %v796, %v798
  %v858 = vsel %vm849, %v798, %v800
  %v859 = vsel %vm849, %v800, %v802
  %v860 = vsel %vm849, %v802, %v804
  %v861 = vsel %vm849, %v804, %v806
  %v862 = vsel %vm849, %v808, %v810
  %v863 = vsel %vm849, %v810, %v812
  %v864 = vsel %vm849, %v812, %v814
  %v865 = vsel %vm849, %v814, %v816
  %v866 = vsel %vm849, %v816, %v818
  %v867 = vsel %vm849, %v818, %v820
  %v868 = vsel %vm849, %v822, %v824
  %v869 = vsel %vm849, %v824, %v826
  %v870 = vsel %vm849, %v826, %v828
  %v871 = vsel %vm849, %v828, %v830
  %v872 = vsel %vm849, %v830, %v832
  %v873 = vsel %vm849, %v832, %v834
  %v874 = vsel %vm849, %v836, %v838
  %v875 = vsel %vm849, %v838, %v840
  %v876 = vsel %vm849, %v840, %v842
  %v877 = vsel %vm849, %v842, %v844
  %v878 = vsel %vm849, %v844, %v846
  %v879 = vsel %vm849, %v846, %v848
  %vm904 = vcmask 588800
  %v906 = vsel %vm904, %v747, 0
  %v909 = vsel %vm904, %v748, 0
  %v912 = vsel %vm904, %v749, 0
  %v915 = vsel %vm904, %v750, 0
  %v918 = vsel %vm590, %v874, 0
  %v921 = vsel %vm590, %v875, 0
  %v924 = vsel %vm590, %v876, 0
  %v927 = vsel %vm590, %v877, 0
  %v930 = vsel %vm590, %v878, 0
  %v933 = vsel %vm590, %v879, 0
  %935 = vmatpush.bf16.msra.mxu0 0
  %936 = vmatpush.bf16.msra.mxu0 0
  %937 = vmatpush.bf16.msra.mxu0 0
  %938 = vmatpush.bf16.msra.mxu0 %v918
  %939 = vmatpush.bf16.msra.mxu0 %v868
  %940 = vmatpush.bf16.msra.mxu0 %v862
  %941 = vmatpush.bf16.msra.mxu0 %v856
  %942 = vmatpush.bf16.msra.mxu0 %v850
  %943 = vmatmul.bf16.gmra.mxu0 %v906
  %v944 = vpop.f32.mrf.mxu0
  %v945 = vadd.f32 %v694, %v944
  %v946 = vpop.f32.mrf.mxu0
  %v947 = vadd.f32 %v699, %v946
  %948 = vmatmul.bf16.gmra.mxu0 %v909
  %v949 = vpop.f32.mrf.mxu0
  %v950 = vadd.f32 %v704, %v949
  %v951 = vpop.f32.mrf.mxu0
  %v952 = vadd.f32 %v709, %v951
  %953 = vmatmul.bf16.gmra.mxu0 %v912
  %v954 = vpop.f32.mrf.mxu0
  %v955 = vadd.f32 %v714, %v954
  %v956 = vpop.f32.mrf.mxu0
  %v957 = vadd.f32 %v719, %v956
  %958 = vmatmul.bf16.gmra.mxu0 %v915
  %v959 = vpop.f32.mrf.mxu0
  %v960 = vadd.f32 %v724, %v959
  %v961 = vpop.f32.mrf.mxu0
  %v962 = vadd.f32 %v729, %v961
  %963 = vdwg.mxu0
  %964 = vmatpush.bf16.msra.mxu0 0
  %965 = vmatpush.bf16.msra.mxu0 0
  %966 = vmatpush.bf16.msra.mxu0 0
  %967 = vmatpush.bf16.msra.mxu0 %v921
  %968 = vmatpush.bf16.msra.mxu0 %v869
  %969 = vmatpush.bf16.msra.mxu0 %v863
  %970 = vmatpush.bf16.msra.mxu0 %v857
  %971 = vmatpush.bf16.msra.mxu0 %v851
  %972 = vmatmul.bf16.gmra.mxu0 %v906
  %v973 = vpop.f32.mrf.mxu0
  %v974 = vadd.f32 %v694, %v973
  %v975 = vpop.f32.mrf.mxu0
  %v976 = vadd.f32 %v699, %v975
  %977 = vmatmul.bf16.gmra.mxu0 %v909
  %v978 = vpop.f32.mrf.mxu0
  %v979 = vadd.f32 %v704, %v978
  %v980 = vpop.f32.mrf.mxu0
  %v981 = vadd.f32 %v709, %v980
  %982 = vmatmul.bf16.gmra.mxu0 %v912
  %v983 = vpop.f32.mrf.mxu0
  %v984 = vadd.f32 %v714, %v983
  %v985 = vpop.f32.mrf.mxu0
  %v986 = vadd.f32 %v719, %v985
  %987 = vmatmul.bf16.gmra.mxu0 %v915
  %v988 = vpop.f32.mrf.mxu0
  %v989 = vadd.f32 %v724, %v988
  %v990 = vpop.f32.mrf.mxu0
  %v991 = vadd.f32 %v729, %v990
  %992 = vdwg.mxu0
  %993 = vmatpush.bf16.msra.mxu0 0
  %994 = vmatpush.bf16.msra.mxu0 0
  %995 = vmatpush.bf16.msra.mxu0 0
  %996 = vmatpush.bf16.msra.mxu0 %v924
  %997 = vmatpush.bf16.msra.mxu0 %v870
  %998 = vmatpush.bf16.msra.mxu0 %v864
  %999 = vmatpush.bf16.msra.mxu0 %v858
  %1000 = vmatpush.bf16.msra.mxu0 %v852
  %1001 = vmatmul.bf16.gmra.mxu0 %v906
  %v1002 = vpop.f32.mrf.mxu0
  %v1003 = vadd.f32 %v694, %v1002
  %v1004 = vpop.f32.mrf.mxu0
  %v1005 = vadd.f32 %v699, %v1004
  %1006 = vmatmul.bf16.gmra.mxu0 %v909
  %v1007 = vpop.f32.mrf.mxu0
  %v1008 = vadd.f32 %v704, %v1007
  %v1009 = vpop.f32.mrf.mxu0
  %v1010 = vadd.f32 %v709, %v1009
  %1011 = vmatmul.bf16.gmra.mxu0 %v912
  %v1012 = vpop.f32.mrf.mxu0
  %v1013 = vadd.f32 %v714, %v1012
  %v1014 = vpop.f32.mrf.mxu0
  %v1015 = vadd.f32 %v719, %v1014
  %1016 = vmatmul.bf16.gmra.mxu0 %v915
  %v1017 = vpop.f32.mrf.mxu0
  %v1018 = vadd.f32 %v724, %v1017
  %v1019 = vpop.f32.mrf.mxu0
  %v1020 = vadd.f32 %v729, %v1019
  %1021 = vdwg.mxu0
  %1022 = vmatpush.bf16.msra.mxu0 0
  %1023 = vmatpush.bf16.msra.mxu0 0
  %1024 = vmatpush.bf16.msra.mxu0 0
  %1025 = vmatpush.bf16.msra.mxu0 %v927
  %1026 = vmatpush.bf16.msra.mxu0 %v871
  %1027 = vmatpush.bf16.msra.mxu0 %v865
  %1028 = vmatpush.bf16.msra.mxu0 %v859
  %1029 = vmatpush.bf16.msra.mxu0 %v853
  %1030 = vmatmul.bf16.gmra.mxu0 %v906
  %v1031 = vpop.f32.mrf.mxu0
  %v1032 = vadd.f32 %v694, %v1031
  %v1033 = vpop.f32.mrf.mxu0
  %v1034 = vadd.f32 %v699, %v1033
  %1035 = vmatmul.bf16.gmra.mxu0 %v909
  %v1036 = vpop.f32.mrf.mxu0
  %v1037 = vadd.f32 %v704, %v1036
  %v1038 = vpop.f32.mrf.mxu0
  %v1039 = vadd.f32 %v709, %v1038
  %1040 = vmatmul.bf16.gmra.mxu0 %v912
  %v1041 = vpop.f32.mrf.mxu0
  %v1042 = vadd.f32 %v714, %v1041
  %v1043 = vpop.f32.mrf.mxu0
  %v1044 = vadd.f32 %v719, %v1043
  %1045 = vmatmul.bf16.gmra.mxu0 %v915
  %v1046 = vpop.f32.mrf.mxu0
  %v1047 = vadd.f32 %v724, %v1046
  %v1048 = vpop.f32.mrf.mxu0
  %v1049 = vadd.f32 %v729, %v1048
  %1050 = vdwg.mxu0
  %1051 = vmatpush.bf16.msra.mxu0 0
  %1052 = vmatpush.bf16.msra.mxu0 0
  %1053 = vmatpush.bf16.msra.mxu0 0
  %1054 = vmatpush.bf16.msra.mxu0 %v930
  %1055 = vmatpush.bf16.msra.mxu0 %v872
  %1056 = vmatpush.bf16.msra.mxu0 %v866
  %1057 = vmatpush.bf16.msra.mxu0 %v860
  %1058 = vmatpush.bf16.msra.mxu0 %v854
  %1059 = vmatmul.bf16.gmra.mxu0 %v906
  %v1060 = vpop.f32.mrf.mxu0
  %v1061 = vadd.f32 %v694, %v1060
  %v1062 = vpop.f32.mrf.mxu0
  %v1063 = vadd.f32 %v699, %v1062
  %1064 = vmatmul.bf16.gmra.mxu0 %v909
  %v1065 = vpop.f32.mrf.mxu0
  %v1066 = vadd.f32 %v704, %v1065
  %v1067 = vpop.f32.mrf.mxu0
  %v1068 = vadd.f32 %v709, %v1067
  %1069 = vmatmul.bf16.gmra.mxu0 %v912
  %v1070 = vpop.f32.mrf.mxu0
  %v1071 = vadd.f32 %v714, %v1070
  %v1072 = vpop.f32.mrf.mxu0
  %v1073 = vadd.f32 %v719, %v1072
  %1074 = vmatmul.bf16.gmra.mxu0 %v915
  %v1075 = vpop.f32.mrf.mxu0
  %v1076 = vadd.f32 %v724, %v1075
  %v1077 = vpop.f32.mrf.mxu0
  %v1078 = vadd.f32 %v729, %v1077
  %1079 = vdwg.mxu0
  %1080 = vmatpush.bf16.msra.mxu0 0
  %1081 = vmatpush.bf16.msra.mxu0 0
  %1082 = vmatpush.bf16.msra.mxu0 0
  %1083 = vmatpush.bf16.msra.mxu0 %v933
  %1084 = vmatpush.bf16.msra.mxu0 %v873
  %1085 = vmatpush.bf16.msra.mxu0 %v867
  %1086 = vmatpush.bf16.msra.mxu0 %v861
  %1087 = vmatpush.bf16.msra.mxu0 %v855
  %1088 = vmatmul.bf16.gmra.mxu0 %v906
  %v1089 = vpop.f32.mrf.mxu0
  %v1090 = vadd.f32 %v694, %v1089
  %v1091 = vpop.f32.mrf.mxu0
  %v1092 = vadd.f32 %v699, %v1091
  %1093 = vmatmul.bf16.gmra.mxu0 %v909
  %v1094 = vpop.f32.mrf.mxu0
  %v1095 = vadd.f32 %v704, %v1094
  %v1096 = vpop.f32.mrf.mxu0
  %v1097 = vadd.f32 %v709, %v1096
  %1098 = vmatmul.bf16.gmra.mxu0 %v912
  %v1099 = vpop.f32.mrf.mxu0
  %v1100 = vadd.f32 %v714, %v1099
  %v1101 = vpop.f32.mrf.mxu0
  %v1102 = vadd.f32 %v719, %v1101
  %1103 = vmatmul.bf16.gmra.mxu0 %v915
  %v1104 = vpop.f32.mrf.mxu0
  %v1105 = vadd.f32 %v724, %v1104
  %v1106 = vpop.f32.mrf.mxu0
  %v1107 = vadd.f32 %v729, %v1106
  %1108 = vdwg.mxu0
  %v1109 = vmax.f32 %v945, 0.0
  %v1110 = vmax.f32 %v974, 0.0
  %v1111 = vmax.f32 %v1003, 0.0
  %v1112 = vmax.f32 %v1032, 0.0
  %v1113 = vmax.f32 %v1061, 0.0
  %v1114 = vmax.f32 %v1090, 0.0
  %v1115 = vmax.f32 %v947, 0.0
  %v1116 = vmax.f32 %v976, 0.0
  %v1117 = vmax.f32 %v1005, 0.0
  %v1118 = vmax.f32 %v1034, 0.0
  %v1119 = vmax.f32 %v1063, 0.0
  %v1120 = vmax.f32 %v1092, 0.0
  %v1121 = vmax.f32 %v950, 0.0
  %v1122 = vmax.f32 %v979, 0.0
  %v1123 = vmax.f32 %v1008, 0.0
  %v1124 = vmax.f32 %v1037, 0.0
  %v1125 = vmax.f32 %v1066, 0.0
  %v1126 = vmax.f32 %v1095, 0.0
  %v1127 = vmax.f32 %v952, 0.0
  %v1128 = vmax.f32 %v981, 0.0
  %v1129 = vmax.f32 %v1010, 0.0
  %v1130 = vmax.f32 %v1039, 0.0
  %v1131 = vmax.f32 %v1068, 0.0
  %v1132 = vmax.f32 %v1097, 0.0
  %v1133 = vmax.f32 %v955, 0.0
  %v1134 = vmax.f32 %v984, 0.0
  %v1135 = vmax.f32 %v1013, 0.0
  %v1136 = vmax.f32 %v1042, 0.0
  %v1137 = vmax.f32 %v1071, 0.0
  %v1138 = vmax.f32 %v1100, 0.0
  %v1139 = vmax.f32 %v957, 0.0
  %v1140 = vmax.f32 %v986, 0.0
  %v1141 = vmax.f32 %v1015, 0.0
  %v1142 = vmax.f32 %v1044, 0.0
  %v1143 = vmax.f32 %v1073, 0.0
  %v1144 = vmax.f32 %v1102, 0.0
  %v1145 = vmax.f32 %v960, 0.0
  %v1146 = vmax.f32 %v989, 0.0
  %v1147 = vmax.f32 %v1018, 0.0
  %v1148 = vmax.f32 %v1047, 0.0
  %v1149 = vmax.f32 %v1076, 0.0
  %v1150 = vmax.f32 %v1105, 0.0
  %v1151 = vmax.f32 %v962, 0.0
  %v1152 = vmax.f32 %v991, 0.0
  %v1153 = vmax.f32 %v1020, 0.0
  %v1154 = vmax.f32 %v1049, 0.0
  %v1155 = vmax.f32 %v1078, 0.0
  %v1156 = vmax.f32 %v1107, 0.0
  %v1157 = vperm.slane %v33, 0
  %v1158 = vperm.slane %v33, 1
  %v1159 = vperm.slane %v33, 2
  %v1160 = vperm.slane %v33, 3
  %v1161 = vperm.slane %v33, 4
  %v1162 = vperm.slane %v33, 5
  %v1169 = vmul.f32 %v1109, %v1157
  %v1170 = vmul.f32 %v1110, %v1158
  %v1171 = vmul.f32 %v1111, %v1159
  %v1172 = vmul.f32 %v1112, %v1160
  %v1173 = vmul.f32 %v1113, %v1161
  %v1174 = vmul.f32 %v1114, %v1162
  %v1175 = vmul.f32 %v1115, %v1157
  %v1176 = vmul.f32 %v1116, %v1158
  %v1177 = vmul.f32 %v1117, %v1159
  %v1178 = vmul.f32 %v1118, %v1160
  %v1179 = vmul.f32 %v1119, %v1161
  %v1180 = vmul.f32 %v1120, %v1162
  %v1181 = vmul.f32 %v1121, %v1157
  %v1182 = vmul.f32 %v1122, %v1158
  %v1183 = vmul.f32 %v1123, %v1159
  %v1184 = vmul.f32 %v1124, %v1160
  %v1185 = vmul.f32 %v1125, %v1161
  %v1186 = vmul.f32 %v1126, %v1162
  %v1187 = vmul.f32 %v1127, %v1157
  %v1188 = vmul.f32 %v1128, %v1158
  %v1189 = vmul.f32 %v1129, %v1159
  %v1190 = vmul.f32 %v1130, %v1160
  %v1191 = vmul.f32 %v1131, %v1161
  %v1192 = vmul.f32 %v1132, %v1162
  %v1193 = vmul.f32 %v1133, %v1157
  %v1194 = vmul.f32 %v1134, %v1158
  %v1195 = vmul.f32 %v1135, %v1159
  %v1196 = vmul.f32 %v1136, %v1160
  %v1197 = vmul.f32 %v1137, %v1161
  %v1198 = vmul.f32 %v1138, %v1162
  %v1199 = vmul.f32 %v1139, %v1157
  %v1200 = vmul.f32 %v1140, %v1158
  %v1201 = vmul.f32 %v1141, %v1159
  %v1202 = vmul.f32 %v1142, %v1160
  %v1203 = vmul.f32 %v1143, %v1161
  %v1204 = vmul.f32 %v1144, %v1162
  %v1205 = vmul.f32 %v1145, %v1157
  %v1206 = vmul.f32 %v1146, %v1158
  %v1207 = vmul.f32 %v1147, %v1159
  %v1208 = vmul.f32 %v1148, %v1160
  %v1209 = vmul.f32 %v1149, %v1161
  %v1210 = vmul.f32 %v1150, %v1162
  %v1211 = vmul.f32 %v1151, %v1157
  %v1212 = vmul.f32 %v1152, %v1158
  %v1213 = vmul.f32 %v1153, %v1159
  %v1214 = vmul.f32 %v1154, %v1160
  %v1215 = vmul.f32 %v1155, %v1161
  %v1216 = vmul.f32 %v1156, %v1162
  %v1217 = vpack.c.bf16 %v1170, %v1169
  %v1218 = vpack.c.bf16 %v1172, %v1171
  %v1219 = vpack.c.bf16 %v1174, %v1173
  %v1220 = vpack.c.bf16 %v1176, %v1175
  %v1221 = vpack.c.bf16 %v1178, %v1177
  %v1222 = vpack.c.bf16 %v1180, %v1179
  %v1223 = vpack.c.bf16 %v1182, %v1181
  %v1224 = vpack.c.bf16 %v1184, %v1183
  %v1225 = vpack.c.bf16 %v1186, %v1185
  %v1226 = vpack.c.bf16 %v1188, %v1187
  %v1227 = vpack.c.bf16 %v1190, %v1189
  %v1228 = vpack.c.bf16 %v1192, %v1191
  %v1229 = vpack.c.bf16 %v1194, %v1193
  %v1230 = vpack.c.bf16 %v1196, %v1195
  %v1231 = vpack.c.bf16 %v1198, %v1197
  %v1232 = vpack.c.bf16 %v1200, %v1199
  %v1233 = vpack.c.bf16 %v1202, %v1201
  %v1234 = vpack.c.bf16 %v1204, %v1203
  %v1235 = vpack.c.bf16 %v1206, %v1205
  %v1236 = vpack.c.bf16 %v1208, %v1207
  %v1237 = vpack.c.bf16 %v1210, %v1209
  %v1238 = vpack.c.bf16 %v1212, %v1211
  %v1239 = vpack.c.bf16 %v1214, %v1213
  %v1240 = vpack.c.bf16 %v1216, %v1215
  %1241 = vst [vmem:[#allocation3 + $0x4] sm:$0xff] %v1217
  %1242 = vst [vmem:[#allocation3 + $0xc] sm:$0xff] %v1218
  %1243 = vst [vmem:[#allocation3 + $0x14] sm:$0xff] %v1219
  %1244 = vst [vmem:[#allocation3 + $0x24] sm:$0xff] %v1220
  %1245 = vst [vmem:[#allocation3 + $0x2c] sm:$0xff] %v1221
  %1246 = vst [vmem:[#allocation3 + $0x34] sm:$0xff] %v1222
  %1247 = vst [vmem:[#allocation3 + $0x44] sm:$0xff] %v1223
  %1248 = vst [vmem:[#allocation3 + $0x4c] sm:$0xff] %v1224
  %1249 = vst [vmem:[#allocation3 + $0x54] sm:$0xff] %v1225
  %1250 = vst [vmem:[#allocation3 + $0x64] sm:$0xff] %v1226
  %1251 = vst [vmem:[#allocation3 + $0x6c] sm:$0xff] %v1227
  %1252 = vst [vmem:[#allocation3 + $0x74] sm:$0xff] %v1228
  %1253 = vst [vmem:[#allocation3 + $0x84] sm:$0xff] %v1229
  %1254 = vst [vmem:[#allocation3 + $0x8c] sm:$0xff] %v1230
  %1255 = vst [vmem:[#allocation3 + $0x94] sm:$0xff] %v1231
  %1256 = vst [vmem:[#allocation3 + $0xa4] sm:$0xff] %v1232
  %1257 = vst [vmem:[#allocation3 + $0xac] sm:$0xff] %v1233
  %1258 = vst [vmem:[#allocation3 + $0xb4] sm:$0xff] %v1234
  %1259 = vst [vmem:[#allocation3 + $0xc4] sm:$0xff] %v1235
  %1260 = vst [vmem:[#allocation3 + $0xcc] sm:$0xff] %v1236
  %1261 = vst [vmem:[#allocation3 + $0xd4] sm:$0xff] %v1237
  %1262 = vst [vmem:[#allocation3 + $0xe4] sm:$0xff] %v1238
  %1263 = vst [vmem:[#allocation3 + $0xec] sm:$0xff] %v1239
  %1264 = vst [vmem:[#allocation3 + $0xf4] sm:$0xff] %v1240
  %v1265 = vld [vmem:[#allocation3] sm:$0xff]
  %v1266 = vld [vmem:[#allocation3 + $0x8] sm:$0xff]
  %v1267 = vld [vmem:[#allocation3 + $0x10] sm:$0xff]
  %v1268 = vld [vmem:[#allocation3 + $0x18] sm:$0xf]
  %v1269 = vld [vmem:[#allocation3 + $0x20] sm:$0xff]
  %v1270 = vld [vmem:[#allocation3 + $0x28] sm:$0xff]
  %v1271 = vld [vmem:[#allocation3 + $0x30] sm:$0xff]
  %v1272 = vld [vmem:[#allocation3 + $0x38] sm:$0xf]
  %v1273 = vld [vmem:[#allocation3 + $0x40] sm:$0xff]
  %v1274 = vld [vmem:[#allocation3 + $0x48] sm:$0xff]
  %v1275 = vld [vmem:[#allocation3 + $0x50] sm:$0xff]
  %v1276 = vld [vmem:[#allocation3 + $0x58] sm:$0xf]
  %v1277 = vld [vmem:[#allocation3 + $0x60] sm:$0xff]
  %v1278 = vld [vmem:[#allocation3 + $0x68] sm:$0xff]
  %v1279 = vld [vmem:[#allocation3 + $0x70] sm:$0xff]
  %v1280 = vld [vmem:[#allocation3 + $0x78] sm:$0xf]
  %v1281 = vld [vmem:[#allocation3 + $0x80] sm:$0xff]
  %v1282 = vld [vmem:[#allocation3 + $0x88] sm:$0xff]
  %v1283 = vld [vmem:[#allocation3 + $0x90] sm:$0xff]
  %v1284 = vld [vmem:[#allocation3 + $0x98] sm:$0xf]
  %v1285 = vld [vmem:[#allocation3 + $0xa0] sm:$0xff]
  %v1286 = vld [vmem:[#allocation3 + $0xa8] sm:$0xff]
  %v1287 = vld [vmem:[#allocation3 + $0xb0] sm:$0xff]
  %v1288 = vld [vmem:[#allocation3 + $0xb8] sm:$0xf]
  %v1289 = vld [vmem:[#allocation3 + $0xc0] sm:$0xff]
  %v1290 = vld [vmem:[#allocation3 + $0xc8] sm:$0xff]
  %v1291 = vld [vmem:[#allocation3 + $0xd0] sm:$0xff]
  %v1292 = vld [vmem:[#allocation3 + $0xd8] sm:$0xf]
  %v1293 = vld [vmem:[#allocation3 + $0xe0] sm:$0xff]
  %v1294 = vld [vmem:[#allocation3 + $0xe8] sm:$0xff]
  %v1295 = vld [vmem:[#allocation3 + $0xf0] sm:$0xff]
  %v1296 = vld [vmem:[#allocation3 + $0xf8] sm:$0xf]
  %v1297 = vld [vmem:[#allocation3 + $0x4] sm:$0xff]
  %v1298 = vld [vmem:[#allocation3 + $0xc] sm:$0xff]
  %v1299 = vld [vmem:[#allocation3 + $0x14] sm:$0xff]
  %v1300 = vld [vmem:[#allocation3 + $0x24] sm:$0xff]
  %v1301 = vld [vmem:[#allocation3 + $0x2c] sm:$0xff]
  %v1302 = vld [vmem:[#allocation3 + $0x34] sm:$0xff]
  %v1303 = vld [vmem:[#allocation3 + $0x44] sm:$0xff]
  %v1304 = vld [vmem:[#allocation3 + $0x4c] sm:$0xff]
  %v1305 = vld [vmem:[#allocation3 + $0x54] sm:$0xff]
  %v1306 = vld [vmem:[#allocation3 + $0x64] sm:$0xff]
  %v1307 = vld [vmem:[#allocation3 + $0x6c] sm:$0xff]
  %v1308 = vld [vmem:[#allocation3 + $0x74] sm:$0xff]
  %v1309 = vld [vmem:[#allocation3 + $0x84] sm:$0xff]
  %v1310 = vld [vmem:[#allocation3 + $0x8c] sm:$0xff]
  %v1311 = vld [vmem:[#allocation3 + $0x94] sm:$0xff]
  %v1312 = vld [vmem:[#allocation3 + $0xa4] sm:$0xff]
  %v1313 = vld [vmem:[#allocation3 + $0xac] sm:$0xff]
  %v1314 = vld [vmem:[#allocation3 + $0xb4] sm:$0xff]
  %v1315 = vld [vmem:[#allocation3 + $0xc4] sm:$0xff]
  %v1316 = vld [vmem:[#allocation3 + $0xcc] sm:$0xff]
  %v1317 = vld [vmem:[#allocation3 + $0xd4] sm:$0xff]
  %v1318 = vld [vmem:[#allocation3 + $0xe4] sm:$0xff]
  %v1319 = vld [vmem:[#allocation3 + $0xec] sm:$0xff]
  %v1320 = vld [vmem:[#allocation3 + $0xf4] sm:$0xff]
  %v1321 = vld [vmem:[#allocation3 + $0x4] sm:$0xff]
  %v1322 = vld [vmem:[#allocation3 + $0xc] sm:$0xff]
  %v1323 = vld [vmem:[#allocation3 + $0x14] sm:$0xff]
  %v1324 = vld [vmem:[#allocation3 + $0x1c] sm:$0xf]
  %v1325 = vld [vmem:[#allocation3 + $0x24] sm:$0xff]
  %v1326 = vld [vmem:[#allocation3 + $0x2c] sm:$0xff]
  %v1327 = vld [vmem:[#allocation3 + $0x34] sm:$0xff]
  %v1328 = vld [vmem:[#allocation3 + $0x3c] sm:$0xf]
  %v1329 = vld [vmem:[#allocation3 + $0x44] sm:$0xff]
  %v1330 = vld [vmem:[#allocation3 + $0x4c] sm:$0xff]
  %v1331 = vld [vmem:[#allocation3 + $0x54] sm:$0xff]
  %v1332 = vld [vmem:[#allocation3 + $0x5c] sm:$0xf]
  %v1333 = vld [vmem:[#allocation3 + $0x64] sm:$0xff]
  %v1334 = vld [vmem:[#allocation3 + $0x6c] sm:$0xff]
  %v1335 = vld [vmem:[#allocation3 + $0x74] sm:$0xff]
  %v1336 = vld [vmem:[#allocation3 + $0x7c] sm:$0xf]
  %v1337 = vld [vmem:[#allocation3 + $0x84] sm:$0xff]
  %v1338 = vld [vmem:[#allocation3 + $0x8c] sm:$0xff]
  %v1339 = vld [vmem:[#allocation3 + $0x94] sm:$0xff]
  %v1340 = vld [vmem:[#allocation3 + $0x9c] sm:$0xf]
  %v1341 = vld [vmem:[#allocation3 + $0xa4] sm:$0xff]
  %v1342 = vld [vmem:[#allocation3 + $0xac] sm:$0xff]
  %v1343 = vld [vmem:[#allocation3 + $0xb4] sm:$0xff]
  %v1344 = vld [vmem:[#allocation3 + $0xbc] sm:$0xf]
  %v1345 = vld [vmem:[#allocation3 + $0xc4] sm:$0xff]
  %v1346 = vld [vmem:[#allocation3 + $0xcc] sm:$0xff]
  %v1347 = vld [vmem:[#allocation3 + $0xd4] sm:$0xff]
  %v1348 = vld [vmem:[#allocation3 + $0xdc] sm:$0xf]
  %v1349 = vld [vmem:[#allocation3 + $0xe4] sm:$0xff]
  %v1350 = vld [vmem:[#allocation3 + $0xec] sm:$0xff]
  %v1351 = vld [vmem:[#allocation3 + $0xf4] sm:$0xff]
  %v1352 = vld [vmem:[#allocation3 + $0xfc] sm:$0xf]
  %v1385 = vunpack.c.l.b16 %v1265
  %v1386 = vunpack.c.h.b16 %v1265
  %v1387 = vunpack.c.l.b16 %v1266
  %v1388 = vunpack.c.h.b16 %v1266
  %v1389 = vunpack.c.l.b16 %v1267
  %v1390 = vunpack.c.h.b16 %v1267
  %v1391 = vunpack.c.l.b16 %v1268
  %v1392 = vunpack.c.l.b16 %v1269
  %v1393 = vunpack.c.h.b16 %v1269
  %v1394 = vunpack.c.l.b16 %v1270
  %v1395 = vunpack.c.h.b16 %v1270
  %v1396 = vunpack.c.l.b16 %v1271
  %v1397 = vunpack.c.h.b16 %v1271
  %v1398 = vunpack.c.l.b16 %v1272
  %v1399 = vunpack.c.l.b16 %v1273
  %v1400 = vunpack.c.h.b16 %v1273
  %v1401 = vunpack.c.l.b16 %v1274
  %v1402 = vunpack.c.h.b16 %v1274
  %v1403 = vunpack.c.l.b16 %v1275
  %v1404 = vunpack.c.h.b16 %v1275
  %v1405 = vunpack.c.l.b16 %v1276
  %v1406 = vunpack.c.l.b16 %v1277
  %v1407 = vunpack.c.h.b16 %v1277
  %v1408 = vunpack.c.l.b16 %v1278
  %v1409 = vunpack.c.h.b16 %v1278
  %v1410 = vunpack.c.l.b16 %v1279
  %v1411 = vunpack.c.h.b16 %v1279
  %v1412 = vunpack.c.l.b16 %v1280
  %v1413 = vunpack.c.l.b16 %v1281
  %v1414 = vunpack.c.h.b16 %v1281
  %v1415 = vunpack.c.l.b16 %v1282
  %v1416 = vunpack.c.h.b16 %v1282
  %v1417 = vunpack.c.l.b16 %v1283
  %v1418 = vunpack.c.h.b16 %v1283
  %v1419 = vunpack.c.l.b16 %v1284
  %v1420 = vunpack.c.l.b16 %v1285
  %v1421 = vunpack.c.h.b16 %v1285
  %v1422 = vunpack.c.l.b16 %v1286
  %v1423 = vunpack.c.h.b16 %v1286
  %v1424 = vunpack.c.l.b16 %v1287
  %v1425 = vunpack.c.h.b16 %v1287
  %v1426 = vunpack.c.l.b16 %v1288
  %v1427 = vunpack.c.l.b16 %v1289
  %v1428 = vunpack.c.h.b16 %v1289
  %v1429 = vunpack.c.l.b16 %v1290
  %v1430 = vunpack.c.h.b16 %v1290
  %v1431 = vunpack.c.l.b16 %v1291
  %v1432 = vunpack.c.h.b16 %v1291
  %v1433 = vunpack.c.l.b16 %v1292
  %v1434 = vunpack.c.l.b16 %v1293
  %v1435 = vunpack.c.h.b16 %v1293
  %v1436 = vunpack.c.l.b16 %v1294
  %v1437 = vunpack.c.h.b16 %v1294
  %v1438 = vunpack.c.l.b16 %v1295
  %v1439 = vunpack.c.h.b16 %v1295
  %v1440 = vunpack.c.l.b16 %v1296
  %v1441 = vpack.c.b16 %v1392, %v1385
  %v1442 = vpack.c.b16 %v1393, %v1386
  %v1443 = vpack.c.b16 %v1394, %v1387
  %v1444 = vpack.c.b16 %v1395, %v1388
  %v1445 = vpack.c.b16 %v1396, %v1389
  %v1446 = vpack.c.b16 %v1397, %v1390
  %v1447 = vpack.c.b16 %v1398, %v1391
  %v1448 = vpack.c.b16 %v1406, %v1399
  %v1449 = vpack.c.b16 %v1407, %v1400
  %v1450 = vpack.c.b16 %v1408, %v1401
  %v1451 = vpack.c.b16 %v1409, %v1402
  %v1452 = vpack.c.b16 %v1410, %v1403
  %v1453 = vpack.c.b16 %v1411, %v1404
  %v1454 = vpack.c.b16 %v1412, %v1405
  %v1455 = vpack.c.b16 %v1420, %v1413
  %v1456 = vpack.c.b16 %v1421, %v1414
  %v1457 = vpack.c.b16 %v1422, %v1415
  %v1458 = vpack.c.b16 %v1423, %v1416
  %v1459 = vpack.c.b16 %v1424, %v1417
  %v1460 = vpack.c.b16 %v1425, %v1418
  %v1461 = vpack.c.b16 %v1426, %v1419
  %v1462 = vpack.c.b16 %v1434, %v1427
  %v1463 = vpack.c.b16 %v1435, %v1428
  %v1464 = vpack.c.b16 %v1436, %v1429
  %v1465 = vpack.c.b16 %v1437, %v1430
  %v1466 = vpack.c.b16 %v1438, %v1431
  %v1467 = vpack.c.b16 %v1439, %v1432
  %v1468 = vpack.c.b16 %v1440, %v1433
  %1469 = vrot.lane.b32.xlu0 %v1441, 127
  %v1470 = vpop.permute.xlu0 %1469
  %1471 = vrot.lane.b32.xlu0 %v1442, 127
  %v1472 = vpop.permute.xlu0 %1471
  %1473 = vrot.lane.b32.xlu0 %v1443, 127
  %v1474 = vpop.permute.xlu0 %1473
  %1475 = vrot.lane.b32.xlu0 %v1444, 127
  %v1476 = vpop.permute.xlu0 %1475
  %1477 = vrot.lane.b32.xlu0 %v1445, 127
  %v1478 = vpop.permute.xlu0 %1477
  %1479 = vrot.lane.b32.xlu0 %v1446, 127
  %v1480 = vpop.permute.xlu0 %1479
  %1481 = vrot.lane.b32.xlu0 %v1447, 127
  %v1482 = vpop.permute.xlu0 %1481
  %1483 = vrot.lane.b32.xlu0 %v1448, 127
  %v1484 = vpop.permute.xlu0 %1483
  %1485 = vrot.lane.b32.xlu0 %v1449, 127
  %v1486 = vpop.permute.xlu0 %1485
  %1487 = vrot.lane.b32.xlu0 %v1450, 127
  %v1488 = vpop.permute.xlu0 %1487
  %1489 = vrot.lane.b32.xlu0 %v1451, 127
  %v1490 = vpop.permute.xlu0 %1489
  %1491 = vrot.lane.b32.xlu0 %v1452, 127
  %v1492 = vpop.permute.xlu0 %1491
  %1493 = vrot.lane.b32.xlu0 %v1453, 127
  %v1494 = vpop.permute.xlu0 %1493
  %1495 = vrot.lane.b32.xlu0 %v1454, 127
  %v1496 = vpop.permute.xlu0 %1495
  %1497 = vrot.lane.b32.xlu0 %v1455, 127
  %v1498 = vpop.permute.xlu0 %1497
  %1499 = vrot.lane.b32.xlu0 %v1456, 127
  %v1500 = vpop.permute.xlu0 %1499
  %1501 = vrot.lane.b32.xlu0 %v1457, 127
  %v1502 = vpop.permute.xlu0 %1501
  %1503 = vrot.lane.b32.xlu0 %v1458, 127
  %v1504 = vpop.permute.xlu0 %1503
  %1505 = vrot.lane.b32.xlu0 %v1459, 127
  %v1506 = vpop.permute.xlu0 %1505
  %1507 = vrot.lane.b32.xlu0 %v1460, 127
  %v1508 = vpop.permute.xlu0 %1507
  %1509 = vrot.lane.b32.xlu0 %v1461, 127
  %v1510 = vpop.permute.xlu0 %1509
  %1511 = vrot.lane.b32.xlu0 %v1462, 127
  %v1512 = vpop.permute.xlu0 %1511
  %1513 = vrot.lane.b32.xlu0 %v1463, 127
  %v1514 = vpop.permute.xlu0 %1513
  %1515 = vrot.lane.b32.xlu0 %v1464, 127
  %v1516 = vpop.permute.xlu0 %1515
  %1517 = vrot.lane.b32.xlu0 %v1465, 127
  %v1518 = vpop.permute.xlu0 %1517
  %1519 = vrot.lane.b32.xlu0 %v1466, 127
  %v1520 = vpop.permute.xlu0 %1519
  %1521 = vrot.lane.b32.xlu0 %v1467, 127
  %v1522 = vpop.permute.xlu0 %1521
  %1523 = vrot.lane.b32.xlu0 %v1468, 127
  %v1524 = vpop.permute.xlu0 %1523
  %v1525 = vsel %vm406, %v1470, %v1472
  %v1526 = vsel %vm406, %v1472, %v1474
  %v1527 = vsel %vm406, %v1474, %v1476
  %v1528 = vsel %vm406, %v1476, %v1478
  %v1529 = vsel %vm406, %v1478, %v1480
  %v1530 = vsel %vm406, %v1480, %v1482
  %v1531 = vsel %vm406, %v1484, %v1486
  %v1532 = vsel %vm406, %v1486, %v1488
  %v1533 = vsel %vm406, %v1488, %v1490
  %v1534 = vsel %vm406, %v1490, %v1492
  %v1535 = vsel %vm406, %v1492, %v1494
  %v1536 = vsel %vm406, %v1494, %v1496
  %v1537 = vsel %vm406, %v1498, %v1500
  %v1538 = vsel %vm406, %v1500, %v1502
  %v1539 = vsel %vm406, %v1502, %v1504
  %v1540 = vsel %vm406, %v1504, %v1506
  %v1541 = vsel %vm406, %v1506, %v1508
  %v1542 = vsel %vm406, %v1508, %v1510
  %v1543 = vsel %vm406, %v1512, %v1514
  %v1544 = vsel %vm406, %v1514, %v1516
  %v1545 = vsel %vm406, %v1516, %v1518
  %v1546 = vsel %vm406, %v1518, %v1520
  %v1547 = vsel %vm406, %v1520, %v1522
  %v1548 = vsel %vm406, %v1522, %v1524
  %1549 = vrot.lane.b32.xlu0 %v1441, 126
  %v1550 = vpop.permute.xlu0 %1549
  %1551 = vrot.lane.b32.xlu0 %v1442, 126
  %v1552 = vpop.permute.xlu0 %1551
  %1553 = vrot.lane.b32.xlu0 %v1443, 126
  %v1554 = vpop.permute.xlu0 %1553
  %1555 = vrot.lane.b32.xlu0 %v1444, 126
  %v1556 = vpop.permute.xlu0 %1555
  %1557 = vrot.lane.b32.xlu0 %v1445, 126
  %v1558 = vpop.permute.xlu0 %1557
  %1559 = vrot.lane.b32.xlu0 %v1446, 126
  %v1560 = vpop.permute.xlu0 %1559
  %1561 = vrot.lane.b32.xlu0 %v1447, 126
  %v1562 = vpop.permute.xlu0 %1561
  %1563 = vrot.lane.b32.xlu0 %v1448, 126
  %v1564 = vpop.permute.xlu0 %1563
  %1565 = vrot.lane.b32.xlu0 %v1449, 126
  %v1566 = vpop.permute.xlu0 %1565
  %1567 = vrot.lane.b32.xlu0 %v1450, 126
  %v1568 = vpop.permute.xlu0 %1567
  %1569 = vrot.lane.b32.xlu0 %v1451, 126
  %v1570 = vpop.permute.xlu0 %1569
  %1571 = vrot.lane.b32.xlu0 %v1452, 126
  %v1572 = vpop.permute.xlu0 %1571
  %1573 = vrot.lane.b32.xlu0 %v1453, 126
  %v1574 = vpop.permute.xlu0 %1573
  %1575 = vrot.lane.b32.xlu0 %v1454, 126
  %v1576 = vpop.permute.xlu0 %1575
  %1577 = vrot.lane.b32.xlu0 %v1455, 126
  %v1578 = vpop.permute.xlu0 %1577
  %1579 = vrot.lane.b32.xlu0 %v1456, 126
  %v1580 = vpop.permute.xlu0 %1579
  %1581 = vrot.lane.b32.xlu0 %v1457, 126
  %v1582 = vpop.permute.xlu0 %1581
  %1583 = vrot.lane.b32.xlu0 %v1458, 126
  %v1584 = vpop.permute.xlu0 %1583
  %1585 = vrot.lane.b32.xlu0 %v1459, 126
  %v1586 = vpop.permute.xlu0 %1585
  %1587 = vrot.lane.b32.xlu0 %v1460, 126
  %v1588 = vpop.permute.xlu0 %1587
  %1589 = vrot.lane.b32.xlu0 %v1461, 126
  %v1590 = vpop.permute.xlu0 %1589
  %1591 = vrot.lane.b32.xlu0 %v1462, 126
  %v1592 = vpop.permute.xlu0 %1591
  %1593 = vrot.lane.b32.xlu0 %v1463, 126
  %v1594 = vpop.permute.xlu0 %1593
  %1595 = vrot.lane.b32.xlu0 %v1464, 126
  %v1596 = vpop.permute.xlu0 %1595
  %1597 = vrot.lane.b32.xlu0 %v1465, 126
  %v1598 = vpop.permute.xlu0 %1597
  %1599 = vrot.lane.b32.xlu0 %v1466, 126
  %v1600 = vpop.permute.xlu0 %1599
  %1601 = vrot.lane.b32.xlu0 %v1467, 126
  %v1602 = vpop.permute.xlu0 %1601
  %1603 = vrot.lane.b32.xlu0 %v1468, 126
  %v1604 = vpop.permute.xlu0 %1603
  %v1605 = vsel %vm427, %v1550, %v1552
  %v1606 = vsel %vm427, %v1552, %v1554
  %v1607 = vsel %vm427, %v1554, %v1556
  %v1608 = vsel %vm427, %v1556, %v1558
  %v1609 = vsel %vm427, %v1558, %v1560
  %v1610 = vsel %vm427, %v1560, %v1562
  %v1611 = vsel %vm427, %v1564, %v1566
  %v1612 = vsel %vm427, %v1566, %v1568
  %v1613 = vsel %vm427, %v1568, %v1570
  %v1614 = vsel %vm427, %v1570, %v1572
  %v1615 = vsel %vm427, %v1572, %v1574
  %v1616 = vsel %vm427, %v1574, %v1576
  %v1617 = vsel %vm427, %v1578, %v1580
  %v1618 = vsel %vm427, %v1580, %v1582
  %v1619 = vsel %vm427, %v1582, %v1584
  %v1620 = vsel %vm427, %v1584, %v1586
  %v1621 = vsel %vm427, %v1586, %v1588
  %v1622 = vsel %vm427, %v1588, %v1590
  %v1623 = vsel %vm427, %v1592, %v1594
  %v1624 = vsel %vm427, %v1594, %v1596
  %v1625 = vsel %vm427, %v1596, %v1598
  %v1626 = vsel %vm427, %v1598, %v1600
  %v1627 = vsel %vm427, %v1600, %v1602
  %v1628 = vsel %vm427, %v1602, %v1604
  %1629 = vrot.lane.b32.xlu0 %v1441, 110
  %v1630 = vpop.permute.xlu0 %1629
  %1631 = vrot.lane.b32.xlu0 %v1442, 110
  %v1632 = vpop.permute.xlu0 %1631
  %1633 = vrot.lane.b32.xlu0 %v1443, 110
  %v1634 = vpop.permute.xlu0 %1633
  %1635 = vrot.lane.b32.xlu0 %v1444, 110
  %v1636 = vpop.permute.xlu0 %1635
  %1637 = vrot.lane.b32.xlu0 %v1445, 110
  %v1638 = vpop.permute.xlu0 %1637
  %1639 = vrot.lane.b32.xlu0 %v1446, 110
  %v1640 = vpop.permute.xlu0 %1639
  %1641 = vrot.lane.b32.xlu0 %v1447, 110
  %v1642 = vpop.permute.xlu0 %1641
  %1643 = vrot.lane.b32.xlu0 %v1448, 110
  %v1644 = vpop.permute.xlu0 %1643
  %1645 = vrot.lane.b32.xlu0 %v1449, 110
  %v1646 = vpop.permute.xlu0 %1645
  %1647 = vrot.lane.b32.xlu0 %v1450, 110
  %v1648 = vpop.permute.xlu0 %1647
  %1649 = vrot.lane.b32.xlu0 %v1451, 110
  %v1650 = vpop.permute.xlu0 %1649
  %1651 = vrot.lane.b32.xlu0 %v1452, 110
  %v1652 = vpop.permute.xlu0 %1651
  %1653 = vrot.lane.b32.xlu0 %v1453, 110
  %v1654 = vpop.permute.xlu0 %1653
  %1655 = vrot.lane.b32.xlu0 %v1454, 110
  %v1656 = vpop.permute.xlu0 %1655
  %1657 = vrot.lane.b32.xlu0 %v1455, 110
  %v1658 = vpop.permute.xlu0 %1657
  %1659 = vrot.lane.b32.xlu0 %v1456, 110
  %v1660 = vpop.permute.xlu0 %1659
  %1661 = vrot.lane.b32.xlu0 %v1457, 110
  %v1662 = vpop.permute.xlu0 %1661
  %1663 = vrot.lane.b32.xlu0 %v1458, 110
  %v1664 = vpop.permute.xlu0 %1663
  %1665 = vrot.lane.b32.xlu0 %v1459, 110
  %v1666 = vpop.permute.xlu0 %1665
  %1667 = vrot.lane.b32.xlu0 %v1460, 110
  %v1668 = vpop.permute.xlu0 %1667
  %1669 = vrot.lane.b32.xlu0 %v1461, 110
  %v1670 = vpop.permute.xlu0 %1669
  %1671 = vrot.lane.b32.xlu0 %v1462, 110
  %v1672 = vpop.permute.xlu0 %1671
  %1673 = vrot.lane.b32.xlu0 %v1463, 110
  %v1674 = vpop.permute.xlu0 %1673
  %1675 = vrot.lane.b32.xlu0 %v1464, 110
  %v1676 = vpop.permute.xlu0 %1675
  %1677 = vrot.lane.b32.xlu0 %v1465, 110
  %v1678 = vpop.permute.xlu0 %1677
  %1679 = vrot.lane.b32.xlu0 %v1466, 110
  %v1680 = vpop.permute.xlu0 %1679
  %1681 = vrot.lane.b32.xlu0 %v1467, 110
  %v1682 = vpop.permute.xlu0 %1681
  %1683 = vrot.lane.b32.xlu0 %v1468, 110
  %v1684 = vpop.permute.xlu0 %1683
  %v1685 = vsel %vm448, %v1630, %v1632
  %v1686 = vsel %vm448, %v1632, %v1634
  %v1687 = vsel %vm448, %v1634, %v1636
  %v1688 = vsel %vm448, %v1636, %v1638
  %v1689 = vsel %vm448, %v1638, %v1640
  %v1690 = vsel %vm448, %v1640, %v1642
  %v1691 = vsel %vm448, %v1644, %v1646
  %v1692 = vsel %vm448, %v1646, %v1648
  %v1693 = vsel %vm448, %v1648, %v1650
  %v1694 = vsel %vm448, %v1650, %v1652
  %v1695 = vsel %vm448, %v1652, %v1654
  %v1696 = vsel %vm448, %v1654, %v1656
  %v1697 = vsel %vm448, %v1658, %v1660
  %v1698 = vsel %vm448, %v1660, %v1662
  %v1699 = vsel %vm448, %v1662, %v1664
  %v1700 = vsel %vm448, %v1664, %v1666
  %v1701 = vsel %vm448, %v1666, %v1668
  %v1702 = vsel %vm448, %v1668, %v1670
  %v1703 = vsel %vm448, %v1672, %v1674
  %v1704 = vsel %vm448, %v1674, %v1676
  %v1705 = vsel %vm448, %v1676, %v1678
  %v1706 = vsel %vm448, %v1678, %v1680
  %v1707 = vsel %vm448, %v1680, %v1682
  %v1708 = vsel %vm448, %v1682, %v1684
  %v1733 = vunpack.c.l.b16 %v1297
  %v1734 = vunpack.c.h.b16 %v1297
  %v1735 = vunpack.c.l.b16 %v1298
  %v1736 = vunpack.c.h.b16 %v1298
  %v1737 = vunpack.c.l.b16 %v1299
  %v1738 = vunpack.c.h.b16 %v1299
  %v1739 = vunpack.c.l.b16 %v1300
  %v1740 = vunpack.c.h.b16 %v1300
  %v1741 = vunpack.c.l.b16 %v1301
  %v1742 = vunpack.c.h.b16 %v1301
  %v1743 = vunpack.c.l.b16 %v1302
  %v1744 = vunpack.c.h.b16 %v1302
  %v1745 = vunpack.c.l.b16 %v1303
  %v1746 = vunpack.c.h.b16 %v1303
  %v1747 = vunpack.c.l.b16 %v1304
  %v1748 = vunpack.c.h.b16 %v1304
  %v1749 = vunpack.c.l.b16 %v1305
  %v1750 = vunpack.c.h.b16 %v1305
  %v1751 = vunpack.c.l.b16 %v1306
  %v1752 = vunpack.c.h.b16 %v1306
  %v1753 = vunpack.c.l.b16 %v1307
  %v1754 = vunpack.c.h.b16 %v1307
  %v1755 = vunpack.c.l.b16 %v1308
  %v1756 = vunpack.c.h.b16 %v1308
  %v1757 = vunpack.c.l.b16 %v1309
  %v1758 = vunpack.c.h.b16 %v1309
  %v1759 = vunpack.c.l.b16 %v1310
  %v1760 = vunpack.c.h.b16 %v1310
  %v1761 = vunpack.c.l.b16 %v1311
  %v1762 = vunpack.c.h.b16 %v1311
  %v1763 = vunpack.c.l.b16 %v1312
  %v1764 = vunpack.c.h.b16 %v1312
  %v1765 = vunpack.c.l.b16 %v1313
  %v1766 = vunpack.c.h.b16 %v1313
  %v1767 = vunpack.c.l.b16 %v1314
  %v1768 = vunpack.c.h.b16 %v1314
  %v1769 = vunpack.c.l.b16 %v1315
  %v1770 = vunpack.c.h.b16 %v1315
  %v1771 = vunpack.c.l.b16 %v1316
  %v1772 = vunpack.c.h.b16 %v1316
  %v1773 = vunpack.c.l.b16 %v1317
  %v1774 = vunpack.c.h.b16 %v1317
  %v1775 = vunpack.c.l.b16 %v1318
  %v1776 = vunpack.c.h.b16 %v1318
  %v1777 = vunpack.c.l.b16 %v1319
  %v1778 = vunpack.c.h.b16 %v1319
  %v1779 = vunpack.c.l.b16 %v1320
  %v1780 = vunpack.c.h.b16 %v1320
  %v1781 = vpack.c.b16 %v1739, %v1733
  %v1782 = vpack.c.b16 %v1740, %v1734
  %v1783 = vpack.c.b16 %v1741, %v1735
  %v1784 = vpack.c.b16 %v1742, %v1736
  %v1785 = vpack.c.b16 %v1743, %v1737
  %v1786 = vpack.c.b16 %v1744, %v1738
  %v1787 = vpack.c.b16 %v1751, %v1745
  %v1788 = vpack.c.b16 %v1752, %v1746
  %v1789 = vpack.c.b16 %v1753, %v1747
  %v1790 = vpack.c.b16 %v1754, %v1748
  %v1791 = vpack.c.b16 %v1755, %v1749
  %v1792 = vpack.c.b16 %v1756, %v1750
  %v1793 = vpack.c.b16 %v1763, %v1757
  %v1794 = vpack.c.b16 %v1764, %v1758
  %v1795 = vpack.c.b16 %v1765, %v1759
  %v1796 = vpack.c.b16 %v1766, %v1760
  %v1797 = vpack.c.b16 %v1767, %v1761
  %v1798 = vpack.c.b16 %v1768, %v1762
  %v1799 = vpack.c.b16 %v1775, %v1769
  %v1800 = vpack.c.b16 %v1776, %v1770
  %v1801 = vpack.c.b16 %v1777, %v1771
  %v1802 = vpack.c.b16 %v1778, %v1772
  %v1803 = vpack.c.b16 %v1779, %v1773
  %v1804 = vpack.c.b16 %v1780, %v1774
  %1805 = vrot.lane.b32.xlu0 %v1781, 109
  %v1806 = vpop.permute.xlu0 %1805
  %1807 = vrot.lane.b32.xlu0 %v1782, 109
  %v1808 = vpop.permute.xlu0 %1807
  %1809 = vrot.lane.b32.xlu0 %v1783, 109
  %v1810 = vpop.permute.xlu0 %1809
  %1811 = vrot.lane.b32.xlu0 %v1784, 109
  %v1812 = vpop.permute.xlu0 %1811
  %1813 = vrot.lane.b32.xlu0 %v1785, 109
  %v1814 = vpop.permute.xlu0 %1813
  %1815 = vrot.lane.b32.xlu0 %v1786, 109
  %v1816 = vpop.permute.xlu0 %1815
  %1817 = vrot.lane.b32.xlu0 %v1787, 109
  %v1818 = vpop.permute.xlu0 %1817
  %1819 = vrot.lane.b32.xlu0 %v1788, 109
  %v1820 = vpop.permute.xlu0 %1819
  %1821 = vrot.lane.b32.xlu0 %v1789, 109
  %v1822 = vpop.permute.xlu0 %1821
  %1823 = vrot.lane.b32.xlu0 %v1790, 109
  %v1824 = vpop.permute.xlu0 %1823
  %1825 = vrot.lane.b32.xlu0 %v1791, 109
  %v1826 = vpop.permute.xlu0 %1825
  %1827 = vrot.lane.b32.xlu0 %v1792, 109
  %v1828 = vpop.permute.xlu0 %1827
  %1829 = vrot.lane.b32.xlu0 %v1793, 109
  %v1830 = vpop.permute.xlu0 %1829
  %1831 = vrot.lane.b32.xlu0 %v1794, 109
  %v1832 = vpop.permute.xlu0 %1831
  %1833 = vrot.lane.b32.xlu0 %v1795, 109
  %v1834 = vpop.permute.xlu0 %1833
  %1835 = vrot.lane.b32.xlu0 %v1796, 109
  %v1836 = vpop.permute.xlu0 %1835
  %1837 = vrot.lane.b32.xlu0 %v1797, 109
  %v1838 = vpop.permute.xlu0 %1837
  %1839 = vrot.lane.b32.xlu0 %v1798, 109
  %v1840 = vpop.permute.xlu0 %1839
  %1841 = vrot.lane.b32.xlu0 %v1799, 109
  %v1842 = vpop.permute.xlu0 %1841
  %1843 = vrot.lane.b32.xlu0 %v1800, 109
  %v1844 = vpop.permute.xlu0 %1843
  %1845 = vrot.lane.b32.xlu0 %v1801, 109
  %v1846 = vpop.permute.xlu0 %1845
  %1847 = vrot.lane.b32.xlu0 %v1802, 109
  %v1848 = vpop.permute.xlu0 %1847
  %1849 = vrot.lane.b32.xlu0 %v1803, 109
  %v1850 = vpop.permute.xlu0 %1849
  %1851 = vrot.lane.b32.xlu0 %v1804, 109
  %v1852 = vpop.permute.xlu0 %1851
  %v1853 = vsel %vm482, %v1806, %v1808
  %v1854 = vsel %vm482, %v1808, %v1810
  %v1855 = vsel %vm482, %v1810, %v1812
  %v1856 = vsel %vm482, %v1812, %v1814
  %v1857 = vsel %vm482, %v1814, %v1816
  %v1858 = vsel %vm482, %v1818, %v1820
  %v1859 = vsel %vm482, %v1820, %v1822
  %v1860 = vsel %vm482, %v1822, %v1824
  %v1861 = vsel %vm482, %v1824, %v1826
  %v1862 = vsel %vm482, %v1826, %v1828
  %v1863 = vsel %vm482, %v1830, %v1832
  %v1864 = vsel %vm482, %v1832, %v1834
  %v1865 = vsel %vm482, %v1834, %v1836
  %v1866 = vsel %vm482, %v1836, %v1838
  %v1867 = vsel %vm482, %v1838, %v1840
  %v1868 = vsel %vm482, %v1842, %v1844
  %v1869 = vsel %vm482, %v1844, %v1846
  %v1870 = vsel %vm482, %v1846, %v1848
  %v1871 = vsel %vm482, %v1848, %v1850
  %v1872 = vsel %vm482, %v1850, %v1852
  %v1905 = vunpack.c.l.b16 %v1321
  %v1906 = vunpack.c.h.b16 %v1321
  %v1907 = vunpack.c.l.b16 %v1322
  %v1908 = vunpack.c.h.b16 %v1322
  %v1909 = vunpack.c.l.b16 %v1323
  %v1910 = vunpack.c.h.b16 %v1323
  %v1911 = vunpack.c.l.b16 %v1324
  %v1912 = vunpack.c.l.b16 %v1325
  %v1913 = vunpack.c.h.b16 %v1325
  %v1914 = vunpack.c.l.b16 %v1326
  %v1915 = vunpack.c.h.b16 %v1326
  %v1916 = vunpack.c.l.b16 %v1327
  %v1917 = vunpack.c.h.b16 %v1327
  %v1918 = vunpack.c.l.b16 %v1328
  %v1919 = vunpack.c.l.b16 %v1329
  %v1920 = vunpack.c.h.b16 %v1329
  %v1921 = vunpack.c.l.b16 %v1330
  %v1922 = vunpack.c.h.b16 %v1330
  %v1923 = vunpack.c.l.b16 %v1331
  %v1924 = vunpack.c.h.b16 %v1331
  %v1925 = vunpack.c.l.b16 %v1332
  %v1926 = vunpack.c.l.b16 %v1333
  %v1927 = vunpack.c.h.b16 %v1333
  %v1928 = vunpack.c.l.b16 %v1334
  %v1929 = vunpack.c.h.b16 %v1334
  %v1930 = vunpack.c.l.b16 %v1335
  %v1931 = vunpack.c.h.b16 %v1335
  %v1932 = vunpack.c.l.b16 %v1336
  %v1933 = vunpack.c.l.b16 %v1337
  %v1934 = vunpack.c.h.b16 %v1337
  %v1935 = vunpack.c.l.b16 %v1338
  %v1936 = vunpack.c.h.b16 %v1338
  %v1937 = vunpack.c.l.b16 %v1339
  %v1938 = vunpack.c.h.b16 %v1339
  %v1939 = vunpack.c.l.b16 %v1340
  %v1940 = vunpack.c.l.b16 %v1341
  %v1941 = vunpack.c.h.b16 %v1341
  %v1942 = vunpack.c.l.b16 %v1342
  %v1943 = vunpack.c.h.b16 %v1342
  %v1944 = vunpack.c.l.b16 %v1343
  %v1945 = vunpack.c.h.b16 %v1343
  %v1946 = vunpack.c.l.b16 %v1344
  %v1947 = vunpack.c.l.b16 %v1345
  %v1948 = vunpack.c.h.b16 %v1345
  %v1949 = vunpack.c.l.b16 %v1346
  %v1950 = vunpack.c.h.b16 %v1346
  %v1951 = vunpack.c.l.b16 %v1347
  %v1952 = vunpack.c.h.b16 %v1347
  %v1953 = vunpack.c.l.b16 %v1348
  %v1954 = vunpack.c.l.b16 %v1349
  %v1955 = vunpack.c.h.b16 %v1349
  %v1956 = vunpack.c.l.b16 %v1350
  %v1957 = vunpack.c.h.b16 %v1350
  %v1958 = vunpack.c.l.b16 %v1351
  %v1959 = vunpack.c.h.b16 %v1351
  %v1960 = vunpack.c.l.b16 %v1352
  %v1961 = vpack.c.b16 %v1912, %v1905
  %v1962 = vpack.c.b16 %v1913, %v1906
  %v1963 = vpack.c.b16 %v1914, %v1907
  %v1964 = vpack.c.b16 %v1915, %v1908
  %v1965 = vpack.c.b16 %v1916, %v1909
  %v1966 = vpack.c.b16 %v1917, %v1910
  %v1967 = vpack.c.b16 %v1918, %v1911
  %v1968 = vpack.c.b16 %v1926, %v1919
  %v1969 = vpack.c.b16 %v1927, %v1920
  %v1970 = vpack.c.b16 %v1928, %v1921
  %v1971 = vpack.c.b16 %v1929, %v1922
  %v1972 = vpack.c.b16 %v1930, %v1923
  %v1973 = vpack.c.b16 %v1931, %v1924
  %v1974 = vpack.c.b16 %v1932, %v1925
  %v1975 = vpack.c.b16 %v1940, %v1933
  %v1976 = vpack.c.b16 %v1941, %v1934
  %v1977 = vpack.c.b16 %v1942, %v1935
  %v1978 = vpack.c.b16 %v1943, %v1936
  %v1979 = vpack.c.b16 %v1944, %v1937
  %v1980 = vpack.c.b16 %v1945, %v1938
  %v1981 = vpack.c.b16 %v1946, %v1939
  %v1982 = vpack.c.b16 %v1954, %v1947
  %v1983 = vpack.c.b16 %v1955, %v1948
  %v1984 = vpack.c.b16 %v1956, %v1949
  %v1985 = vpack.c.b16 %v1957, %v1950
  %v1986 = vpack.c.b16 %v1958, %v1951
  %v1987 = vpack.c.b16 %v1959, %v1952
  %v1988 = vpack.c.b16 %v1960, %v1953
  %1989 = vrot.lane.b32.xlu0 %v1961, 108
  %v1990 = vpop.permute.xlu0 %1989
  %1991 = vrot.lane.b32.xlu0 %v1962, 108
  %v1992 = vpop.permute.xlu0 %1991
  %1993 = vrot.lane.b32.xlu0 %v1963, 108
  %v1994 = vpop.permute.xlu0 %1993
  %1995 = vrot.lane.b32.xlu0 %v1964, 108
  %v1996 = vpop.permute.xlu0 %1995
  %1997 = vrot.lane.b32.xlu0 %v1965, 108
  %v1998 = vpop.permute.xlu0 %1997
  %1999 = vrot.lane.b32.xlu0 %v1966, 108
  %v2000 = vpop.permute.xlu0 %1999
  %2001 = vrot.lane.b32.xlu0 %v1967, 108
  %v2002 = vpop.permute.xlu0 %2001
  %2003 = vrot.lane.b32.xlu0 %v1968, 108
  %v2004 = vpop.permute.xlu0 %2003
  %2005 = vrot.lane.b32.xlu0 %v1969, 108
  %v2006 = vpop.permute.xlu0 %2005
  %2007 = vrot.lane.b32.xlu0 %v1970, 108
  %v2008 = vpop.permute.xlu0 %2007
  %2009 = vrot.lane.b32.xlu0 %v1971, 108
  %v2010 = vpop.permute.xlu0 %2009
  %2011 = vrot.lane.b32.xlu0 %v1972, 108
  %v2012 = vpop.permute.xlu0 %2011
  %2013 = vrot.lane.b32.xlu0 %v1973, 108
  %v2014 = vpop.permute.xlu0 %2013
  %2015 = vrot.lane.b32.xlu0 %v1974, 108
  %v2016 = vpop.permute.xlu0 %2015
  %2017 = vrot.lane.b32.xlu0 %v1975, 108
  %v2018 = vpop.permute.xlu0 %2017
  %2019 = vrot.lane.b32.xlu0 %v1976, 108
  %v2020 = vpop.permute.xlu0 %2019
  %2021 = vrot.lane.b32.xlu0 %v1977, 108
  %v2022 = vpop.permute.xlu0 %2021
  %2023 = vrot.lane.b32.xlu0 %v1978, 108
  %v2024 = vpop.permute.xlu0 %2023
  %2025 = vrot.lane.b32.xlu0 %v1979, 108
  %v2026 = vpop.permute.xlu0 %2025
  %2027 = vrot.lane.b32.xlu0 %v1980, 108
  %v2028 = vpop.permute.xlu0 %2027
  %2029 = vrot.lane.b32.xlu0 %v1981, 108
  %v2030 = vpop.permute.xlu0 %2029
  %2031 = vrot.lane.b32.xlu0 %v1982, 108
  %v2032 = vpop.permute.xlu0 %2031
  %2033 = vrot.lane.b32.xlu0 %v1983, 108
  %v2034 = vpop.permute.xlu0 %2033
  %2035 = vrot.lane.b32.xlu0 %v1984, 108
  %v2036 = vpop.permute.xlu0 %2035
  %2037 = vrot.lane.b32.xlu0 %v1985, 108
  %v2038 = vpop.permute.xlu0 %2037
  %2039 = vrot.lane.b32.xlu0 %v1986, 108
  %v2040 = vpop.permute.xlu0 %2039
  %2041 = vrot.lane.b32.xlu0 %v1987, 108
  %v2042 = vpop.permute.xlu0 %2041
  %2043 = vrot.lane.b32.xlu0 %v1988, 108
  %v2044 = vpop.permute.xlu0 %2043
  %v2045 = vsel %vm520, %v1990, %v1992
  %v2046 = vsel %vm520, %v1992, %v1994
  %v2047 = vsel %vm520, %v1994, %v1996
  %v2048 = vsel %vm520, %v1996, %v1998
  %v2049 = vsel %vm520, %v1998, %v2000
  %v2050 = vsel %vm520, %v2000, %v2002
  %v2051 = vsel %vm520, %v2004, %v2006
  %v2052 = vsel %vm520, %v2006, %v2008
  %v2053 = vsel %vm520, %v2008, %v2010
  %v2054 = vsel %vm520, %v2010, %v2012
  %v2055 = vsel %vm520, %v2012, %v2014
  %v2056 = vsel %vm520, %v2014, %v2016
  %v2057 = vsel %vm520, %v2018, %v2020
  %v2058 = vsel %vm520, %v2020, %v2022
  %v2059 = vsel %vm520, %v2022, %v2024
  %v2060 = vsel %vm520, %v2024, %v2026
  %v2061 = vsel %vm520, %v2026, %v2028
  %v2062 = vsel %vm520, %v2028, %v2030
  %v2063 = vsel %vm520, %v2032, %v2034
  %v2064 = vsel %vm520, %v2034, %v2036
  %v2065 = vsel %vm520, %v2036, %v2038
  %v2066 = vsel %vm520, %v2038, %v2040
  %v2067 = vsel %vm520, %v2040, %v2042
  %v2068 = vsel %vm520, %v2042, %v2044
  %2069 = vrot.lane.b32.xlu0 %v1961, 92
  %v2070 = vpop.permute.xlu0 %2069
  %2071 = vrot.lane.b32.xlu0 %v1962, 92
  %v2072 = vpop.permute.xlu0 %2071
  %2073 = vrot.lane.b32.xlu0 %v1963, 92
  %v2074 = vpop.permute.xlu0 %2073
  %2075 = vrot.lane.b32.xlu0 %v1964, 92
  %v2076 = vpop.permute.xlu0 %2075
  %2077 = vrot.lane.b32.xlu0 %v1965, 92
  %v2078 = vpop.permute.xlu0 %2077
  %2079 = vrot.lane.b32.xlu0 %v1966, 92
  %v2080 = vpop.permute.xlu0 %2079
  %2081 = vrot.lane.b32.xlu0 %v1967, 92
  %v2082 = vpop.permute.xlu0 %2081
  %2083 = vrot.lane.b32.xlu0 %v1968, 92
  %v2084 = vpop.permute.xlu0 %2083
  %2085 = vrot.lane.b32.xlu0 %v1969, 92
  %v2086 = vpop.permute.xlu0 %2085
  %2087 = vrot.lane.b32.xlu0 %v1970, 92
  %v2088 = vpop.permute.xlu0 %2087
  %2089 = vrot.lane.b32.xlu0 %v1971, 92
  %v2090 = vpop.permute.xlu0 %2089
  %2091 = vrot.lane.b32.xlu0 %v1972, 92
  %v2092 = vpop.permute.xlu0 %2091
  %2093 = vrot.lane.b32.xlu0 %v1973, 92
  %v2094 = vpop.permute.xlu0 %2093
  %2095 = vrot.lane.b32.xlu0 %v1974, 92
  %v2096 = vpop.permute.xlu0 %2095
  %2097 = vrot.lane.b32.xlu0 %v1975, 92
  %v2098 = vpop.permute.xlu0 %2097
  %2099 = vrot.lane.b32.xlu0 %v1976, 92
  %v2100 = vpop.permute.xlu0 %2099
  %2101 = vrot.lane.b32.xlu0 %v1977, 92
  %v2102 = vpop.permute.xlu0 %2101
  %2103 = vrot.lane.b32.xlu0 %v1978, 92
  %v2104 = vpop.permute.xlu0 %2103
  %2105 = vrot.lane.b32.xlu0 %v1979, 92
  %v2106 = vpop.permute.xlu0 %2105
  %2107 = vrot.lane.b32.xlu0 %v1980, 92
  %v2108 = vpop.permute.xlu0 %2107
  %2109 = vrot.lane.b32.xlu0 %v1981, 92
  %v2110 = vpop.permute.xlu0 %2109
  %2111 = vrot.lane.b32.xlu0 %v1982, 92
  %v2112 = vpop.permute.xlu0 %2111
  %2113 = vrot.lane.b32.xlu0 %v1983, 92
  %v2114 = vpop.permute.xlu0 %2113
  %2115 = vrot.lane.b32.xlu0 %v1984, 92
  %v2116 = vpop.permute.xlu0 %2115
  %2117 = vrot.lane.b32.xlu0 %v1985, 92
  %v2118 = vpop.permute.xlu0 %2117
  %2119 = vrot.lane.b32.xlu0 %v1986, 92
  %v2120 = vpop.permute.xlu0 %2119
  %2121 = vrot.lane.b32.xlu0 %v1987, 92
  %v2122 = vpop.permute.xlu0 %2121
  %2123 = vrot.lane.b32.xlu0 %v1988, 92
  %v2124 = vpop.permute.xlu0 %2123
  %v2125 = vsel %vm541, %v2070, %v2072
  %v2126 = vsel %vm541, %v2072, %v2074
  %v2127 = vsel %vm541, %v2074, %v2076
  %v2128 = vsel %vm541, %v2076, %v2078
  %v2129 = vsel %vm541, %v2078, %v2080
  %v2130 = vsel %vm541, %v2080, %v2082
  %v2131 = vsel %vm541, %v2084, %v2086
  %v2132 = vsel %vm541, %v2086, %v2088
  %v2133 = vsel %vm541, %v2088, %v2090
  %v2134 = vsel %vm541, %v2090, %v2092
  %v2135 = vsel %vm541, %v2092, %v2094
  %v2136 = vsel %vm541, %v2094, %v2096
  %v2137 = vsel %vm541, %v2098, %v2100
  %v2138 = vsel %vm541, %v2100, %v2102
  %v2139 = vsel %vm541, %v2102, %v2104
  %v2140 = vsel %vm541, %v2104, %v2106
  %v2141 = vsel %vm541, %v2106, %v2108
  %v2142 = vsel %vm541, %v2108, %v2110
  %v2143 = vsel %vm541, %v2112, %v2114
  %v2144 = vsel %vm541, %v2114, %v2116
  %v2145 = vsel %vm541, %v2116, %v2118
  %v2146 = vsel %vm541, %v2118, %v2120
  %v2147 = vsel %vm541, %v2120, %v2122
  %v2148 = vsel %vm541, %v2122, %v2124
  %2149 = vrot.lane.b32.xlu0 %v1961, 91
  %v2150 = vpop.permute.xlu0 %2149
  %2151 = vrot.lane.b32.xlu0 %v1962, 91
  %v2152 = vpop.permute.xlu0 %2151
  %2153 = vrot.lane.b32.xlu0 %v1963, 91
  %v2154 = vpop.permute.xlu0 %2153
  %2155 = vrot.lane.b32.xlu0 %v1964, 91
  %v2156 = vpop.permute.xlu0 %2155
  %2157 = vrot.lane.b32.xlu0 %v1965, 91
  %v2158 = vpop.permute.xlu0 %2157
  %2159 = vrot.lane.b32.xlu0 %v1966, 91
  %v2160 = vpop.permute.xlu0 %2159
  %2161 = vrot.lane.b32.xlu0 %v1967, 91
  %v2162 = vpop.permute.xlu0 %2161
  %2163 = vrot.lane.b32.xlu0 %v1968, 91
  %v2164 = vpop.permute.xlu0 %2163
  %2165 = vrot.lane.b32.xlu0 %v1969, 91
  %v2166 = vpop.permute.xlu0 %2165
  %2167 = vrot.lane.b32.xlu0 %v1970, 91
  %v2168 = vpop.permute.xlu0 %2167
  %2169 = vrot.lane.b32.xlu0 %v1971, 91
  %v2170 = vpop.permute.xlu0 %2169
  %2171 = vrot.lane.b32.xlu0 %v1972, 91
  %v2172 = vpop.permute.xlu0 %2171
  %2173 = vrot.lane.b32.xlu0 %v1973, 91
  %v2174 = vpop.permute.xlu0 %2173
  %2175 = vrot.lane.b32.xlu0 %v1974, 91
  %v2176 = vpop.permute.xlu0 %2175
  %2177 = vrot.lane.b32.xlu0 %v1975, 91
  %v2178 = vpop.permute.xlu0 %2177
  %2179 = vrot.lane.b32.xlu0 %v1976, 91
  %v2180 = vpop.permute.xlu0 %2179
  %2181 = vrot.lane.b32.xlu0 %v1977, 91
  %v2182 = vpop.permute.xlu0 %2181
  %2183 = vrot.lane.b32.xlu0 %v1978, 91
  %v2184 = vpop.permute.xlu0 %2183
  %2185 = vrot.lane.b32.xlu0 %v1979, 91
  %v2186 = vpop.permute.xlu0 %2185
  %2187 = vrot.lane.b32.xlu0 %v1980, 91
  %v2188 = vpop.permute.xlu0 %2187
  %2189 = vrot.lane.b32.xlu0 %v1981, 91
  %v2190 = vpop.permute.xlu0 %2189
  %2191 = vrot.lane.b32.xlu0 %v1982, 91
  %v2192 = vpop.permute.xlu0 %2191
  %2193 = vrot.lane.b32.xlu0 %v1983, 91
  %v2194 = vpop.permute.xlu0 %2193
  %2195 = vrot.lane.b32.xlu0 %v1984, 91
  %v2196 = vpop.permute.xlu0 %2195
  %2197 = vrot.lane.b32.xlu0 %v1985, 91
  %v2198 = vpop.permute.xlu0 %2197
  %2199 = vrot.lane.b32.xlu0 %v1986, 91
  %v2200 = vpop.permute.xlu0 %2199
  %2201 = vrot.lane.b32.xlu0 %v1987, 91
  %v2202 = vpop.permute.xlu0 %2201
  %2203 = vrot.lane.b32.xlu0 %v1988, 91
  %v2204 = vpop.permute.xlu0 %2203
  %v2205 = vsel %vm562, %v2150, %v2152
  %v2206 = vsel %vm562, %v2152, %v2154
  %v2207 = vsel %vm562, %v2154, %v2156
  %v2208 = vsel %vm562, %v2156, %v2158
  %v2209 = vsel %vm562, %v2158, %v2160
  %v2210 = vsel %vm562, %v2160, %v2162
  %v2211 = vsel %vm562, %v2164, %v2166
  %v2212 = vsel %vm562, %v2166, %v2168
  %v2213 = vsel %vm562, %v2168, %v2170
  %v2214 = vsel %vm562, %v2170, %v2172
  %v2215 = vsel %vm562, %v2172, %v2174
  %v2216 = vsel %vm562, %v2174, %v2176
  %v2217 = vsel %vm562, %v2178, %v2180
  %v2218 = vsel %vm562, %v2180, %v2182
  %v2219 = vsel %vm562, %v2182, %v2184
  %v2220 = vsel %vm562, %v2184, %v2186
  %v2221 = vsel %vm562, %v2186, %v2188
  %v2222 = vsel %vm562, %v2188, %v2190
  %v2223 = vsel %vm562, %v2192, %v2194
  %v2224 = vsel %vm562, %v2194, %v2196
  %v2225 = vsel %vm562, %v2196, %v2198
  %v2226 = vsel %vm562, %v2198, %v2200
  %v2227 = vsel %vm562, %v2200, %v2202
  %v2228 = vsel %vm562, %v2202, %v2204
  %2229 = vrot.lane.b32.xlu0 %v1961, 90
  %v2230 = vpop.permute.xlu0 %2229
  %2231 = vrot.lane.b32.xlu0 %v1962, 90
  %v2232 = vpop.permute.xlu0 %2231
  %2233 = vrot.lane.b32.xlu0 %v1963, 90
  %v2234 = vpop.permute.xlu0 %2233
  %2235 = vrot.lane.b32.xlu0 %v1964, 90
  %v2236 = vpop.permute.xlu0 %2235
  %2237 = vrot.lane.b32.xlu0 %v1965, 90
  %v2238 = vpop.permute.xlu0 %2237
  %2239 = vrot.lane.b32.xlu0 %v1966, 90
  %v2240 = vpop.permute.xlu0 %2239
  %2241 = vrot.lane.b32.xlu0 %v1967, 90
  %v2242 = vpop.permute.xlu0 %2241
  %2243 = vrot.lane.b32.xlu0 %v1968, 90
  %v2244 = vpop.permute.xlu0 %2243
  %2245 = vrot.lane.b32.xlu0 %v1969, 90
  %v2246 = vpop.permute.xlu0 %2245
  %2247 = vrot.lane.b32.xlu0 %v1970, 90
  %v2248 = vpop.permute.xlu0 %2247
  %2249 = vrot.lane.b32.xlu0 %v1971, 90
  %v2250 = vpop.permute.xlu0 %2249
  %2251 = vrot.lane.b32.xlu0 %v1972, 90
  %v2252 = vpop.permute.xlu0 %2251
  %2253 = vrot.lane.b32.xlu0 %v1973, 90
  %v2254 = vpop.permute.xlu0 %2253
  %2255 = vrot.lane.b32.xlu0 %v1974, 90
  %v2256 = vpop.permute.xlu0 %2255
  %2257 = vrot.lane.b32.xlu0 %v1975, 90
  %v2258 = vpop.permute.xlu0 %2257
  %2259 = vrot.lane.b32.xlu0 %v1976, 90
  %v2260 = vpop.permute.xlu0 %2259
  %2261 = vrot.lane.b32.xlu0 %v1977, 90
  %v2262 = vpop.permute.xlu0 %2261
  %2263 = vrot.lane.b32.xlu0 %v1978, 90
  %v2264 = vpop.permute.xlu0 %2263
  %2265 = vrot.lane.b32.xlu0 %v1979, 90
  %v2266 = vpop.permute.xlu0 %2265
  %2267 = vrot.lane.b32.xlu0 %v1980, 90
  %v2268 = vpop.permute.xlu0 %2267
  %2269 = vrot.lane.b32.xlu0 %v1981, 90
  %v2270 = vpop.permute.xlu0 %2269
  %2271 = vrot.lane.b32.xlu0 %v1982, 90
  %v2272 = vpop.permute.xlu0 %2271
  %2273 = vrot.lane.b32.xlu0 %v1983, 90
  %v2274 = vpop.permute.xlu0 %2273
  %2275 = vrot.lane.b32.xlu0 %v1984, 90
  %v2276 = vpop.permute.xlu0 %2275
  %2277 = vrot.lane.b32.xlu0 %v1985, 90
  %v2278 = vpop.permute.xlu0 %2277
  %2279 = vrot.lane.b32.xlu0 %v1986, 90
  %v2280 = vpop.permute.xlu0 %2279
  %2281 = vrot.lane.b32.xlu0 %v1987, 90
  %v2282 = vpop.permute.xlu0 %2281
  %2283 = vrot.lane.b32.xlu0 %v1988, 90
  %v2284 = vpop.permute.xlu0 %2283
  %v2285 = vsel %vm583, %v2230, %v2232
  %v2286 = vsel %vm583, %v2232, %v2234
  %v2287 = vsel %vm583, %v2234, %v2236
  %v2288 = vsel %vm583, %v2236, %v2238
  %v2289 = vsel %vm583, %v2238, %v2240
  %v2290 = vsel %vm583, %v2240, %v2242
  %v2291 = vsel %vm583, %v2244, %v2246
  %v2292 = vsel %vm583, %v2246, %v2248
  %v2293 = vsel %vm583, %v2248, %v2250
  %v2294 = vsel %vm583, %v2250, %v2252
  %v2295 = vsel %vm583, %v2252, %v2254
  %v2296 = vsel %vm583, %v2254, %v2256
  %v2297 = vsel %vm583, %v2258, %v2260
  %v2298 = vsel %vm583, %v2260, %v2262
  %v2299 = vsel %vm583, %v2262, %v2264
  %v2300 = vsel %vm583, %v2264, %v2266
  %v2301 = vsel %vm583, %v2266, %v2268
  %v2302 = vsel %vm583, %v2268, %v2270
  %v2303 = vsel %vm583, %v2272, %v2274
  %v2304 = vsel %vm583, %v2274, %v2276
  %v2305 = vsel %vm583, %v2276, %v2278
  %v2306 = vsel %vm583, %v2278, %v2280
  %v2307 = vsel %vm583, %v2280, %v2282
  %v2308 = vsel %vm583, %v2282, %v2284
  %v2309 = vld [vmem:[%s5] sm:$0xff]
  %v2310 = vld [vmem:[%s5 + $0x8] sm:$0xff]
  %v2311 = vld [vmem:[%s5 + $0x10] sm:$0xf]
  %v2312 = vld [vmem:[%s6] sm:$0xff]
  %2314 = vset.pattern.permute.xlu0 0
  %2315 = vperm.xlu0 %2314, %v2312
  %v2316 = vpop.permute.xlu0 %2315
  %v2321 = vunpack.c.l.b16 %v2309
  %v2322 = vunpack.c.h.b16 %v2309
  %v2323 = vunpack.c.l.b16 %v2310
  %v2324 = vunpack.c.h.b16 %v2310
  %v2325 = vunpack.c.l.b16 %v2311
  %v2326 = vpack.c.b16 %v2321, %v2321
  %v2327 = vpack.c.b16 %v2322, %v2322
  %v2328 = vpack.c.b16 %v2323, %v2323
  %v2329 = vpack.c.b16 %v2324, %v2324
  %v2330 = vpack.c.b16 %v2325, %v2325
  %2335 = vrot.lane.b32.xlu0 %v1441, 19
  %v2336 = vpop.permute.xlu0 %2335
  %2337 = vrot.lane.b32.xlu0 %v1442, 19
  %v2338 = vpop.permute.xlu0 %2337
  %2339 = vrot.lane.b32.xlu0 %v1443, 19
  %v2340 = vpop.permute.xlu0 %2339
  %2341 = vrot.lane.b32.xlu0 %v1444, 19
  %v2342 = vpop.permute.xlu0 %2341
  %2343 = vrot.lane.b32.xlu0 %v1445, 19
  %v2344 = vpop.permute.xlu0 %2343
  %2345 = vrot.lane.b32.xlu0 %v1446, 19
  %v2346 = vpop.permute.xlu0 %2345
  %2347 = vrot.lane.b32.xlu0 %v1447, 19
  %v2348 = vpop.permute.xlu0 %2347
  %2349 = vrot.lane.b32.xlu0 %v1448, 19
  %v2350 = vpop.permute.xlu0 %2349
  %2351 = vrot.lane.b32.xlu0 %v1449, 19
  %v2352 = vpop.permute.xlu0 %2351
  %2353 = vrot.lane.b32.xlu0 %v1450, 19
  %v2354 = vpop.permute.xlu0 %2353
  %2355 = vrot.lane.b32.xlu0 %v1451, 19
  %v2356 = vpop.permute.xlu0 %2355
  %2357 = vrot.lane.b32.xlu0 %v1452, 19
  %v2358 = vpop.permute.xlu0 %2357
  %2359 = vrot.lane.b32.xlu0 %v1453, 19
  %v2360 = vpop.permute.xlu0 %2359
  %2361 = vrot.lane.b32.xlu0 %v1454, 19
  %v2362 = vpop.permute.xlu0 %2361
  %2363 = vrot.lane.b32.xlu0 %v1455, 19
  %v2364 = vpop.permute.xlu0 %2363
  %2365 = vrot.lane.b32.xlu0 %v1456, 19
  %v2366 = vpop.permute.xlu0 %2365
  %2367 = vrot.lane.b32.xlu0 %v1457, 19
  %v2368 = vpop.permute.xlu0 %2367
  %2369 = vrot.lane.b32.xlu0 %v1458, 19
  %v2370 = vpop.permute.xlu0 %2369
  %2371 = vrot.lane.b32.xlu0 %v1459, 19
  %v2372 = vpop.permute.xlu0 %2371
  %2373 = vrot.lane.b32.xlu0 %v1460, 19
  %v2374 = vpop.permute.xlu0 %2373
  %2375 = vrot.lane.b32.xlu0 %v1461, 19
  %v2376 = vpop.permute.xlu0 %2375
  %2377 = vrot.lane.b32.xlu0 %v1462, 19
  %v2378 = vpop.permute.xlu0 %2377
  %2379 = vrot.lane.b32.xlu0 %v1463, 19
  %v2380 = vpop.permute.xlu0 %2379
  %2381 = vrot.lane.b32.xlu0 %v1464, 19
  %v2382 = vpop.permute.xlu0 %2381
  %2383 = vrot.lane.b32.xlu0 %v1465, 19
  %v2384 = vpop.permute.xlu0 %2383
  %2385 = vrot.lane.b32.xlu0 %v1466, 19
  %v2386 = vpop.permute.xlu0 %2385
  %2387 = vrot.lane.b32.xlu0 %v1467, 19
  %v2388 = vpop.permute.xlu0 %2387
  %2389 = vrot.lane.b32.xlu0 %v1468, 19
  %v2390 = vpop.permute.xlu0 %2389
  %2391 = vrot.lane.b32.xlu0 %v1525, 19
  %v2392 = vpop.permute.xlu0 %2391
  %2393 = vrot.lane.b32.xlu0 %v1526, 19
  %v2394 = vpop.permute.xlu0 %2393
  %2395 = vrot.lane.b32.xlu0 %v1527, 19
  %v2396 = vpop.permute.xlu0 %2395
  %2397 = vrot.lane.b32.xlu0 %v1528, 19
  %v2398 = vpop.permute.xlu0 %2397
  %2399 = vrot.lane.b32.xlu0 %v1529, 19
  %v2400 = vpop.permute.xlu0 %2399
  %2401 = vrot.lane.b32.xlu0 %v1530, 19
  %v2402 = vpop.permute.xlu0 %2401
  %2403 = vrot.lane.b32.xlu0 %v1482, 19
  %v2404 = vpop.permute.xlu0 %2403
  %2405 = vrot.lane.b32.xlu0 %v1531, 19
  %v2406 = vpop.permute.xlu0 %2405
  %2407 = vrot.lane.b32.xlu0 %v1532, 19
  %v2408 = vpop.permute.xlu0 %2407
  %2409 = vrot.lane.b32.xlu0 %v1533, 19
  %v2410 = vpop.permute.xlu0 %2409
  %2411 = vrot.lane.b32.xlu0 %v1534, 19
  %v2412 = vpop.permute.xlu0 %2411
  %2413 = vrot.lane.b32.xlu0 %v1535, 19
  %v2414 = vpop.permute.xlu0 %2413
  %2415 = vrot.lane.b32.xlu0 %v1536, 19
  %v2416 = vpop.permute.xlu0 %2415
  %2417 = vrot.lane.b32.xlu0 %v1496, 19
  %v2418 = vpop.permute.xlu0 %2417
  %2419 = vrot.lane.b32.xlu0 %v1537, 19
  %v2420 = vpop.permute.xlu0 %2419
  %2421 = vrot.lane.b32.xlu0 %v1538, 19
  %v2422 = vpop.permute.xlu0 %2421
  %2423 = vrot.lane.b32.xlu0 %v1539, 19
  %v2424 = vpop.permute.xlu0 %2423
  %2425 = vrot.lane.b32.xlu0 %v1540, 19
  %v2426 = vpop.permute.xlu0 %2425
  %2427 = vrot.lane.b32.xlu0 %v1541, 19
  %v2428 = vpop.permute.xlu0 %2427
  %2429 = vrot.lane.b32.xlu0 %v1542, 19
  %v2430 = vpop.permute.xlu0 %2429
  %2431 = vrot.lane.b32.xlu0 %v1510, 19
  %v2432 = vpop.permute.xlu0 %2431
  %2433 = vrot.lane.b32.xlu0 %v1543, 19
  %v2434 = vpop.permute.xlu0 %2433
  %2435 = vrot.lane.b32.xlu0 %v1544, 19
  %v2436 = vpop.permute.xlu0 %2435
  %2437 = vrot.lane.b32.xlu0 %v1545, 19
  %v2438 = vpop.permute.xlu0 %2437
  %2439 = vrot.lane.b32.xlu0 %v1546, 19
  %v2440 = vpop.permute.xlu0 %2439
  %2441 = vrot.lane.b32.xlu0 %v1547, 19
  %v2442 = vpop.permute.xlu0 %2441
  %2443 = vrot.lane.b32.xlu0 %v1548, 19
  %v2444 = vpop.permute.xlu0 %2443
  %2445 = vrot.lane.b32.xlu0 %v1524, 19
  %v2446 = vpop.permute.xlu0 %2445
  %2447 = vrot.lane.b32.xlu0 %v1605, 19
  %v2448 = vpop.permute.xlu0 %2447
  %2449 = vrot.lane.b32.xlu0 %v1606, 19
  %v2450 = vpop.permute.xlu0 %2449
  %2451 = vrot.lane.b32.xlu0 %v1607, 19
  %v2452 = vpop.permute.xlu0 %2451
  %2453 = vrot.lane.b32.xlu0 %v1608, 19
  %v2454 = vpop.permute.xlu0 %2453
  %2455 = vrot.lane.b32.xlu0 %v1609, 19
  %v2456 = vpop.permute.xlu0 %2455
  %2457 = vrot.lane.b32.xlu0 %v1610, 19
  %v2458 = vpop.permute.xlu0 %2457
  %2459 = vrot.lane.b32.xlu0 %v1562, 19
  %v2460 = vpop.permute.xlu0 %2459
  %2461 = vrot.lane.b32.xlu0 %v1611, 19
  %v2462 = vpop.permute.xlu0 %2461
  %2463 = vrot.lane.b32.xlu0 %v1612, 19
  %v2464 = vpop.permute.xlu0 %2463
  %2465 = vrot.lane.b32.xlu0 %v1613, 19
  %v2466 = vpop.permute.xlu0 %2465
  %2467 = vrot.lane.b32.xlu0 %v1614, 19
  %v2468 = vpop.permute.xlu0 %2467
  %2469 = vrot.lane.b32.xlu0 %v1615, 19
  %v2470 = vpop.permute.xlu0 %2469
  %2471 = vrot.lane.b32.xlu0 %v1616, 19
  %v2472 = vpop.permute.xlu0 %2471
  %2473 = vrot.lane.b32.xlu0 %v1576, 19
  %v2474 = vpop.permute.xlu0 %2473
  %2475 = vrot.lane.b32.xlu0 %v1617, 19
  %v2476 = vpop.permute.xlu0 %2475
  %2477 = vrot.lane.b32.xlu0 %v1618, 19
  %v2478 = vpop.permute.xlu0 %2477
  %2479 = vrot.lane.b32.xlu0 %v1619, 19
  %v2480 = vpop.permute.xlu0 %2479
  %2481 = vrot.lane.b32.xlu0 %v1620, 19
  %v2482 = vpop.permute.xlu0 %2481
  %2483 = vrot.lane.b32.xlu0 %v1621, 19
  %v2484 = vpop.permute.xlu0 %2483
  %2485 = vrot.lane.b32.xlu0 %v1622, 19
  %v2486 = vpop.permute.xlu0 %2485
  %2487 = vrot.lane.b32.xlu0 %v1590, 19
  %v2488 = vpop.permute.xlu0 %2487
  %2489 = vrot.lane.b32.xlu0 %v1623, 19
  %v2490 = vpop.permute.xlu0 %2489
  %2491 = vrot.lane.b32.xlu0 %v1624, 19
  %v2492 = vpop.permute.xlu0 %2491
  %2493 = vrot.lane.b32.xlu0 %v1625, 19
  %v2494 = vpop.permute.xlu0 %2493
  %2495 = vrot.lane.b32.xlu0 %v1626, 19
  %v2496 = vpop.permute.xlu0 %2495
  %2497 = vrot.lane.b32.xlu0 %v1627, 19
  %v2498 = vpop.permute.xlu0 %2497
  %2499 = vrot.lane.b32.xlu0 %v1628, 19
  %v2500 = vpop.permute.xlu0 %2499
  %2501 = vrot.lane.b32.xlu0 %v1604, 19
  %v2502 = vpop.permute.xlu0 %2501
  %2503 = vrot.lane.b32.xlu0 %v1685, 19
  %v2504 = vpop.permute.xlu0 %2503
  %2505 = vrot.lane.b32.xlu0 %v1686, 19
  %v2506 = vpop.permute.xlu0 %2505
  %2507 = vrot.lane.b32.xlu0 %v1687, 19
  %v2508 = vpop.permute.xlu0 %2507
  %2509 = vrot.lane.b32.xlu0 %v1688, 19
  %v2510 = vpop.permute.xlu0 %2509
  %2511 = vrot.lane.b32.xlu0 %v1689, 19
  %v2512 = vpop.permute.xlu0 %2511
  %2513 = vrot.lane.b32.xlu0 %v1690, 19
  %v2514 = vpop.permute.xlu0 %2513
  %2515 = vrot.lane.b32.xlu0 %v1642, 19
  %v2516 = vpop.permute.xlu0 %2515
  %2517 = vrot.lane.b32.xlu0 %v1691, 19
  %v2518 = vpop.permute.xlu0 %2517
  %2519 = vrot.lane.b32.xlu0 %v1692, 19
  %v2520 = vpop.permute.xlu0 %2519
  %2521 = vrot.lane.b32.xlu0 %v1693, 19
  %v2522 = vpop.permute.xlu0 %2521
  %2523 = vrot.lane.b32.xlu0 %v1694, 19
  %v2524 = vpop.permute.xlu0 %2523
  %2525 = vrot.lane.b32.xlu0 %v1695, 19
  %v2526 = vpop.permute.xlu0 %2525
  %2527 = vrot.lane.b32.xlu0 %v1696, 19
  %v2528 = vpop.permute.xlu0 %2527
  %2529 = vrot.lane.b32.xlu0 %v1656, 19
  %v2530 = vpop.permute.xlu0 %2529
  %2531 = vrot.lane.b32.xlu0 %v1697, 19
  %v2532 = vpop.permute.xlu0 %2531
  %2533 = vrot.lane.b32.xlu0 %v1698, 19
  %v2534 = vpop.permute.xlu0 %2533
  %2535 = vrot.lane.b32.xlu0 %v1699, 19
  %v2536 = vpop.permute.xlu0 %2535
  %2537 = vrot.lane.b32.xlu0 %v1700, 19
  %v2538 = vpop.permute.xlu0 %2537
  %2539 = vrot.lane.b32.xlu0 %v1701, 19
  %v2540 = vpop.permute.xlu0 %2539
  %2541 = vrot.lane.b32.xlu0 %v1702, 19
  %v2542 = vpop.permute.xlu0 %2541
  %2543 = vrot.lane.b32.xlu0 %v1670, 19
  %v2544 = vpop.permute.xlu0 %2543
  %2545 = vrot.lane.b32.xlu0 %v1703, 19
  %v2546 = vpop.permute.xlu0 %2545
  %2547 = vrot.lane.b32.xlu0 %v1704, 19
  %v2548 = vpop.permute.xlu0 %2547
  %2549 = vrot.lane.b32.xlu0 %v1705, 19
  %v2550 = vpop.permute.xlu0 %2549
  %2551 = vrot.lane.b32.xlu0 %v1706, 19
  %v2552 = vpop.permute.xlu0 %2551
  %2553 = vrot.lane.b32.xlu0 %v1707, 19
  %v2554 = vpop.permute.xlu0 %2553
  %2555 = vrot.lane.b32.xlu0 %v1708, 19
  %v2556 = vpop.permute.xlu0 %2555
  %2557 = vrot.lane.b32.xlu0 %v1684, 19
  %v2558 = vpop.permute.xlu0 %2557
  %2559 = vrot.lane.b32.xlu0 %v1806, 19
  %v2560 = vpop.permute.xlu0 %2559
  %2561 = vrot.lane.b32.xlu0 %v1853, 19
  %v2562 = vpop.permute.xlu0 %2561
  %2563 = vrot.lane.b32.xlu0 %v1854, 19
  %v2564 = vpop.permute.xlu0 %2563
  %2565 = vrot.lane.b32.xlu0 %v1855, 19
  %v2566 = vpop.permute.xlu0 %2565
  %2567 = vrot.lane.b32.xlu0 %v1856, 19
  %v2568 = vpop.permute.xlu0 %2567
  %2569 = vrot.lane.b32.xlu0 %v1857, 19
  %v2570 = vpop.permute.xlu0 %2569
  %2571 = vrot.lane.b32.xlu0 %v1816, 19
  %v2572 = vpop.permute.xlu0 %2571
  %2573 = vrot.lane.b32.xlu0 %v1818, 19
  %v2574 = vpop.permute.xlu0 %2573
  %2575 = vrot.lane.b32.xlu0 %v1858, 19
  %v2576 = vpop.permute.xlu0 %2575
  %2577 = vrot.lane.b32.xlu0 %v1859, 19
  %v2578 = vpop.permute.xlu0 %2577
  %2579 = vrot.lane.b32.xlu0 %v1860, 19
  %v2580 = vpop.permute.xlu0 %2579
  %2581 = vrot.lane.b32.xlu0 %v1861, 19
  %v2582 = vpop.permute.xlu0 %2581
  %2583 = vrot.lane.b32.xlu0 %v1862, 19
  %v2584 = vpop.permute.xlu0 %2583
  %2585 = vrot.lane.b32.xlu0 %v1828, 19
  %v2586 = vpop.permute.xlu0 %2585
  %2587 = vrot.lane.b32.xlu0 %v1830, 19
  %v2588 = vpop.permute.xlu0 %2587
  %2589 = vrot.lane.b32.xlu0 %v1863, 19
  %v2590 = vpop.permute.xlu0 %2589
  %2591 = vrot.lane.b32.xlu0 %v1864, 19
  %v2592 = vpop.permute.xlu0 %2591
  %2593 = vrot.lane.b32.xlu0 %v1865, 19
  %v2594 = vpop.permute.xlu0 %2593
  %2595 = vrot.lane.b32.xlu0 %v1866, 19
  %v2596 = vpop.permute.xlu0 %2595
  %2597 = vrot.lane.b32.xlu0 %v1867, 19
  %v2598 = vpop.permute.xlu0 %2597
  %2599 = vrot.lane.b32.xlu0 %v1840, 19
  %v2600 = vpop.permute.xlu0 %2599
  %2601 = vrot.lane.b32.xlu0 %v1842, 19
  %v2602 = vpop.permute.xlu0 %2601
  %2603 = vrot.lane.b32.xlu0 %v1868, 19
  %v2604 = vpop.permute.xlu0 %2603
  %2605 = vrot.lane.b32.xlu0 %v1869, 19
  %v2606 = vpop.permute.xlu0 %2605
  %2607 = vrot.lane.b32.xlu0 %v1870, 19
  %v2608 = vpop.permute.xlu0 %2607
  %2609 = vrot.lane.b32.xlu0 %v1871, 19
  %v2610 = vpop.permute.xlu0 %2609
  %2611 = vrot.lane.b32.xlu0 %v1872, 19
  %v2612 = vpop.permute.xlu0 %2611
  %2613 = vrot.lane.b32.xlu0 %v1852, 19
  %v2614 = vpop.permute.xlu0 %2613
  %2615 = vrot.lane.b32.xlu0 %v1990, 19
  %v2616 = vpop.permute.xlu0 %2615
  %2617 = vrot.lane.b32.xlu0 %v2045, 19
  %v2618 = vpop.permute.xlu0 %2617
  %2619 = vrot.lane.b32.xlu0 %v2046, 19
  %v2620 = vpop.permute.xlu0 %2619
  %2621 = vrot.lane.b32.xlu0 %v2047, 19
  %v2622 = vpop.permute.xlu0 %2621
  %2623 = vrot.lane.b32.xlu0 %v2048, 19
  %v2624 = vpop.permute.xlu0 %2623
  %2625 = vrot.lane.b32.xlu0 %v2049, 19
  %v2626 = vpop.permute.xlu0 %2625
  %2627 = vrot.lane.b32.xlu0 %v2050, 19
  %v2628 = vpop.permute.xlu0 %2627
  %2629 = vrot.lane.b32.xlu0 %v2004, 19
  %v2630 = vpop.permute.xlu0 %2629
  %2631 = vrot.lane.b32.xlu0 %v2051, 19
  %v2632 = vpop.permute.xlu0 %2631
  %2633 = vrot.lane.b32.xlu0 %v2052, 19
  %v2634 = vpop.permute.xlu0 %2633
  %2635 = vrot.lane.b32.xlu0 %v2053, 19
  %v2636 = vpop.permute.xlu0 %2635
  %2637 = vrot.lane.b32.xlu0 %v2054, 19
  %v2638 = vpop.permute.xlu0 %2637
  %2639 = vrot.lane.b32.xlu0 %v2055, 19
  %v2640 = vpop.permute.xlu0 %2639
  %2641 = vrot.lane.b32.xlu0 %v2056, 19
  %v2642 = vpop.permute.xlu0 %2641
  %2643 = vrot.lane.b32.xlu0 %v2018, 19
  %v2644 = vpop.permute.xlu0 %2643
  %2645 = vrot.lane.b32.xlu0 %v2057, 19
  %v2646 = vpop.permute.xlu0 %2645
  %2647 = vrot.lane.b32.xlu0 %v2058, 19
  %v2648 = vpop.permute.xlu0 %2647
  %2649 = vrot.lane.b32.xlu0 %v2059, 19
  %v2650 = vpop.permute.xlu0 %2649
  %2651 = vrot.lane.b32.xlu0 %v2060, 19
  %v2652 = vpop.permute.xlu0 %2651
  %2653 = vrot.lane.b32.xlu0 %v2061, 19
  %v2654 = vpop.permute.xlu0 %2653
  %2655 = vrot.lane.b32.xlu0 %v2062, 19
  %v2656 = vpop.permute.xlu0 %2655
  %2657 = vrot.lane.b32.xlu0 %v2032, 19
  %v2658 = vpop.permute.xlu0 %2657
  %2659 = vrot.lane.b32.xlu0 %v2063, 19
  %v2660 = vpop.permute.xlu0 %2659
  %2661 = vrot.lane.b32.xlu0 %v2064, 19
  %v2662 = vpop.permute.xlu0 %2661
  %2663 = vrot.lane.b32.xlu0 %v2065, 19
  %v2664 = vpop.permute.xlu0 %2663
  %2665 = vrot.lane.b32.xlu0 %v2066, 19
  %v2666 = vpop.permute.xlu0 %2665
  %2667 = vrot.lane.b32.xlu0 %v2067, 19
  %v2668 = vpop.permute.xlu0 %2667
  %2669 = vrot.lane.b32.xlu0 %v2068, 19
  %v2670 = vpop.permute.xlu0 %2669
  %2671 = vrot.lane.b32.xlu0 %v2070, 19
  %v2672 = vpop.permute.xlu0 %2671
  %2673 = vrot.lane.b32.xlu0 %v2125, 19
  %v2674 = vpop.permute.xlu0 %2673
  %2675 = vrot.lane.b32.xlu0 %v2126, 19
  %v2676 = vpop.permute.xlu0 %2675
  %2677 = vrot.lane.b32.xlu0 %v2127, 19
  %v2678 = vpop.permute.xlu0 %2677
  %2679 = vrot.lane.b32.xlu0 %v2128, 19
  %v2680 = vpop.permute.xlu0 %2679
  %2681 = vrot.lane.b32.xlu0 %v2129, 19
  %v2682 = vpop.permute.xlu0 %2681
  %2683 = vrot.lane.b32.xlu0 %v2130, 19
  %v2684 = vpop.permute.xlu0 %2683
  %2685 = vrot.lane.b32.xlu0 %v2084, 19
  %v2686 = vpop.permute.xlu0 %2685
  %2687 = vrot.lane.b32.xlu0 %v2131, 19
  %v2688 = vpop.permute.xlu0 %2687
  %2689 = vrot.lane.b32.xlu0 %v2132, 19
  %v2690 = vpop.permute.xlu0 %2689
  %2691 = vrot.lane.b32.xlu0 %v2133, 19
  %v2692 = vpop.permute.xlu0 %2691
  %2693 = vrot.lane.b32.xlu0 %v2134, 19
  %v2694 = vpop.permute.xlu0 %2693
  %2695 = vrot.lane.b32.xlu0 %v2135, 19
  %v2696 = vpop.permute.xlu0 %2695
  %2697 = vrot.lane.b32.xlu0 %v2136, 19
  %v2698 = vpop.permute.xlu0 %2697
  %2699 = vrot.lane.b32.xlu0 %v2098, 19
  %v2700 = vpop.permute.xlu0 %2699
  %2701 = vrot.lane.b32.xlu0 %v2137, 19
  %v2702 = vpop.permute.xlu0 %2701
  %2703 = vrot.lane.b32.xlu0 %v2138, 19
  %v2704 = vpop.permute.xlu0 %2703
  %2705 = vrot.lane.b32.xlu0 %v2139, 19
  %v2706 = vpop.permute.xlu0 %2705
  %2707 = vrot.lane.b32.xlu0 %v2140, 19
  %v2708 = vpop.permute.xlu0 %2707
  %2709 = vrot.lane.b32.xlu0 %v2141, 19
  %v2710 = vpop.permute.xlu0 %2709
  %2711 = vrot.lane.b32.xlu0 %v2142, 19
  %v2712 = vpop.permute.xlu0 %2711
  %2713 = vrot.lane.b32.xlu0 %v2112, 19
  %v2714 = vpop.permute.xlu0 %2713
  %2715 = vrot.lane.b32.xlu0 %v2143, 19
  %v2716 = vpop.permute.xlu0 %2715
  %2717 = vrot.lane.b32.xlu0 %v2144, 19
  %v2718 = vpop.permute.xlu0 %2717
  %2719 = vrot.lane.b32.xlu0 %v2145, 19
  %v2720 = vpop.permute.xlu0 %2719
  %2721 = vrot.lane.b32.xlu0 %v2146, 19
  %v2722 = vpop.permute.xlu0 %2721
  %2723 = vrot.lane.b32.xlu0 %v2147, 19
  %v2724 = vpop.permute.xlu0 %2723
  %2725 = vrot.lane.b32.xlu0 %v2148, 19
  %v2726 = vpop.permute.xlu0 %2725
  %2727 = vrot.lane.b32.xlu0 %v2150, 19
  %v2728 = vpop.permute.xlu0 %2727
  %2729 = vrot.lane.b32.xlu0 %v2205, 19
  %v2730 = vpop.permute.xlu0 %2729
  %2731 = vrot.lane.b32.xlu0 %v2206, 19
  %v2732 = vpop.permute.xlu0 %2731
  %2733 = vrot.lane.b32.xlu0 %v2207, 19
  %v2734 = vpop.permute.xlu0 %2733
  %2735 = vrot.lane.b32.xlu0 %v2208, 19
  %v2736 = vpop.permute.xlu0 %2735
  %2737 = vrot.lane.b32.xlu0 %v2209, 19
  %v2738 = vpop.permute.xlu0 %2737
  %2739 = vrot.lane.b32.xlu0 %v2210, 19
  %v2740 = vpop.permute.xlu0 %2739
  %2741 = vrot.lane.b32.xlu0 %v2164, 19
  %v2742 = vpop.permute.xlu0 %2741
  %2743 = vrot.lane.b32.xlu0 %v2211, 19
  %v2744 = vpop.permute.xlu0 %2743
  %2745 = vrot.lane.b32.xlu0 %v2212, 19
  %v2746 = vpop.permute.xlu0 %2745
  %2747 = vrot.lane.b32.xlu0 %v2213, 19
  %v2748 = vpop.permute.xlu0 %2747
  %2749 = vrot.lane.b32.xlu0 %v2214, 19
  %v2750 = vpop.permute.xlu0 %2749
  %2751 = vrot.lane.b32.xlu0 %v2215, 19
  %v2752 = vpop.permute.xlu0 %2751
  %2753 = vrot.lane.b32.xlu0 %v2216, 19
  %v2754 = vpop.permute.xlu0 %2753
  %2755 = vrot.lane.b32.xlu0 %v2178, 19
  %v2756 = vpop.permute.xlu0 %2755
  %2757 = vrot.lane.b32.xlu0 %v2217, 19
  %v2758 = vpop.permute.xlu0 %2757
  %2759 = vrot.lane.b32.xlu0 %v2218, 19
  %v2760 = vpop.permute.xlu0 %2759
  %2761 = vrot.lane.b32.xlu0 %v2219, 19
  %v2762 = vpop.permute.xlu0 %2761
  %2763 = vrot.lane.b32.xlu0 %v2220, 19
  %v2764 = vpop.permute.xlu0 %2763
  %2765 = vrot.lane.b32.xlu0 %v2221, 19
  %v2766 = vpop.permute.xlu0 %2765
  %2767 = vrot.lane.b32.xlu0 %v2222, 19
  %v2768 = vpop.permute.xlu0 %2767
  %2769 = vrot.lane.b32.xlu0 %v2192, 19
  %v2770 = vpop.permute.xlu0 %2769
  %2771 = vrot.lane.b32.xlu0 %v2223, 19
  %v2772 = vpop.permute.xlu0 %2771
  %2773 = vrot.lane.b32.xlu0 %v2224, 19
  %v2774 = vpop.permute.xlu0 %2773
  %2775 = vrot.lane.b32.xlu0 %v2225, 19
  %v2776 = vpop.permute.xlu0 %2775
  %2777 = vrot.lane.b32.xlu0 %v2226, 19
  %v2778 = vpop.permute.xlu0 %2777
  %2779 = vrot.lane.b32.xlu0 %v2227, 19
  %v2780 = vpop.permute.xlu0 %2779
  %2781 = vrot.lane.b32.xlu0 %v2228, 19
  %v2782 = vpop.permute.xlu0 %2781
  %2783 = vrot.lane.b32.xlu0 %v2230, 19
  %v2784 = vpop.permute.xlu0 %2783
  %2785 = vrot.lane.b32.xlu0 %v2285, 19
  %v2786 = vpop.permute.xlu0 %2785
  %2787 = vrot.lane.b32.xlu0 %v2286, 19
  %v2788 = vpop.permute.xlu0 %2787
  %2789 = vrot.lane.b32.xlu0 %v2287, 19
  %v2790 = vpop.permute.xlu0 %2789
  %2791 = vrot.lane.b32.xlu0 %v2288, 19
  %v2792 = vpop.permute.xlu0 %2791
  %2793 = vrot.lane.b32.xlu0 %v2289, 19
  %v2794 = vpop.permute.xlu0 %2793
  %2795 = vrot.lane.b32.xlu0 %v2290, 19
  %v2796 = vpop.permute.xlu0 %2795
  %2797 = vrot.lane.b32.xlu0 %v2244, 19
  %v2798 = vpop.permute.xlu0 %2797
  %2799 = vrot.lane.b32.xlu0 %v2291, 19
  %v2800 = vpop.permute.xlu0 %2799
  %2801 = vrot.lane.b32.xlu0 %v2292, 19
  %v2802 = vpop.permute.xlu0 %2801
  %2803 = vrot.lane.b32.xlu0 %v2293, 19
  %v2804 = vpop.permute.xlu0 %2803
  %2805 = vrot.lane.b32.xlu0 %v2294, 19
  %v2806 = vpop.permute.xlu0 %2805
  %2807 = vrot.lane.b32.xlu0 %v2295, 19
  %v2808 = vpop.permute.xlu0 %2807
  %2809 = vrot.lane.b32.xlu0 %v2296, 19
  %v2810 = vpop.permute.xlu0 %2809
  %2811 = vrot.lane.b32.xlu0 %v2258, 19
  %v2812 = vpop.permute.xlu0 %2811
  %2813 = vrot.lane.b32.xlu0 %v2297, 19
  %v2814 = vpop.permute.xlu0 %2813
  %2815 = vrot.lane.b32.xlu0 %v2298, 19
  %v2816 = vpop.permute.xlu0 %2815
  %2817 = vrot.lane.b32.xlu0 %v2299, 19
  %v2818 = vpop.permute.xlu0 %2817
  %2819 = vrot.lane.b32.xlu0 %v2300, 19
  %v2820 = vpop.permute.xlu0 %2819
  %2821 = vrot.lane.b32.xlu0 %v2301, 19
  %v2822 = vpop.permute.xlu0 %2821
  %2823 = vrot.lane.b32.xlu0 %v2302, 19
  %v2824 = vpop.permute.xlu0 %2823
  %2825 = vrot.lane.b32.xlu0 %v2272, 19
  %v2826 = vpop.permute.xlu0 %2825
  %2827 = vrot.lane.b32.xlu0 %v2303, 19
  %v2828 = vpop.permute.xlu0 %2827
  %2829 = vrot.lane.b32.xlu0 %v2304, 19
  %v2830 = vpop.permute.xlu0 %2829
  %2831 = vrot.lane.b32.xlu0 %v2305, 19
  %v2832 = vpop.permute.xlu0 %2831
  %2833 = vrot.lane.b32.xlu0 %v2306, 19
  %v2834 = vpop.permute.xlu0 %2833
  %2835 = vrot.lane.b32.xlu0 %v2307, 19
  %v2836 = vpop.permute.xlu0 %2835
  %2837 = vrot.lane.b32.xlu0 %v2308, 19
  %v2838 = vpop.permute.xlu0 %2837
  %v2839 = vsel %vm849, %v2336, %v2338
  %v2840 = vsel %vm849, %v2338, %v2340
  %v2841 = vsel %vm849, %v2340, %v2342
  %v2842 = vsel %vm849, %v2342, %v2344
  %v2843 = vsel %vm849, %v2344, %v2346
  %v2844 = vsel %vm849, %v2346, %v2348
  %v2845 = vsel %vm849, %v2350, %v2352
  %v2846 = vsel %vm849, %v2352, %v2354
  %v2847 = vsel %vm849, %v2354, %v2356
  %v2848 = vsel %vm849, %v2356, %v2358
  %v2849 = vsel %vm849, %v2358, %v2360
  %v2850 = vsel %vm849, %v2360, %v2362
  %v2851 = vsel %vm849, %v2364, %v2366
  %v2852 = vsel %vm849, %v2366, %v2368
  %v2853 = vsel %vm849, %v2368, %v2370
  %v2854 = vsel %vm849, %v2370, %v2372
  %v2855 = vsel %vm849, %v2372, %v2374
  %v2856 = vsel %vm849, %v2374, %v2376
  %v2857 = vsel %vm849, %v2378, %v2380
  %v2858 = vsel %vm849, %v2380, %v2382
  %v2859 = vsel %vm849, %v2382, %v2384
  %v2860 = vsel %vm849, %v2384, %v2386
  %v2861 = vsel %vm849, %v2386, %v2388
  %v2862 = vsel %vm849, %v2388, %v2390
  %v2863 = vsel %vm849, %v2392, %v2394
  %v2864 = vsel %vm849, %v2394, %v2396
  %v2865 = vsel %vm849, %v2396, %v2398
  %v2866 = vsel %vm849, %v2398, %v2400
  %v2867 = vsel %vm849, %v2400, %v2402
  %v2868 = vsel %vm849, %v2402, %v2404
  %v2869 = vsel %vm849, %v2406, %v2408
  %v2870 = vsel %vm849, %v2408, %v2410
  %v2871 = vsel %vm849, %v2410, %v2412
  %v2872 = vsel %vm849, %v2412, %v2414
  %v2873 = vsel %vm849, %v2414, %v2416
  %v2874 = vsel %vm849, %v2416, %v2418
  %v2875 = vsel %vm849, %v2420, %v2422
  %v2876 = vsel %vm849, %v2422, %v2424
  %v2877 = vsel %vm849, %v2424, %v2426
  %v2878 = vsel %vm849, %v2426, %v2428
  %v2879 = vsel %vm849, %v2428, %v2430
  %v2880 = vsel %vm849, %v2430, %v2432
  %v2881 = vsel %vm849, %v2434, %v2436
  %v2882 = vsel %vm849, %v2436, %v2438
  %v2883 = vsel %vm849, %v2438, %v2440
  %v2884 = vsel %vm849, %v2440, %v2442
  %v2885 = vsel %vm849, %v2442, %v2444
  %v2886 = vsel %vm849, %v2444, %v2446
  %v2887 = vsel %vm849, %v2448, %v2450
  %v2888 = vsel %vm849, %v2450, %v2452
  %v2889 = vsel %vm849, %v2452, %v2454
  %v2890 = vsel %vm849, %v2454, %v2456
  %v2891 = vsel %vm849, %v2456, %v2458
  %v2892 = vsel %vm849, %v2458, %v2460
  %v2893 = vsel %vm849, %v2462, %v2464
  %v2894 = vsel %vm849, %v2464, %v2466
  %v2895 = vsel %vm849, %v2466, %v2468
  %v2896 = vsel %vm849, %v2468, %v2470
  %v2897 = vsel %vm849, %v2470, %v2472
  %v2898 = vsel %vm849, %v2472, %v2474
  %v2899 = vsel %vm849, %v2476, %v2478
  %v2900 = vsel %vm849, %v2478, %v2480
  %v2901 = vsel %vm849, %v2480, %v2482
  %v2902 = vsel %vm849, %v2482, %v2484
  %v2903 = vsel %vm849, %v2484, %v2486
  %v2904 = vsel %vm849, %v2486, %v2488
  %v2905 = vsel %vm849, %v2490, %v2492
  %v2906 = vsel %vm849, %v2492, %v2494
  %v2907 = vsel %vm849, %v2494, %v2496
  %v2908 = vsel %vm849, %v2496, %v2498
  %v2909 = vsel %vm849, %v2498, %v2500
  %v2910 = vsel %vm849, %v2500, %v2502
  %v2911 = vsel %vm849, %v2504, %v2506
  %v2912 = vsel %vm849, %v2506, %v2508
  %v2913 = vsel %vm849, %v2508, %v2510
  %v2914 = vsel %vm849, %v2510, %v2512
  %v2915 = vsel %vm849, %v2512, %v2514
  %v2916 = vsel %vm849, %v2514, %v2516
  %v2917 = vsel %vm849, %v2518, %v2520
  %v2918 = vsel %vm849, %v2520, %v2522
  %v2919 = vsel %vm849, %v2522, %v2524
  %v2920 = vsel %vm849, %v2524, %v2526
  %v2921 = vsel %vm849, %v2526, %v2528
  %v2922 = vsel %vm849, %v2528, %v2530
  %v2923 = vsel %vm849, %v2532, %v2534
  %v2924 = vsel %vm849, %v2534, %v2536
  %v2925 = vsel %vm849, %v2536, %v2538
  %v2926 = vsel %vm849, %v2538, %v2540
  %v2927 = vsel %vm849, %v2540, %v2542
  %v2928 = vsel %vm849, %v2542, %v2544
  %v2929 = vsel %vm849, %v2546, %v2548
  %v2930 = vsel %vm849, %v2548, %v2550
  %v2931 = vsel %vm849, %v2550, %v2552
  %v2932 = vsel %vm849, %v2552, %v2554
  %v2933 = vsel %vm849, %v2554, %v2556
  %v2934 = vsel %vm849, %v2556, %v2558
  %v2935 = vsel %vm849, %v2560, %v2562
  %v2936 = vsel %vm849, %v2562, %v2564
  %v2937 = vsel %vm849, %v2564, %v2566
  %v2938 = vsel %vm849, %v2566, %v2568
  %v2939 = vsel %vm849, %v2568, %v2570
  %v2940 = vsel %vm849, %v2570, %v2572
  %v2941 = vsel %vm849, %v2574, %v2576
  %v2942 = vsel %vm849, %v2576, %v2578
  %v2943 = vsel %vm849, %v2578, %v2580
  %v2944 = vsel %vm849, %v2580, %v2582
  %v2945 = vsel %vm849, %v2582, %v2584
  %v2946 = vsel %vm849, %v2584, %v2586
  %v2947 = vsel %vm849, %v2588, %v2590
  %v2948 = vsel %vm849, %v2590, %v2592
  %v2949 = vsel %vm849, %v2592, %v2594
  %v2950 = vsel %vm849, %v2594, %v2596
  %v2951 = vsel %vm849, %v2596, %v2598
  %v2952 = vsel %vm849, %v2598, %v2600
  %v2953 = vsel %vm849, %v2602, %v2604
  %v2954 = vsel %vm849, %v2604, %v2606
  %v2955 = vsel %vm849, %v2606, %v2608
  %v2956 = vsel %vm849, %v2608, %v2610
  %v2957 = vsel %vm849, %v2610, %v2612
  %v2958 = vsel %vm849, %v2612, %v2614
  %v2959 = vsel %vm849, %v2616, %v2618
  %v2960 = vsel %vm849, %v2618, %v2620
  %v2961 = vsel %vm849, %v2620, %v2622
  %v2962 = vsel %vm849, %v2622, %v2624
  %v2963 = vsel %vm849, %v2624, %v2626
  %v2964 = vsel %vm849, %v2626, %v2628
  %v2965 = vsel %vm849, %v2630, %v2632
  %v2966 = vsel %vm849, %v2632, %v2634
  %v2967 = vsel %vm849, %v2634, %v2636
  %v2968 = vsel %vm849, %v2636, %v2638
  %v2969 = vsel %vm849, %v2638, %v2640
  %v2970 = vsel %vm849, %v2640, %v2642
  %v2971 = vsel %vm849, %v2644, %v2646
  %v2972 = vsel %vm849, %v2646, %v2648
  %v2973 = vsel %vm849, %v2648, %v2650
  %v2974 = vsel %vm849, %v2650, %v2652
  %v2975 = vsel %vm849, %v2652, %v2654
  %v2976 = vsel %vm849, %v2654, %v2656
  %v2977 = vsel %vm849, %v2658, %v2660
  %v2978 = vsel %vm849, %v2660, %v2662
  %v2979 = vsel %vm849, %v2662, %v2664
  %v2980 = vsel %vm849, %v2664, %v2666
  %v2981 = vsel %vm849, %v2666, %v2668
  %v2982 = vsel %vm849, %v2668, %v2670
  %v2983 = vsel %vm849, %v2672, %v2674
  %v2984 = vsel %vm849, %v2674, %v2676
  %v2985 = vsel %vm849, %v2676, %v2678
  %v2986 = vsel %vm849, %v2678, %v2680
  %v2987 = vsel %vm849, %v2680, %v2682
  %v2988 = vsel %vm849, %v2682, %v2684
  %v2989 = vsel %vm849, %v2686, %v2688
  %v2990 = vsel %vm849, %v2688, %v2690
  %v2991 = vsel %vm849, %v2690, %v2692
  %v2992 = vsel %vm849, %v2692, %v2694
  %v2993 = vsel %vm849, %v2694, %v2696
  %v2994 = vsel %vm849, %v2696, %v2698
  %v2995 = vsel %vm849, %v2700, %v2702
  %v2996 = vsel %vm849, %v2702, %v2704
  %v2997 = vsel %vm849, %v2704, %v2706
  %v2998 = vsel %vm849, %v2706, %v2708
  %v2999 = vsel %vm849, %v2708, %v2710
  %v3000 = vsel %vm849, %v2710, %v2712
  %v3001 = vsel %vm849, %v2714, %v2716
  %v3002 = vsel %vm849, %v2716, %v2718
  %v3003 = vsel %vm849, %v2718, %v2720
  %v3004 = vsel %vm849, %v2720, %v2722
  %v3005 = vsel %vm849, %v2722, %v2724
  %v3006 = vsel %vm849, %v2724, %v2726
  %v3007 = vsel %vm849, %v2728, %v2730
  %v3008 = vsel %vm849, %v2730, %v2732
  %v3009 = vsel %vm849, %v2732, %v2734
  %v3010 = vsel %vm849, %v2734, %v2736
  %v3011 = vsel %vm849, %v2736, %v2738
  %v3012 = vsel %vm849, %v2738, %v2740
  %v3013 = vsel %vm849, %v2742, %v2744
  %v3014 = vsel %vm849, %v2744, %v2746
  %v3015 = vsel %vm849, %v2746, %v2748
  %v3016 = vsel %vm849, %v2748, %v2750
  %v3017 = vsel %vm849, %v2750, %v2752
  %v3018 = vsel %vm849, %v2752, %v2754
  %v3019 = vsel %vm849, %v2756, %v2758
  %v3020 = vsel %vm849, %v2758, %v2760
  %v3021 = vsel %vm849, %v2760, %v2762
  %v3022 = vsel %vm849, %v2762, %v2764
  %v3023 = vsel %vm849, %v2764, %v2766
  %v3024 = vsel %vm849, %v2766, %v2768
  %v3025 = vsel %vm849, %v2770, %v2772
  %v3026 = vsel %vm849, %v2772, %v2774
  %v3027 = vsel %vm849, %v2774, %v2776
  %v3028 = vsel %vm849, %v2776, %v2778
  %v3029 = vsel %vm849, %v2778, %v2780
  %v3030 = vsel %vm849, %v2780, %v2782
  %v3031 = vsel %vm849, %v2784, %v2786
  %v3032 = vsel %vm849, %v2786, %v2788
  %v3033 = vsel %vm849, %v2788, %v2790
  %v3034 = vsel %vm849, %v2790, %v2792
  %v3035 = vsel %vm849, %v2792, %v2794
  %v3036 = vsel %vm849, %v2794, %v2796
  %v3037 = vsel %vm849, %v2798, %v2800
  %v3038 = vsel %vm849, %v2800, %v2802
  %v3039 = vsel %vm849, %v2802, %v2804
  %v3040 = vsel %vm849, %v2804, %v2806
  %v3041 = vsel %vm849, %v2806, %v2808
  %v3042 = vsel %vm849, %v2808, %v2810
  %v3043 = vsel %vm849, %v2812, %v2814
  %v3044 = vsel %vm849, %v2814, %v2816
  %v3045 = vsel %vm849, %v2816, %v2818
  %v3046 = vsel %vm849, %v2818, %v2820
  %v3047 = vsel %vm849, %v2820, %v2822
  %v3048 = vsel %vm849, %v2822, %v2824
  %v3049 = vsel %vm849, %v2826, %v2828
  %v3050 = vsel %vm849, %v2828, %v2830
  %v3051 = vsel %vm849, %v2830, %v2832
  %v3052 = vsel %vm849, %v2832, %v2834
  %v3053 = vsel %vm849, %v2834, %v2836
  %v3054 = vsel %vm849, %v2836, %v2838
  %vm3271 = vcmask 523264
  %v3273 = vsel %vm3271, %v2330, 0
  %3275 = vmatpush.bf16.msra.mxu0 %v2881
  %3276 = vmatpush.bf16.msra.mxu0 %v2875
  %3277 = vmatpush.bf16.msra.mxu0 %v2869
  %3278 = vmatpush.bf16.msra.mxu0 %v2863
  %3279 = vmatpush.bf16.msra.mxu0 %v2857
  %3280 = vmatpush.bf16.msra.mxu0 %v2851
  %3281 = vmatpush.bf16.msra.mxu0 %v2845
  %3282 = vmatpush.bf16.msra.mxu0 %v2839
  %3283 = vmatmul.bf16.gmra.mxu0 %v2326
  %v3284 = vpop.f32.mrf.mxu0
  %v3285 = vadd.f32 %v2316, %v3284
  %v3286 = vpop.f32.mrf.mxu0
  %3287 = vdwg.mxu0
  %3288 = vmatpush.bf16.msra.mxu0 %v2929
  %3289 = vmatpush.bf16.msra.mxu0 %v2923
  %3290 = vmatpush.bf16.msra.mxu0 %v2917
  %3291 = vmatpush.bf16.msra.mxu0 %v2911
  %3292 = vmatpush.bf16.msra.mxu0 %v2905
  %3293 = vmatpush.bf16.msra.mxu0 %v2899
  %3294 = vmatpush.bf16.msra.mxu0 %v2893
  %3295 = vmatpush.bf16.msra.mxu0 %v2887
  %3296 = vmatmul.bf16.gmra.mxu0 %v2327
  %v3297 = vpop.f32.mrf.mxu0
  %v3298 = vadd.f32 %v3285, %v3297
  %v3299 = vpop.f32.mrf.mxu0
  %3300 = vdwg.mxu0
  %3301 = vmatpush.bf16.msra.mxu0 %v2977
  %3302 = vmatpush.bf16.msra.mxu0 %v2971
  %3303 = vmatpush.bf16.msra.mxu0 %v2965
  %3304 = vmatpush.bf16.msra.mxu0 %v2959
  %3305 = vmatpush.bf16.msra.mxu0 %v2953
  %3306 = vmatpush.bf16.msra.mxu0 %v2947
  %3307 = vmatpush.bf16.msra.mxu0 %v2941
  %3308 = vmatpush.bf16.msra.mxu0 %v2935
  %3309 = vmatmul.bf16.gmra.mxu0 %v2328
  %v3310 = vpop.f32.mrf.mxu0
  %v3311 = vadd.f32 %v3298, %v3310
  %v3312 = vpop.f32.mrf.mxu0
  %3313 = vdwg.mxu0
  %3314 = vmatpush.bf16.msra.mxu0 %v3025
  %3315 = vmatpush.bf16.msra.mxu0 %v3019
  %3316 = vmatpush.bf16.msra.mxu0 %v3013
  %3317 = vmatpush.bf16.msra.mxu0 %v3007
  %3318 = vmatpush.bf16.msra.mxu0 %v3001
  %3319 = vmatpush.bf16.msra.mxu0 %v2995
  %3320 = vmatpush.bf16.msra.mxu0 %v2989
  %3321 = vmatpush.bf16.msra.mxu0 %v2983
  %3322 = vmatmul.bf16.gmra.mxu0 %v2329
  %v3323 = vpop.f32.mrf.mxu0
  %v3324 = vadd.f32 %v3311, %v3323
  %v3325 = vpop.f32.mrf.mxu0
  %3326 = vdwg.mxu0
  %3327 = vmatpush.bf16.msra.mxu0 0
  %3328 = vmatpush.bf16.msra.mxu0 0
  %3329 = vmatpush.bf16.msra.mxu0 0
  %3330 = vmatpush.bf16.msra.mxu0 0
  %3331 = vmatpush.bf16.msra.mxu0 %v3049
  %3332 = vmatpush.bf16.msra.mxu0 %v3043
  %3333 = vmatpush.bf16.msra.mxu0 %v3037
  %3334 = vmatpush.bf16.msra.mxu0 %v3031
  %3335 = vmatmul.bf16.gmra.mxu0 %v3273
  %v3336 = vpop.f32.mrf.mxu0
  %v3337 = vadd.f32 %v3324, %v3336
  %v3338 = vpop.f32.mrf.mxu0
  %3339 = vdwg.mxu0
  %3340 = vmatpush.bf16.msra.mxu0 %v2882
  %3341 = vmatpush.bf16.msra.mxu0 %v2876
  %3342 = vmatpush.bf16.msra.mxu0 %v2870
  %3343 = vmatpush.bf16.msra.mxu0 %v2864
  %3344 = vmatpush.bf16.msra.mxu0 %v2858
  %3345 = vmatpush.bf16.msra.mxu0 %v2852
  %3346 = vmatpush.bf16.msra.mxu0 %v2846
  %3347 = vmatpush.bf16.msra.mxu0 %v2840
  %3348 = vmatmul.bf16.gmra.mxu0 %v2326
  %v3349 = vpop.f32.mrf.mxu0
  %v3350 = vadd.f32 %v2316, %v3349
  %v3351 = vpop.f32.mrf.mxu0
  %3352 = vdwg.mxu0
  %3353 = vmatpush.bf16.msra.mxu0 %v2930
  %3354 = vmatpush.bf16.msra.mxu0 %v2924
  %3355 = vmatpush.bf16.msra.mxu0 %v2918
  %3356 = vmatpush.bf16.msra.mxu0 %v2912
  %3357 = vmatpush.bf16.msra.mxu0 %v2906
  %3358 = vmatpush.bf16.msra.mxu0 %v2900
  %3359 = vmatpush.bf16.msra.mxu0 %v2894
  %3360 = vmatpush.bf16.msra.mxu0 %v2888
  %3361 = vmatmul.bf16.gmra.mxu0 %v2327
  %v3362 = vpop.f32.mrf.mxu0
  %v3363 = vadd.f32 %v3350, %v3362
  %v3364 = vpop.f32.mrf.mxu0
  %3365 = vdwg.mxu0
  %3366 = vmatpush.bf16.msra.mxu0 %v2978
  %3367 = vmatpush.bf16.msra.mxu0 %v2972
  %3368 = vmatpush.bf16.msra.mxu0 %v2966
  %3369 = vmatpush.bf16.msra.mxu0 %v2960
  %3370 = vmatpush.bf16.msra.mxu0 %v2954
  %3371 = vmatpush.bf16.msra.mxu0 %v2948
  %3372 = vmatpush.bf16.msra.mxu0 %v2942
  %3373 = vmatpush.bf16.msra.mxu0 %v2936
  %3374 = vmatmul.bf16.gmra.mxu0 %v2328
  %v3375 = vpop.f32.mrf.mxu0
  %v3376 = vadd.f32 %v3363, %v3375
  %v3377 = vpop.f32.mrf.mxu0
  %3378 = vdwg.mxu0
  %3379 = vmatpush.bf16.msra.mxu0 %v3026
  %3380 = vmatpush.bf16.msra.mxu0 %v3020
  %3381 = vmatpush.bf16.msra.mxu0 %v3014
  %3382 = vmatpush.bf16.msra.mxu0 %v3008
  %3383 = vmatpush.bf16.msra.mxu0 %v3002
  %3384 = vmatpush.bf16.msra.mxu0 %v2996
  %3385 = vmatpush.bf16.msra.mxu0 %v2990
  %3386 = vmatpush.bf16.msra.mxu0 %v2984
  %3387 = vmatmul.bf16.gmra.mxu0 %v2329
  %v3388 = vpop.f32.mrf.mxu0
  %v3389 = vadd.f32 %v3376, %v3388
  %v3390 = vpop.f32.mrf.mxu0
  %3391 = vdwg.mxu0
  %3392 = vmatpush.bf16.msra.mxu0 0
  %3393 = vmatpush.bf16.msra.mxu0 0
  %3394 = vmatpush.bf16.msra.mxu0 0
  %3395 = vmatpush.bf16.msra.mxu0 0
  %3396 = vmatpush.bf16.msra.mxu0 %v3050
  %3397 = vmatpush.bf16.msra.mxu0 %v3044
  %3398 = vmatpush.bf16.msra.mxu0 %v3038
  %3399 = vmatpush.bf16.msra.mxu0 %v3032
  %3400 = vmatmul.bf16.gmra.mxu0 %v3273
  %v3401 = vpop.f32.mrf.mxu0
  %v3402 = vadd.f32 %v3389, %v3401
  %v3403 = vpop.f32.mrf.mxu0
  %3404 = vdwg.mxu0
  %3405 = vmatpush.bf16.msra.mxu0 %v2883
  %3406 = vmatpush.bf16.msra.mxu0 %v2877
  %3407 = vmatpush.bf16.msra.mxu0 %v2871
  %3408 = vmatpush.bf16.msra.mxu0 %v2865
  %3409 = vmatpush.bf16.msra.mxu0 %v2859
  %3410 = vmatpush.bf16.msra.mxu0 %v2853
  %3411 = vmatpush.bf16.msra.mxu0 %v2847
  %3412 = vmatpush.bf16.msra.mxu0 %v2841
  %3413 = vmatmul.bf16.gmra.mxu0 %v2326
  %v3414 = vpop.f32.mrf.mxu0
  %v3415 = vadd.f32 %v2316, %v3414
  %v3416 = vpop.f32.mrf.mxu0
  %3417 = vdwg.mxu0
  %3418 = vmatpush.bf16.msra.mxu0 %v2931
  %3419 = vmatpush.bf16.msra.mxu0 %v2925
  %3420 = vmatpush.bf16.msra.mxu0 %v2919
  %3421 = vmatpush.bf16.msra.mxu0 %v2913
  %3422 = vmatpush.bf16.msra.mxu0 %v2907
  %3423 = vmatpush.bf16.msra.mxu0 %v2901
  %3424 = vmatpush.bf16.msra.mxu0 %v2895
  %3425 = vmatpush.bf16.msra.mxu0 %v2889
  %3426 = vmatmul.bf16.gmra.mxu0 %v2327
  %v3427 = vpop.f32.mrf.mxu0
  %v3428 = vadd.f32 %v3415, %v3427
  %v3429 = vpop.f32.mrf.mxu0
  %3430 = vdwg.mxu0
  %3431 = vmatpush.bf16.msra.mxu0 %v2979
  %3432 = vmatpush.bf16.msra.mxu0 %v2973
  %3433 = vmatpush.bf16.msra.mxu0 %v2967
  %3434 = vmatpush.bf16.msra.mxu0 %v2961
  %3435 = vmatpush.bf16.msra.mxu0 %v2955
  %3436 = vmatpush.bf16.msra.mxu0 %v2949
  %3437 = vmatpush.bf16.msra.mxu0 %v2943
  %3438 = vmatpush.bf16.msra.mxu0 %v2937
  %3439 = vmatmul.bf16.gmra.mxu0 %v2328
  %v3440 = vpop.f32.mrf.mxu0
  %v3441 = vadd.f32 %v3428, %v3440
  %v3442 = vpop.f32.mrf.mxu0
  %3443 = vdwg.mxu0
  %3444 = vmatpush.bf16.msra.mxu0 %v3027
  %3445 = vmatpush.bf16.msra.mxu0 %v3021
  %3446 = vmatpush.bf16.msra.mxu0 %v3015
  %3447 = vmatpush.bf16.msra.mxu0 %v3009
  %3448 = vmatpush.bf16.msra.mxu0 %v3003
  %3449 = vmatpush.bf16.msra.mxu0 %v2997
  %3450 = vmatpush.bf16.msra.mxu0 %v2991
  %3451 = vmatpush.bf16.msra.mxu0 %v2985
  %3452 = vmatmul.bf16.gmra.mxu0 %v2329
  %v3453 = vpop.f32.mrf.mxu0
  %v3454 = vadd.f32 %v3441, %v3453
  %v3455 = vpop.f32.mrf.mxu0
  %3456 = vdwg.mxu0
  %3457 = vmatpush.bf16.msra.mxu0 0
  %3458 = vmatpush.bf16.msra.mxu0 0
  %3459 = vmatpush.bf16.msra.mxu0 0
  %3460 = vmatpush.bf16.msra.mxu0 0
  %3461 = vmatpush.bf16.msra.mxu0 %v3051
  %3462 = vmatpush.bf16.msra.mxu0 %v3045
  %3463 = vmatpush.bf16.msra.mxu0 %v3039
  %3464 = vmatpush.bf16.msra.mxu0 %v3033
  %3465 = vmatmul.bf16.gmra.mxu0 %v3273
  %v3466 = vpop.f32.mrf.mxu0
  %v3467 = vadd.f32 %v3454, %v3466
  %v3468 = vpop.f32.mrf.mxu0
  %3469 = vdwg.mxu0
  %3470 = vmatpush.bf16.msra.mxu0 %v2884
  %3471 = vmatpush.bf16.msra.mxu0 %v2878
  %3472 = vmatpush.bf16.msra.mxu0 %v2872
  %3473 = vmatpush.bf16.msra.mxu0 %v2866
  %3474 = vmatpush.bf16.msra.mxu0 %v2860
  %3475 = vmatpush.bf16.msra.mxu0 %v2854
  %3476 = vmatpush.bf16.msra.mxu0 %v2848
  %3477 = vmatpush.bf16.msra.mxu0 %v2842
  %3478 = vmatmul.bf16.gmra.mxu0 %v2326
  %v3479 = vpop.f32.mrf.mxu0
  %v3480 = vadd.f32 %v2316, %v3479
  %v3481 = vpop.f32.mrf.mxu0
  %3482 = vdwg.mxu0
  %3483 = vmatpush.bf16.msra.mxu0 %v2932
  %3484 = vmatpush.bf16.msra.mxu0 %v2926
  %3485 = vmatpush.bf16.msra.mxu0 %v2920
  %3486 = vmatpush.bf16.msra.mxu0 %v2914
  %3487 = vmatpush.bf16.msra.mxu0 %v2908
  %3488 = vmatpush.bf16.msra.mxu0 %v2902
  %3489 = vmatpush.bf16.msra.mxu0 %v2896
  %3490 = vmatpush.bf16.msra.mxu0 %v2890
  %3491 = vmatmul.bf16.gmra.mxu0 %v2327
  %v3492 = vpop.f32.mrf.mxu0
  %v3493 = vadd.f32 %v3480, %v3492
  %v3494 = vpop.f32.mrf.mxu0
  %3495 = vdwg.mxu0
  %3496 = vmatpush.bf16.msra.mxu0 %v2980
  %3497 = vmatpush.bf16.msra.mxu0 %v2974
  %3498 = vmatpush.bf16.msra.mxu0 %v2968
  %3499 = vmatpush.bf16.msra.mxu0 %v2962
  %3500 = vmatpush.bf16.msra.mxu0 %v2956
  %3501 = vmatpush.bf16.msra.mxu0 %v2950
  %3502 = vmatpush.bf16.msra.mxu0 %v2944
  %3503 = vmatpush.bf16.msra.mxu0 %v2938
  %3504 = vmatmul.bf16.gmra.mxu0 %v2328
  %v3505 = vpop.f32.mrf.mxu0
  %v3506 = vadd.f32 %v3493, %v3505
  %v3507 = vpop.f32.mrf.mxu0
  %3508 = vdwg.mxu0
  %3509 = vmatpush.bf16.msra.mxu0 %v3028
  %3510 = vmatpush.bf16.msra.mxu0 %v3022
  %3511 = vmatpush.bf16.msra.mxu0 %v3016
  %3512 = vmatpush.bf16.msra.mxu0 %v3010
  %3513 = vmatpush.bf16.msra.mxu0 %v3004
  %3514 = vmatpush.bf16.msra.mxu0 %v2998
  %3515 = vmatpush.bf16.msra.mxu0 %v2992
  %3516 = vmatpush.bf16.msra.mxu0 %v2986
  %3517 = vmatmul.bf16.gmra.mxu0 %v2329
  %v3518 = vpop.f32.mrf.mxu0
  %v3519 = vadd.f32 %v3506, %v3518
  %v3520 = vpop.f32.mrf.mxu0
  %3521 = vdwg.mxu0
  %3522 = vmatpush.bf16.msra.mxu0 0
  %3523 = vmatpush.bf16.msra.mxu0 0
  %3524 = vmatpush.bf16.msra.mxu0 0
  %3525 = vmatpush.bf16.msra.mxu0 0
  %3526 = vmatpush.bf16.msra.mxu0 %v3052
  %3527 = vmatpush.bf16.msra.mxu0 %v3046
  %3528 = vmatpush.bf16.msra.mxu0 %v3040
  %3529 = vmatpush.bf16.msra.mxu0 %v3034
  %3530 = vmatmul.bf16.gmra.mxu0 %v3273
  %v3531 = vpop.f32.mrf.mxu0
  %v3532 = vadd.f32 %v3519, %v3531
  %v3533 = vpop.f32.mrf.mxu0
  %3534 = vdwg.mxu0
  %3535 = vmatpush.bf16.msra.mxu0 %v2885
  %3536 = vmatpush.bf16.msra.mxu0 %v2879
  %3537 = vmatpush.bf16.msra.mxu0 %v2873
  %3538 = vmatpush.bf16.msra.mxu0 %v2867
  %3539 = vmatpush.bf16.msra.mxu0 %v2861
  %3540 = vmatpush.bf16.msra.mxu0 %v2855
  %3541 = vmatpush.bf16.msra.mxu0 %v2849
  %3542 = vmatpush.bf16.msra.mxu0 %v2843
  %3543 = vmatmul.bf16.gmra.mxu0 %v2326
  %v3544 = vpop.f32.mrf.mxu0
  %v3545 = vadd.f32 %v2316, %v3544
  %v3546 = vpop.f32.mrf.mxu0
  %3547 = vdwg.mxu0
  %3548 = vmatpush.bf16.msra.mxu0 %v2933
  %3549 = vmatpush.bf16.msra.mxu0 %v2927
  %3550 = vmatpush.bf16.msra.mxu0 %v2921
  %3551 = vmatpush.bf16.msra.mxu0 %v2915
  %3552 = vmatpush.bf16.msra.mxu0 %v2909
  %3553 = vmatpush.bf16.msra.mxu0 %v2903
  %3554 = vmatpush.bf16.msra.mxu0 %v2897
  %3555 = vmatpush.bf16.msra.mxu0 %v2891
  %3556 = vmatmul.bf16.gmra.mxu0 %v2327
  %v3557 = vpop.f32.mrf.mxu0
  %v3558 = vadd.f32 %v3545, %v3557
  %v3559 = vpop.f32.mrf.mxu0
  %3560 = vdwg.mxu0
  %3561 = vmatpush.bf16.msra.mxu0 %v2981
  %3562 = vmatpush.bf16.msra.mxu0 %v2975
  %3563 = vmatpush.bf16.msra.mxu0 %v2969
  %3564 = vmatpush.bf16.msra.mxu0 %v2963
  %3565 = vmatpush.bf16.msra.mxu0 %v2957
  %3566 = vmatpush.bf16.msra.mxu0 %v2951
  %3567 = vmatpush.bf16.msra.mxu0 %v2945
  %3568 = vmatpush.bf16.msra.mxu0 %v2939
  %3569 = vmatmul.bf16.gmra.mxu0 %v2328
  %v3570 = vpop.f32.mrf.mxu0
  %v3571 = vadd.f32 %v3558, %v3570
  %v3572 = vpop.f32.mrf.mxu0
  %3573 = vdwg.mxu0
  %3574 = vmatpush.bf16.msra.mxu0 %v3029
  %3575 = vmatpush.bf16.msra.mxu0 %v3023
  %3576 = vmatpush.bf16.msra.mxu0 %v3017
  %3577 = vmatpush.bf16.msra.mxu0 %v3011
  %3578 = vmatpush.bf16.msra.mxu0 %v3005
  %3579 = vmatpush.bf16.msra.mxu0 %v2999
  %3580 = vmatpush.bf16.msra.mxu0 %v2993
  %3581 = vmatpush.bf16.msra.mxu0 %v2987
  %3582 = vmatmul.bf16.gmra.mxu0 %v2329
  %v3583 = vpop.f32.mrf.mxu0
  %v3584 = vadd.f32 %v3571, %v3583
  %v3585 = vpop.f32.mrf.mxu0
  %3586 = vdwg.mxu0
  %3587 = vmatpush.bf16.msra.mxu0 0
  %3588 = vmatpush.bf16.msra.mxu0 0
  %3589 = vmatpush.bf16.msra.mxu0 0
  %3590 = vmatpush.bf16.msra.mxu0 0
  %3591 = vmatpush.bf16.msra.mxu0 %v3053
  %3592 = vmatpush.bf16.msra.mxu0 %v3047
  %3593 = vmatpush.bf16.msra.mxu0 %v3041
  %3594 = vmatpush.bf16.msra.mxu0 %v3035
  %3595 = vmatmul.bf16.gmra.mxu0 %v3273
  %v3596 = vpop.f32.mrf.mxu0
  %v3597 = vadd.f32 %v3584, %v3596
  %v3598 = vpop.f32.mrf.mxu0
  %3599 = vdwg.mxu0
  %3600 = vmatpush.bf16.msra.mxu0 %v2886
  %3601 = vmatpush.bf16.msra.mxu0 %v2880
  %3602 = vmatpush.bf16.msra.mxu0 %v2874
  %3603 = vmatpush.bf16.msra.mxu0 %v2868
  %3604 = vmatpush.bf16.msra.mxu0 %v2862
  %3605 = vmatpush.bf16.msra.mxu0 %v2856
  %3606 = vmatpush.bf16.msra.mxu0 %v2850
  %3607 = vmatpush.bf16.msra.mxu0 %v2844
  %3608 = vmatmul.bf16.gmra.mxu0 %v2326
  %v3609 = vpop.f32.mrf.mxu0
  %v3610 = vadd.f32 %v2316, %v3609
  %v3611 = vpop.f32.mrf.mxu0
  %3612 = vdwg.mxu0
  %3613 = vmatpush.bf16.msra.mxu0 %v2934
  %3614 = vmatpush.bf16.msra.mxu0 %v2928
  %3615 = vmatpush.bf16.msra.mxu0 %v2922
  %3616 = vmatpush.bf16.msra.mxu0 %v2916
  %3617 = vmatpush.bf16.msra.mxu0 %v2910
  %3618 = vmatpush.bf16.msra.mxu0 %v2904
  %3619 = vmatpush.bf16.msra.mxu0 %v2898
  %3620 = vmatpush.bf16.msra.mxu0 %v2892
  %3621 = vmatmul.bf16.gmra.mxu0 %v2327
  %v3622 = vpop.f32.mrf.mxu0
  %v3623 = vadd.f32 %v3610, %v3622
  %v3624 = vpop.f32.mrf.mxu0
  %3625 = vdwg.mxu0
  %3626 = vmatpush.bf16.msra.mxu0 %v2982
  %3627 = vmatpush.bf16.msra.mxu0 %v2976
  %3628 = vmatpush.bf16.msra.mxu0 %v2970
  %3629 = vmatpush.bf16.msra.mxu0 %v2964
  %3630 = vmatpush.bf16.msra.mxu0 %v2958
  %3631 = vmatpush.bf16.msra.mxu0 %v2952
  %3632 = vmatpush.bf16.msra.mxu0 %v2946
  %3633 = vmatpush.bf16.msra.mxu0 %v2940
  %3634 = vmatmul.bf16.gmra.mxu0 %v2328
  %v3635 = vpop.f32.mrf.mxu0
  %v3636 = vadd.f32 %v3623, %v3635
  %v3637 = vpop.f32.mrf.mxu0
  %3638 = vdwg.mxu0
  %3639 = vmatpush.bf16.msra.mxu0 %v3030
  %3640 = vmatpush.bf16.msra.mxu0 %v3024
  %3641 = vmatpush.bf16.msra.mxu0 %v3018
  %3642 = vmatpush.bf16.msra.mxu0 %v3012
  %3643 = vmatpush.bf16.msra.mxu0 %v3006
  %3644 = vmatpush.bf16.msra.mxu0 %v3000
  %3645 = vmatpush.bf16.msra.mxu0 %v2994
  %3646 = vmatpush.bf16.msra.mxu0 %v2988
  %3647 = vmatmul.bf16.gmra.mxu0 %v2329
  %v3648 = vpop.f32.mrf.mxu0
  %v3649 = vadd.f32 %v3636, %v3648
  %v3650 = vpop.f32.mrf.mxu0
  %3651 = vdwg.mxu0
  %3652 = vmatpush.bf16.msra.mxu0 0
  %3653 = vmatpush.bf16.msra.mxu0 0
  %3654 = vmatpush.bf16.msra.mxu0 0
  %3655 = vmatpush.bf16.msra.mxu0 0
  %3656 = vmatpush.bf16.msra.mxu0 %v3054
  %3657 = vmatpush.bf16.msra.mxu0 %v3048
  %3658 = vmatpush.bf16.msra.mxu0 %v3042
  %3659 = vmatpush.bf16.msra.mxu0 %v3036
  %3660 = vmatmul.bf16.gmra.mxu0 %v3273
  %v3661 = vpop.f32.mrf.mxu0
  %v3662 = vadd.f32 %v3649, %v3661
  %v3663 = vpop.f32.mrf.mxu0
  %3664 = vdwg.mxu0
  %v3665 = vld [vmem:[%s1] sm:$0x77]
  %v3666 = vld [vmem:[%s1 + $0x8] sm:$0x7]
  %v3667 = vmul.f32 %v3337, 0.1
  %v3668 = vmul.f32 %v3402, 0.1
  %v3669 = vmul.f32 %v3467, 0.1
  %v3672 = vrot.slane %v3668, 4
  %v3673 = vsel %vm590, %v3667, %v3672
  %v3675 = vadd.f32 %v3665, %v3673
  %v3676 = vadd.f32 %v3666, %v3669
  %3677 = vst [vmem:[%s7] sm:$0x77] %v3675
  %3678 = vst [vmem:[%s7 + $0x8] sm:$0x7] %v3676
  %v3679 = vld [vmem:[%s229] sm:$0x77]
  %v3680 = vld [vmem:[%s229 + $0x8] sm:$0x7]
  %v3681 = vmul.f32 %v3532, 0.1
  %v3682 = vmul.f32 %v3597, 0.1
  %v3683 = vmul.f32 %v3662, 0.1
  %v3686 = vrot.slane %v3682, 4
  %v3687 = vsel %vm590, %v3681, %v3686
  %v3689 = vadd.f32 %v3679, %v3687
  %v3690 = vadd.f32 %v3680, %v3683
  %s3691 = scalar_lea.vmem %s7, 12
  %3692 = vst [vmem:[%s3691] sm:$0x77] %v3689
  %3693 = vst [vmem:[%s3691 + $0x8] sm:$0x7] %v3690
  // Predicated region
  $region26: #{watermark_encoder.1} parent=0 // pred_check
    _
  $region27: #{watermark_encoder.1} parent=0 // pred_check_branch
    %3695 = sbr.rel (0) target = $region29
  $region28: #{watermark_encoder.1} parent=0 // pred_region
    _
  $region29: #{watermark_encoder.1} parent=0 // pred_fallthru
    _
  // Predicated region
  $region30: #{watermark_encoder.1} parent=0 // pred_check
    _
  $region31: #{watermark_encoder.1} parent=0 // pred_check_branch
    %3697 = sbr.rel (0) target = $region33
  $region32: #{watermark_encoder.1} parent=0 // pred_region
    _
  $region33: #{watermark_encoder.1} parent=0 // pred_fallthru
    _

</llo_original>
